<compile_context>
chip_gen: v5e
topology: v5e:2x2
jax: 0.10.0
libtpu: 0.0.40
codegen_flags: <defaults>
</compile_context>

<pallas_src>
import math

import jax
import jax.numpy as jnp
from jax.experimental import pallas as pl
from jax.experimental.pallas import tpu as pltpu


def _round_up(n, m):
    return ((n + m - 1) // m) * m


# ----------------------------- Pallas kernel ------------------------------- #

def _make_fused_gru_fc_kernel(n_layers, unroll=8):
    """Fused (all GRU layers + fc) kernel for a static layer count.

    Ref layout (padded; Bp = batch padded to mult. of 8, Hp/Op = mult. of 128):
      inputs : x (T*Bp, D0p),
               per layer: wi (Dp, 3Hp), wh (Hp, 3Hp), bfold (1, 3Hp), bhn (1, Hp),
               w_fc (Hp, Op), b_fc (1, Op)
      outputs: out (T*Bp, Op), hlast (n_layers, Bp, Hp)
      scratch: xp (T*Bp, 3Hp), act_a (T*Bp, Hp), act_b (T*Bp, Hp)
    Flat activation row index = t*Bp + b (time-major).
    """

    def kernel(*refs):
        x_ref = refs[0]
        layer_refs = refs[1:1 + 4 * n_layers]
        wfc_ref = refs[1 + 4 * n_layers]
        bfc_ref = refs[2 + 4 * n_layers]
        out_ref = refs[3 + 4 * n_layers]
        hlast_ref = refs[4 + 4 * n_layers]
        xp_scr, act_a, act_b = refs[5 + 4 * n_layers:]

        Bp = hlast_ref.shape[1]
        Hp = hlast_ref.shape[2]
        T = x_ref.shape[0] // Bp
        acts = (act_a, act_b)

        src = x_ref
        for l in range(n_layers):
            wi_ref, wh_ref, bf_ref, bhn_ref = layer_refs[4 * l:4 * l + 4]
            dst = acts[l % 2]

            # Prologue: hoist ALL input-side gate projections into one MXU matmul
            # (combinable biases pre-folded).  Gate columns are 128-lane-padded
            # groups [r | z | n], so the per-gate slices below are lane-aligned.
            xp_scr[...] = (
                jnp.dot(src[...], wi_ref[...], preferred_element_type=jnp.float32)
                + bf_ref[...])

            wh = wh_ref[...]                                      # (Hp, 3Hp), loaded once
            bhn_b = jnp.broadcast_to(bhn_ref[...], (Bp, Hp))      # hoisted out of the loop

            def step(t, h, dst=dst, wh=wh, bhn_b=bhn_b):
                row = pl.multiple_of(t * Bp, Bp)                  # 8-sublane aligned start
                xp = xp_scr[pl.ds(row, Bp), :]                    # (Bp, 3Hp), dense load
                hg = jnp.dot(h, wh, preferred_element_type=jnp.float32)  # one fused dot
                r = jax.nn.sigmoid(xp[:, :Hp] + hg[:, :Hp])
                z = jax.nn.sigmoid(xp[:, Hp:2 * Hp] + hg[:, Hp:2 * Hp])
                n = jnp.tanh(xp[:, 2 * Hp:] + r * (hg[:, 2 * Hp:] + bhn_b))
                h_new = (1.0 - z) * n + z * h
                dst[pl.ds(row, Bp), :] = h_new                    # dense, unmasked store
                return h_new

            h0 = jnp.zeros((Bp, Hp), jnp.float32)
            h_last = jax.lax.fori_loop(0, T, step, h0, unroll=min(T, unroll))
            hlast_ref[l] = h_last                                 # written once per layer
            src = dst

        # fc epilogue fused into the same kernel; output lanes padded to 128 so the
        # final store is dense.
        out_ref[...] = (
            jnp.dot(src[...], wfc_ref[...], preferred_element_type=jnp.float32)
            + bfc_ref[...]).astype(out_ref.dtype)

    return kernel


# ------------------------------ wrapper ------------------------------------ #

def basic_gru_forward(x_btd, params, *, hidden_dim, output_size):
    """Mirror of BasicGRU.forward: returns (fc(out).view(-1, O), hidden)."""
    B, T, D = x_btd.shape
    n_layers = len(params["layers"])
    Dp = params["layers"][0]["w_i"].shape[0]
    Hp = params["layers"][0]["w_h"].shape[0]
    Op = params["w_fc"].shape[1]
    Bp = _round_up(B, 8)

    # Time-major flat rows (t*Bp + b); batch padded to 8 sublanes, features to 128 lanes.
    x_tbd = jnp.transpose(x_btd, (1, 0, 2))
    x_pad = jnp.pad(x_tbd, ((0, 0), (0, Bp - B), (0, Dp - D))).reshape(T * Bp, Dp)

    args = [x_pad]
    for lp in params["layers"]:
        args += [lp["w_i"], lp["w_h"], lp["b_fold"], lp["b_hn"]]
    args += [params["w_fc"], params["b_fc"]]

    out_pad, h_pad = pl.pallas_call(
        _make_fused_gru_fc_kernel(n_layers),
        out_shape=(jax.ShapeDtypeStruct((T * Bp, Op), jnp.float32),
                   jax.ShapeDtypeStruct((n_layers, Bp, Hp), jnp.float32)),
        scratch_shapes=[pltpu.VMEM((T * Bp, 3 * Hp), jnp.float32),
                        pltpu.VMEM((T * Bp, Hp), jnp.float32),
                        pltpu.VMEM((T * Bp, Hp), jnp.float32)],
    )(*args)

    # TODO(synk): nn.GRU inter-layer dropout (p=0.2) only applies in training mode;
    # deterministic / eval semantics here.
    hidden = h_pad[:, :B, :hidden_dim]                             # (n_layers, B, H)
    # Batch-major reorder AFTER the projection (on the O-wide result, not H-wide) to
    # match out.contiguous().view(-1, hidden_dim) -> fc row order (b*T + t).
    out = jnp.transpose(
        out_pad.reshape(T, Bp, Op)[:, :B, :output_size], (1, 0, 2)
    ).reshape(B * T, output_size)
    return out, hidden


# --------------------------- parameter handling ----------------------------- #

def init_params(key, input_size, hidden_dim, output_size, n_layers):
    """Raw PyTorch-layout GRU parameters (gate order r, z, n)."""
    k = 1.0 / math.sqrt(hidden_dim)
    H = hidden_dim
    raw = {"layers": []}
    for layer in range(n_layers):
        d_in = input_size if layer == 0 else hidden_dim
        key, k0, k1, k2, k3 = jax.random.split(key, 5)
        raw["layers"].append({
            "w_ih": jax.random.uniform(k0, (3 * H, d_in), jnp.float32, -k, k),
            "w_hh": jax.random.uniform(k1, (3 * H, H), jnp.float32, -k, k),
            "b_ih": jax.random.uniform(k2, (3 * H,), jnp.float32, -k, k),
            "b_hh": jax.random.uniform(k3, (3 * H,), jnp.float32, -k, k),
        })
    key, kw, kb = jax.random.split(key, 3)
    raw["w_fc"] = jax.random.uniform(kw, (hidden_dim, output_size), jnp.float32, -k, k)
    raw["b_fc"] = jax.random.uniform(kb, (1, output_size), jnp.float32, -k, k)
    return raw


def fuse_params(raw):
    """Fused + lane/sublane-padded parameters consumed by the Pallas kernel.

    Fused (., 3*Hp) matrices have columns [r | z | n], each gate padded to its own
    128-lane group so gate boundaries fall on vreg lane boundaries.  Padded rows/cols
    are zero, so padded hidden lanes stay exactly 0 through the recurrence.
    """
    H = raw["layers"][0]["w_hh"].shape[0] // 3
    Hp = _round_up(H, 128)
    O = raw["w_fc"].shape[1]
    Op = _round_up(O, 128)

    def pad_gate_mat(w_t, rows_pad):
        # w_t: torch layout (3H, d_in) -> (rows_pad, 3*Hp) with per-gate lane padding.
        cols = []
        for g in range(3):
            wg = w_t[g * H:(g + 1) * H, :].T       # (d_in, H)
            cols.append(jnp.pad(wg, ((0, rows_pad - wg.shape[0]), (0, Hp - H))))
        return jnp.concatenate(cols, axis=1)

    def pad_gate_vec(v):                            # (H,) -> (Hp,)
        return jnp.pad(v, (0, Hp - H))

    params = {"layers": []}
    for lp in raw["layers"]:
        d_in = lp["w_ih"].shape[1]
        Dp = _round_up(d_in, 128)
        b_ih, b_hh = lp["b_ih"], lp["b_hh"]
        b_fold = jnp.concatenate([
            pad_gate_vec(b_ih[:H] + b_hh[:H]),              # b_ir + b_hr
            pad_gate_vec(b_ih[H:2 * H] + b_hh[H:2 * H]),    # b_iz + b_hz
            pad_gate_vec(b_ih[2 * H:]),                     # b_in (b_hn kept separate)
        ]).reshape(1, 3 * Hp)
        params["layers"].append({
            "w_i": pad_gate_mat(lp["w_ih"], Dp),            # (Dp, 3Hp)
            "w_h": pad_gate_mat(lp["w_hh"], Hp),            # (Hp, 3Hp)
            "b_fold": b_fold,                               # (1, 3Hp)
            "b_hn": pad_gate_vec(b_hh[2 * H:]).reshape(1, Hp),
        })
    params["w_fc"] = jnp.pad(raw["w_fc"], ((0, Hp - H), (0, Op - O)))
    params["b_fc"] = jnp.pad(raw["b_fc"], ((0, 0), (0, Op - O)))
    return params


# ------------------------- pure-JAX reference ------------------------------ #

def reference_forward(x_btd, raw):
    """Straightforward PyTorch-GRU-semantics reference using the RAW parameters."""
    B, T, _ = x_btd.shape
    layer_in = x_btd
    h_finals = []
    for lp in raw["layers"]:
        H = lp["w_hh"].shape[0] // 3
        wir, wiz, win = lp["w_ih"][:H].T, lp["w_ih"][H:2 * H].T, lp["w_ih"][2 * H:].T
        whr, whz, whn = lp["w_hh"][:H].T, lp["w_hh"][H:2 * H].T, lp["w_hh"][2 * H:].T
        bir, biz, bin_ = lp["b_ih"][:H], lp["b_ih"][H:2 * H], lp["b_ih"][2 * H:]
        bhr, bhz, bhn = lp["b_hh"][:H], lp["b_hh"][H:2 * H], lp["b_hh"][2 * H:]
        h = jnp.zeros((B, H), jnp.float32)
        outs = []
        for t in range(T):
            xt = layer_in[:, t, :]
            r = jax.nn.sigmoid(xt @ wir + bir + h @ whr + bhr)
            z = jax.nn.sigmoid(xt @ wiz + biz + h @ whz + bhz)
            n = jnp.tanh(xt @ win + bin_ + r * (h @ whn + bhn))
            h = (1.0 - z) * n + z * h
            outs.append(h)
        layer_in = jnp.stack(outs, axis=1)
        h_finals.append(h)
    hidden = jnp.stack(h_finals, axis=0)
    out = layer_in.reshape(B * T, -1) @ raw["w_fc"] + raw["b_fc"]
    return out, hidden


# --------------------------------- main ------------------------------------ #

if __name__ == "__main__":
    B, T, INPUT_SIZE, HIDDEN, OUTPUT, N_LAYERS = 2, 8, 16, 32, 1, 2

    key = jax.random.PRNGKey(0)
    k_params, k_x = jax.random.split(key)
    raw_params = init_params(k_params, INPUT_SIZE, HIDDEN, OUTPUT, N_LAYERS)
    params = fuse_params(raw_params)
    x = jax.random.normal(k_x, (B, T, INPUT_SIZE), jnp.float32)

    fwd = jax.jit(basic_gru_forward, static_argnames=("hidden_dim", "output_size"))
    out, hidden = fwd(x, params, hidden_dim=HIDDEN, output_size=OUTPUT)
    out = jax.block_until_ready(out)
    hidden = jax.block_until_ready(hidden)

    assert out.shape == (B * T, OUTPUT), out.shape
    assert hidden.shape == (N_LAYERS, B, HIDDEN), hidden.shape

    ref_out, ref_hidden = reference_forward(x, raw_params)
    assert jnp.allclose(out, ref_out, atol=5e-4, rtol=5e-4), "fc output mismatch"
    assert jnp.allclose(hidden, ref_hidden, atol=5e-4, rtol=5e-4), "hidden mismatch"

    print("KERNEL_OK")
</pallas_src>

<mosaic_0001>
module attributes {stable_mosaic.version = 11 : i64} {
  func.func @kernel(%arg0: memref<64x128xf32, #tpu.memory_space<vmem>>, %arg1: memref<128x384xf32, #tpu.memory_space<vmem>>, %arg2: memref<128x384xf32, #tpu.memory_space<vmem>>, %arg3: memref<1x384xf32, #tpu.memory_space<vmem>>, %arg4: memref<1x128xf32, #tpu.memory_space<vmem>>, %arg5: memref<128x384xf32, #tpu.memory_space<vmem>>, %arg6: memref<128x384xf32, #tpu.memory_space<vmem>>, %arg7: memref<1x384xf32, #tpu.memory_space<vmem>>, %arg8: memref<1x128xf32, #tpu.memory_space<vmem>>, %arg9: memref<128x128xf32, #tpu.memory_space<vmem>>, %arg10: memref<1x128xf32, #tpu.memory_space<vmem>>, %arg11: memref<64x128xf32, #tpu.memory_space<vmem>>, %arg12: memref<2x8x128xf32, #tpu.memory_space<vmem>>, %arg13: memref<64x384xf32, #tpu.memory_space<vmem>>, %arg14: memref<64x128xf32, #tpu.memory_space<vmem>>, %arg15: memref<64x128xf32, #tpu.memory_space<vmem>>) attributes {dimension_semantics = [], scalar_prefetch = 0 : i64, scratch_operands = 3 : i64, tpu.core_type = #tpu.core_type<tc>} {
    %c0 = arith.constant 0 : index
    %c0_0 = arith.constant 0 : index
    %0 = vector.load %arg0[%c0, %c0_0] : memref<64x128xf32, #tpu.memory_space<vmem>>, vector<64x128xf32>
    %c0_1 = arith.constant 0 : index
    %c0_2 = arith.constant 0 : index
    %1 = vector.load %arg1[%c0_1, %c0_2] : memref<128x384xf32, #tpu.memory_space<vmem>>, vector<128x384xf32>
    %cst = arith.constant dense<0.000000e+00> : vector<64x384xf32>
    %2 = tpu.matmul %0, %1, %cst {dimension_numbers = #tpu.dot_dimension_numbers<[1], [0], [0], [1], [0, 0, 1, 1], [], []>} : vector<64x128xf32>, vector<128x384xf32>, vector<64x384xf32> -> vector<64x384xf32>
    %c0_3 = arith.constant 0 : index
    %c0_4 = arith.constant 0 : index
    %3 = vector.load %arg3[%c0_3, %c0_4] : memref<1x384xf32, #tpu.memory_space<vmem>>, vector<1x384xf32>
    %4 = vector.broadcast %3 : vector<1x384xf32> to vector<64x384xf32>
    %5 = arith.addf %2, %4 : vector<64x384xf32>
    %c0_5 = arith.constant 0 : index
    %c0_6 = arith.constant 0 : index
    %6 = vector.load %arg13[%c0_5, %c0_6] : memref<64x384xf32, #tpu.memory_space<vmem>>, vector<64x384xf32>
    tpu.vector_store %arg13[%c0_5, %c0_6], %5 {strides = array<i32>} : memref<64x384xf32, #tpu.memory_space<vmem>>, vector<64x384xf32>,
    %c0_7 = arith.constant 0 : index
    %c0_8 = arith.constant 0 : index
    %7 = vector.load %arg2[%c0_7, %c0_8] : memref<128x384xf32, #tpu.memory_space<vmem>>, vector<128x384xf32>
    %c0_9 = arith.constant 0 : index
    %c0_10 = arith.constant 0 : index
    %8 = vector.load %arg4[%c0_9, %c0_10] : memref<1x128xf32, #tpu.memory_space<vmem>>, vector<1x128xf32>
    %9 = vector.shape_cast %8 : vector<1x128xf32> to vector<1x128xf32>
    %10 = vector.broadcast %9 : vector<1x128xf32> to vector<8x128xf32>
    %cst_11 = arith.constant 0.000000e+00 : f32
    %11 = vector.broadcast %cst_11 : f32 to vector<8x128xf32>
    %c0_i32 = arith.constant 0 : i32
    %c8_i32 = arith.constant 8 : i32
    %12 = arith.muli %c0_i32, %c8_i32 : i32
    %13 = tpu.assume_multiple %12, 8 : i32
    %14 = arith.index_cast %13 : i32 to index
    %c0_12 = arith.constant 0 : index
    %15 = vector.load %arg13[%14, %c0_12] : memref<64x384xf32, #tpu.memory_space<vmem>>, vector<8x384xf32>
    %cst_13 = arith.constant dense<0.000000e+00> : vector<8x384xf32>
    %16 = tpu.matmul %11, %7, %cst_13 {dimension_numbers = #tpu.dot_dimension_numbers<[1], [0], [0], [1], [0, 0, 1, 1], [], []>} : vector<8x128xf32>, vector<128x384xf32>, vector<8x384xf32> -> vector<8x384xf32>
    %17 = vector.extract_strided_slice %15 {offsets = [0, 0], sizes = [8, 128], strides = [1, 1]} : vector<8x384xf32> to vector<8x128xf32>
    %18 = vector.extract_strided_slice %16 {offsets = [0, 0], sizes = [8, 128], strides = [1, 1]} : vector<8x384xf32> to vector<8x128xf32>
    %19 = arith.addf %17, %18 : vector<8x128xf32>
    %20 = arith.negf %19 : vector<8x128xf32>
    %21 = math.exp %20 : vector<8x128xf32>
    %cst_14 = arith.constant 1.000000e+00 : f32
    %22 = vector.broadcast %cst_14 : f32 to vector<8x128xf32>
    %23 = arith.addf %22, %21 : vector<8x128xf32>
    %24 = arith.divf %22, %23 : vector<8x128xf32>
    %25 = vector.extract_strided_slice %15 {offsets = [0, 128], sizes = [8, 128], strides = [1, 1]} : vector<8x384xf32> to vector<8x128xf32>
    %26 = vector.extract_strided_slice %16 {offsets = [0, 128], sizes = [8, 128], strides = [1, 1]} : vector<8x384xf32> to vector<8x128xf32>
    %27 = arith.addf %25, %26 : vector<8x128xf32>
    %28 = arith.negf %27 : vector<8x128xf32>
    %29 = math.exp %28 : vector<8x128xf32>
    %cst_15 = arith.constant 1.000000e+00 : f32
    %30 = vector.broadcast %cst_15 : f32 to vector<8x128xf32>
    %31 = arith.addf %30, %29 : vector<8x128xf32>
    %32 = arith.divf %30, %31 : vector<8x128xf32>
    %33 = vector.extract_strided_slice %15 {offsets = [0, 256], sizes = [8, 128], strides = [1, 1]} : vector<8x384xf32> to vector<8x128xf32>
    %34 = vector.extract_strided_slice %16 {offsets = [0, 256], sizes = [8, 128], strides = [1, 1]} : vector<8x384xf32> to vector<8x128xf32>
    %35 = arith.addf %34, %10 : vector<8x128xf32>
    %36 = arith.mulf %24, %35 : vector<8x128xf32>
    %37 = arith.addf %33, %36 : vector<8x128xf32>
    %38 = math.tanh %37 : vector<8x128xf32>
    %cst_16 = arith.constant 1.000000e+00 : f32
    %39 = vector.broadcast %cst_16 : f32 to vector<8x128xf32>
    %40 = arith.subf %39, %32 : vector<8x128xf32>
    %41 = arith.mulf %40, %38 : vector<8x128xf32>
    %42 = arith.mulf %32, %11 : vector<8x128xf32>
    %43 = arith.addf %41, %42 : vector<8x128xf32>
    %44 = arith.index_cast %13 : i32 to index
    %c0_17 = arith.constant 0 : index
    %45 = vector.load %arg14[%44, %c0_17] : memref<64x128xf32, #tpu.memory_space<vmem>>, vector<8x128xf32>
    tpu.vector_store %arg14[%44, %c0_17], %43 {strides = array<i32>} : memref<64x128xf32, #tpu.memory_space<vmem>>, vector<8x128xf32>,
    %c1_i32 = arith.constant 1 : i32
    %c8_i32_18 = arith.constant 8 : i32
    %46 = arith.muli %c1_i32, %c8_i32_18 : i32
    %47 = tpu.assume_multiple %46, 8 : i32
    %48 = arith.index_cast %47 : i32 to index
    %c0_19 = arith.constant 0 : index
    %49 = vector.load %arg13[%48, %c0_19] : memref<64x384xf32, #tpu.memory_space<vmem>>, vector<8x384xf32>
    %cst_20 = arith.constant dense<0.000000e+00> : vector<8x384xf32>
    %50 = tpu.matmul %43, %7, %cst_20 {dimension_numbers = #tpu.dot_dimension_numbers<[1], [0], [0], [1], [0, 0, 1, 1], [], []>} : vector<8x128xf32>, vector<128x384xf32>, vector<8x384xf32> -> vector<8x384xf32>
    %51 = vector.extract_strided_slice %49 {offsets = [0, 0], sizes = [8, 128], strides = [1, 1]} : vector<8x384xf32> to vector<8x128xf32>
    %52 = vector.extract_strided_slice %50 {offsets = [0, 0], sizes = [8, 128], strides = [1, 1]} : vector<8x384xf32> to vector<8x128xf32>
    %53 = arith.addf %51, %52 : vector<8x128xf32>
    %54 = arith.negf %53 : vector<8x128xf32>
    %55 = math.exp %54 : vector<8x128xf32>
    %cst_21 = arith.constant 1.000000e+00 : f32
    %56 = vector.broadcast %cst_21 : f32 to vector<8x128xf32>
    %57 = arith.addf %56, %55 : vector<8x128xf32>
    %58 = arith.divf %56, %57 : vector<8x128xf32>
    %59 = vector.extract_strided_slice %49 {offsets = [0, 128], sizes = [8, 128], strides = [1, 1]} : vector<8x384xf32> to vector<8x128xf32>
    %60 = vector.extract_strided_slice %50 {offsets = [0, 128], sizes = [8, 128], strides = [1, 1]} : vector<8x384xf32> to vector<8x128xf32>
    %61 = arith.addf %59, %60 : vector<8x128xf32>
    %62 = arith.negf %61 : vector<8x128xf32>
    %63 = math.exp %62 : vector<8x128xf32>
    %cst_22 = arith.constant 1.000000e+00 : f32
    %64 = vector.broadcast %cst_22 : f32 to vector<8x128xf32>
    %65 = arith.addf %64, %63 : vector<8x128xf32>
    %66 = arith.divf %64, %65 : vector<8x128xf32>
    %67 = vector.extract_strided_slice %49 {offsets = [0, 256], sizes = [8, 128], strides = [1, 1]} : vector<8x384xf32> to vector<8x128xf32>
    %68 = vector.extract_strided_slice %50 {offsets = [0, 256], sizes = [8, 128], strides = [1, 1]} : vector<8x384xf32> to vector<8x128xf32>
    %69 = arith.addf %68, %10 : vector<8x128xf32>
    %70 = arith.mulf %58, %69 : vector<8x128xf32>
    %71 = arith.addf %67, %70 : vector<8x128xf32>
    %72 = math.tanh %71 : vector<8x128xf32>
    %cst_23 = arith.constant 1.000000e+00 : f32
    %73 = vector.broadcast %cst_23 : f32 to vector<8x128xf32>
    %74 = arith.subf %73, %66 : vector<8x128xf32>
    %75 = arith.mulf %74, %72 : vector<8x128xf32>
    %76 = arith.mulf %66, %43 : vector<8x128xf32>
    %77 = arith.addf %75, %76 : vector<8x128xf32>
    %78 = arith.index_cast %47 : i32 to index
    %c0_24 = arith.constant 0 : index
    %79 = vector.load %arg14[%78, %c0_24] : memref<64x128xf32, #tpu.memory_space<vmem>>, vector<8x128xf32>
    tpu.vector_store %arg14[%78, %c0_24], %77 {strides = array<i32>} : memref<64x128xf32, #tpu.memory_space<vmem>>, vector<8x128xf32>,
    %c2_i32 = arith.constant 2 : i32
    %c8_i32_25 = arith.constant 8 : i32
    %80 = arith.muli %c2_i32, %c8_i32_25 : i32
    %81 = tpu.assume_multiple %80, 8 : i32
    %82 = arith.index_cast %81 : i32 to index
    %c0_26 = arith.constant 0 : index
    %83 = vector.load %arg13[%82, %c0_26] : memref<64x384xf32, #tpu.memory_space<vmem>>, vector<8x384xf32>
    %cst_27 = arith.constant dense<0.000000e+00> : vector<8x384xf32>
    %84 = tpu.matmul %77, %7, %cst_27 {dimension_numbers = #tpu.dot_dimension_numbers<[1], [0], [0], [1], [0, 0, 1, 1], [], []>} : vector<8x128xf32>, vector<128x384xf32>, vector<8x384xf32> -> vector<8x384xf32>
    %85 = vector.extract_strided_slice %83 {offsets = [0, 0], sizes = [8, 128], strides = [1, 1]} : vector<8x384xf32> to vector<8x128xf32>
    %86 = vector.extract_strided_slice %84 {offsets = [0, 0], sizes = [8, 128], strides = [1, 1]} : vector<8x384xf32> to vector<8x128xf32>
    %87 = arith.addf %85, %86 : vector<8x128xf32>
    %88 = arith.negf %87 : vector<8x128xf32>
    %89 = math.exp %88 : vector<8x128xf32>
    %cst_28 = arith.constant 1.000000e+00 : f32
    %90 = vector.broadcast %cst_28 : f32 to vector<8x128xf32>
    %91 = arith.addf %90, %89 : vector<8x128xf32>
    %92 = arith.divf %90, %91 : vector<8x128xf32>
    %93 = vector.extract_strided_slice %83 {offsets = [0, 128], sizes = [8, 128], strides = [1, 1]} : vector<8x384xf32> to vector<8x128xf32>
    %94 = vector.extract_strided_slice %84 {offsets = [0, 128], sizes = [8, 128], strides = [1, 1]} : vector<8x384xf32> to vector<8x128xf32>
    %95 = arith.addf %93, %94 : vector<8x128xf32>
    %96 = arith.negf %95 : vector<8x128xf32>
    %97 = math.exp %96 : vector<8x128xf32>
    %cst_29 = arith.constant 1.000000e+00 : f32
    %98 = vector.broadcast %cst_29 : f32 to vector<8x128xf32>
    %99 = arith.addf %98, %97 : vector<8x128xf32>
    %100 = arith.divf %98, %99 : vector<8x128xf32>
    %101 = vector.extract_strided_slice %83 {offsets = [0, 256], sizes = [8, 128], strides = [1, 1]} : vector<8x384xf32> to vector<8x128xf32>
    %102 = vector.extract_strided_slice %84 {offsets = [0, 256], sizes = [8, 128], strides = [1, 1]} : vector<8x384xf32> to vector<8x128xf32>
    %103 = arith.addf %102, %10 : vector<8x128xf32>
    %104 = arith.mulf %92, %103 : vector<8x128xf32>
    %105 = arith.addf %101, %104 : vector<8x128xf32>
    %106 = math.tanh %105 : vector<8x128xf32>
    %cst_30 = arith.constant 1.000000e+00 : f32
    %107 = vector.broadcast %cst_30 : f32 to vector<8x128xf32>
    %108 = arith.subf %107, %100 : vector<8x128xf32>
    %109 = arith.mulf %108, %106 : vector<8x128xf32>
    %110 = arith.mulf %100, %77 : vector<8x128xf32>
    %111 = arith.addf %109, %110 : vector<8x128xf32>
    %112 = arith.index_cast %81 : i32 to index
    %c0_31 = arith.constant 0 : index
    %113 = vector.load %arg14[%112, %c0_31] : memref<64x128xf32, #tpu.memory_space<vmem>>, vector<8x128xf32>
    tpu.vector_store %arg14[%112, %c0_31], %111 {strides = array<i32>} : memref<64x128xf32, #tpu.memory_space<vmem>>, vector<8x128xf32>,
    %c3_i32 = arith.constant 3 : i32
    %c8_i32_32 = arith.constant 8 : i32
    %114 = arith.muli %c3_i32, %c8_i32_32 : i32
    %115 = tpu.assume_multiple %114, 8 : i32
    %116 = arith.index_cast %115 : i32 to index
    %c0_33 = arith.constant 0 : index
    %117 = vector.load %arg13[%116, %c0_33] : memref<64x384xf32, #tpu.memory_space<vmem>>, vector<8x384xf32>
    %cst_34 = arith.constant dense<0.000000e+00> : vector<8x384xf32>
    %118 = tpu.matmul %111, %7, %cst_34 {dimension_numbers = #tpu.dot_dimension_numbers<[1], [0], [0], [1], [0, 0, 1, 1], [], []>} : vector<8x128xf32>, vector<128x384xf32>, vector<8x384xf32> -> vector<8x384xf32>
    %119 = vector.extract_strided_slice %117 {offsets = [0, 0], sizes = [8, 128], strides = [1, 1]} : vector<8x384xf32> to vector<8x128xf32>
    %120 = vector.extract_strided_slice %118 {offsets = [0, 0], sizes = [8, 128], strides = [1, 1]} : vector<8x384xf32> to vector<8x128xf32>
    %121 = arith.addf %119, %120 : vector<8x128xf32>
    %122 = arith.negf %121 : vector<8x128xf32>
    %123 = math.exp %122 : vector<8x128xf32>
    %cst_35 = arith.constant 1.000000e+00 : f32
    %124 = vector.broadcast %cst_35 : f32 to vector<8x128xf32>
    %125 = arith.addf %124, %123 : vector<8x128xf32>
    %126 = arith.divf %124, %125 : vector<8x128xf32>
    %127 = vector.extract_strided_slice %117 {offsets = [0, 128], sizes = [8, 128], strides = [1, 1]} : vector<8x384xf32> to vector<8x128xf32>
    %128 = vector.extract_strided_slice %118 {offsets = [0, 128], sizes = [8, 128], strides = [1, 1]} : vector<8x384xf32> to vector<8x128xf32>
    %129 = arith.addf %127, %128 : vector<8x128xf32>
    %130 = arith.negf %129 : vector<8x128xf32>
    %131 = math.exp %130 : vector<8x128xf32>
    %cst_36 = arith.constant 1.000000e+00 : f32
    %132 = vector.broadcast %cst_36 : f32 to vector<8x128xf32>
    %133 = arith.addf %132, %131 : vector<8x128xf32>
    %134 = arith.divf %132, %133 : vector<8x128xf32>
    %135 = vector.extract_strided_slice %117 {offsets = [0, 256], sizes = [8, 128], strides = [1, 1]} : vector<8x384xf32> to vector<8x128xf32>
    %136 = vector.extract_strided_slice %118 {offsets = [0, 256], sizes = [8, 128], strides = [1, 1]} : vector<8x384xf32> to vector<8x128xf32>
    %137 = arith.addf %136, %10 : vector<8x128xf32>
    %138 = arith.mulf %126, %137 : vector<8x128xf32>
    %139 = arith.addf %135, %138 : vector<8x128xf32>
    %140 = math.tanh %139 : vector<8x128xf32>
    %cst_37 = arith.constant 1.000000e+00 : f32
    %141 = vector.broadcast %cst_37 : f32 to vector<8x128xf32>
    %142 = arith.subf %141, %134 : vector<8x128xf32>
    %143 = arith.mulf %142, %140 : vector<8x128xf32>
    %144 = arith.mulf %134, %111 : vector<8x128xf32>
    %145 = arith.addf %143, %144 : vector<8x128xf32>
    %146 = arith.index_cast %115 : i32 to index
    %c0_38 = arith.constant 0 : index
    %147 = vector.load %arg14[%146, %c0_38] : memref<64x128xf32, #tpu.memory_space<vmem>>, vector<8x128xf32>
    tpu.vector_store %arg14[%146, %c0_38], %145 {strides = array<i32>} : memref<64x128xf32, #tpu.memory_space<vmem>>, vector<8x128xf32>,
    %c4_i32 = arith.constant 4 : i32
    %c8_i32_39 = arith.constant 8 : i32
    %148 = arith.muli %c4_i32, %c8_i32_39 : i32
    %149 = tpu.assume_multiple %148, 8 : i32
    %150 = arith.index_cast %149 : i32 to index
    %c0_40 = arith.constant 0 : index
    %151 = vector.load %arg13[%150, %c0_40] : memref<64x384xf32, #tpu.memory_space<vmem>>, vector<8x384xf32>
    %cst_41 = arith.constant dense<0.000000e+00> : vector<8x384xf32>
    %152 = tpu.matmul %145, %7, %cst_41 {dimension_numbers = #tpu.dot_dimension_numbers<[1], [0], [0], [1], [0, 0, 1, 1], [], []>} : vector<8x128xf32>, vector<128x384xf32>, vector<8x384xf32> -> vector<8x384xf32>
    %153 = vector.extract_strided_slice %151 {offsets = [0, 0], sizes = [8, 128], strides = [1, 1]} : vector<8x384xf32> to vector<8x128xf32>
    %154 = vector.extract_strided_slice %152 {offsets = [0, 0], sizes = [8, 128], strides = [1, 1]} : vector<8x384xf32> to vector<8x128xf32>
    %155 = arith.addf %153, %154 : vector<8x128xf32>
    %156 = arith.negf %155 : vector<8x128xf32>
    %157 = math.exp %156 : vector<8x128xf32>
    %cst_42 = arith.constant 1.000000e+00 : f32
    %158 = vector.broadcast %cst_42 : f32 to vector<8x128xf32>
    %159 = arith.addf %158, %157 : vector<8x128xf32>
    %160 = arith.divf %158, %159 : vector<8x128xf32>
    %161 = vector.extract_strided_slice %151 {offsets = [0, 128], sizes = [8, 128], strides = [1, 1]} : vector<8x384xf32> to vector<8x128xf32>
    %162 = vector.extract_strided_slice %152 {offsets = [0, 128], sizes = [8, 128], strides = [1, 1]} : vector<8x384xf32> to vector<8x128xf32>
    %163 = arith.addf %161, %162 : vector<8x128xf32>
    %164 = arith.negf %163 : vector<8x128xf32>
    %165 = math.exp %164 : vector<8x128xf32>
    %cst_43 = arith.constant 1.000000e+00 : f32
    %166 = vector.broadcast %cst_43 : f32 to vector<8x128xf32>
    %167 = arith.addf %166, %165 : vector<8x128xf32>
    %168 = arith.divf %166, %167 : vector<8x128xf32>
    %169 = vector.extract_strided_slice %151 {offsets = [0, 256], sizes = [8, 128], strides = [1, 1]} : vector<8x384xf32> to vector<8x128xf32>
    %170 = vector.extract_strided_slice %152 {offsets = [0, 256], sizes = [8, 128], strides = [1, 1]} : vector<8x384xf32> to vector<8x128xf32>
    %171 = arith.addf %170, %10 : vector<8x128xf32>
    %172 = arith.mulf %160, %171 : vector<8x128xf32>
    %173 = arith.addf %169, %172 : vector<8x128xf32>
    %174 = math.tanh %173 : vector<8x128xf32>
    %cst_44 = arith.constant 1.000000e+00 : f32
    %175 = vector.broadcast %cst_44 : f32 to vector<8x128xf32>
    %176 = arith.subf %175, %168 : vector<8x128xf32>
    %177 = arith.mulf %176, %174 : vector<8x128xf32>
    %178 = arith.mulf %168, %145 : vector<8x128xf32>
    %179 = arith.addf %177, %178 : vector<8x128xf32>
    %180 = arith.index_cast %149 : i32 to index
    %c0_45 = arith.constant 0 : index
    %181 = vector.load %arg14[%180, %c0_45] : memref<64x128xf32, #tpu.memory_space<vmem>>, vector<8x128xf32>
    tpu.vector_store %arg14[%180, %c0_45], %179 {strides = array<i32>} : memref<64x128xf32, #tpu.memory_space<vmem>>, vector<8x128xf32>,
    %c5_i32 = arith.constant 5 : i32
    %c8_i32_46 = arith.constant 8 : i32
    %182 = arith.muli %c5_i32, %c8_i32_46 : i32
    %183 = tpu.assume_multiple %182, 8 : i32
    %184 = arith.index_cast %183 : i32 to index
    %c0_47 = arith.constant 0 : index
    %185 = vector.load %arg13[%184, %c0_47] : memref<64x384xf32, #tpu.memory_space<vmem>>, vector<8x384xf32>
    %cst_48 = arith.constant dense<0.000000e+00> : vector<8x384xf32>
    %186 = tpu.matmul %179, %7, %cst_48 {dimension_numbers = #tpu.dot_dimension_numbers<[1], [0], [0], [1], [0, 0, 1, 1], [], []>} : vector<8x128xf32>, vector<128x384xf32>, vector<8x384xf32> -> vector<8x384xf32>
    %187 = vector.extract_strided_slice %185 {offsets = [0, 0], sizes = [8, 128], strides = [1, 1]} : vector<8x384xf32> to vector<8x128xf32>
    %188 = vector.extract_strided_slice %186 {offsets = [0, 0], sizes = [8, 128], strides = [1, 1]} : vector<8x384xf32> to vector<8x128xf32>
    %189 = arith.addf %187, %188 : vector<8x128xf32>
    %190 = arith.negf %189 : vector<8x128xf32>
    %191 = math.exp %190 : vector<8x128xf32>
    %cst_49 = arith.constant 1.000000e+00 : f32
    %192 = vector.broadcast %cst_49 : f32 to vector<8x128xf32>
    %193 = arith.addf %192, %191 : vector<8x128xf32>
    %194 = arith.divf %192, %193 : vector<8x128xf32>
    %195 = vector.extract_strided_slice %185 {offsets = [0, 128], sizes = [8, 128], strides = [1, 1]} : vector<8x384xf32> to vector<8x128xf32>
    %196 = vector.extract_strided_slice %186 {offsets = [0, 128], sizes = [8, 128], strides = [1, 1]} : vector<8x384xf32> to vector<8x128xf32>
    %197 = arith.addf %195, %196 : vector<8x128xf32>
    %198 = arith.negf %197 : vector<8x128xf32>
    %199 = math.exp %198 : vector<8x128xf32>
    %cst_50 = arith.constant 1.000000e+00 : f32
    %200 = vector.broadcast %cst_50 : f32 to vector<8x128xf32>
    %201 = arith.addf %200, %199 : vector<8x128xf32>
    %202 = arith.divf %200, %201 : vector<8x128xf32>
    %203 = vector.extract_strided_slice %185 {offsets = [0, 256], sizes = [8, 128], strides = [1, 1]} : vector<8x384xf32> to vector<8x128xf32>
    %204 = vector.extract_strided_slice %186 {offsets = [0, 256], sizes = [8, 128], strides = [1, 1]} : vector<8x384xf32> to vector<8x128xf32>
    %205 = arith.addf %204, %10 : vector<8x128xf32>
    %206 = arith.mulf %194, %205 : vector<8x128xf32>
    %207 = arith.addf %203, %206 : vector<8x128xf32>
    %208 = math.tanh %207 : vector<8x128xf32>
    %cst_51 = arith.constant 1.000000e+00 : f32
    %209 = vector.broadcast %cst_51 : f32 to vector<8x128xf32>
    %210 = arith.subf %209, %202 : vector<8x128xf32>
    %211 = arith.mulf %210, %208 : vector<8x128xf32>
    %212 = arith.mulf %202, %179 : vector<8x128xf32>
    %213 = arith.addf %211, %212 : vector<8x128xf32>
    %214 = arith.index_cast %183 : i32 to index
    %c0_52 = arith.constant 0 : index
    %215 = vector.load %arg14[%214, %c0_52] : memref<64x128xf32, #tpu.memory_space<vmem>>, vector<8x128xf32>
    tpu.vector_store %arg14[%214, %c0_52], %213 {strides = array<i32>} : memref<64x128xf32, #tpu.memory_space<vmem>>, vector<8x128xf32>,
    %c6_i32 = arith.constant 6 : i32
    %c8_i32_53 = arith.constant 8 : i32
    %216 = arith.muli %c6_i32, %c8_i32_53 : i32
    %217 = tpu.assume_multiple %216, 8 : i32
    %218 = arith.index_cast %217 : i32 to index
    %c0_54 = arith.constant 0 : index
    %219 = vector.load %arg13[%218, %c0_54] : memref<64x384xf32, #tpu.memory_space<vmem>>, vector<8x384xf32>
    %cst_55 = arith.constant dense<0.000000e+00> : vector<8x384xf32>
    %220 = tpu.matmul %213, %7, %cst_55 {dimension_numbers = #tpu.dot_dimension_numbers<[1], [0], [0], [1], [0, 0, 1, 1], [], []>} : vector<8x128xf32>, vector<128x384xf32>, vector<8x384xf32> -> vector<8x384xf32>
    %221 = vector.extract_strided_slice %219 {offsets = [0, 0], sizes = [8, 128], strides = [1, 1]} : vector<8x384xf32> to vector<8x128xf32>
    %222 = vector.extract_strided_slice %220 {offsets = [0, 0], sizes = [8, 128], strides = [1, 1]} : vector<8x384xf32> to vector<8x128xf32>
    %223 = arith.addf %221, %222 : vector<8x128xf32>
    %224 = arith.negf %223 : vector<8x128xf32>
    %225 = math.exp %224 : vector<8x128xf32>
    %cst_56 = arith.constant 1.000000e+00 : f32
    %226 = vector.broadcast %cst_56 : f32 to vector<8x128xf32>
    %227 = arith.addf %226, %225 : vector<8x128xf32>
    %228 = arith.divf %226, %227 : vector<8x128xf32>
    %229 = vector.extract_strided_slice %219 {offsets = [0, 128], sizes = [8, 128], strides = [1, 1]} : vector<8x384xf32> to vector<8x128xf32>
    %230 = vector.extract_strided_slice %220 {offsets = [0, 128], sizes = [8, 128], strides = [1, 1]} : vector<8x384xf32> to vector<8x128xf32>
    %231 = arith.addf %229, %230 : vector<8x128xf32>
    %232 = arith.negf %231 : vector<8x128xf32>
    %233 = math.exp %232 : vector<8x128xf32>
    %cst_57 = arith.constant 1.000000e+00 : f32
    %234 = vector.broadcast %cst_57 : f32 to vector<8x128xf32>
    %235 = arith.addf %234, %233 : vector<8x128xf32>
    %236 = arith.divf %234, %235 : vector<8x128xf32>
    %237 = vector.extract_strided_slice %219 {offsets = [0, 256], sizes = [8, 128], strides = [1, 1]} : vector<8x384xf32> to vector<8x128xf32>
    %238 = vector.extract_strided_slice %220 {offsets = [0, 256], sizes = [8, 128], strides = [1, 1]} : vector<8x384xf32> to vector<8x128xf32>
    %239 = arith.addf %238, %10 : vector<8x128xf32>
    %240 = arith.mulf %228, %239 : vector<8x128xf32>
    %241 = arith.addf %237, %240 : vector<8x128xf32>
    %242 = math.tanh %241 : vector<8x128xf32>
    %cst_58 = arith.constant 1.000000e+00 : f32
    %243 = vector.broadcast %cst_58 : f32 to vector<8x128xf32>
    %244 = arith.subf %243, %236 : vector<8x128xf32>
    %245 = arith.mulf %244, %242 : vector<8x128xf32>
    %246 = arith.mulf %236, %213 : vector<8x128xf32>
    %247 = arith.addf %245, %246 : vector<8x128xf32>
    %248 = arith.index_cast %217 : i32 to index
    %c0_59 = arith.constant 0 : index
    %249 = vector.load %arg14[%248, %c0_59] : memref<64x128xf32, #tpu.memory_space<vmem>>, vector<8x128xf32>
    tpu.vector_store %arg14[%248, %c0_59], %247 {strides = array<i32>} : memref<64x128xf32, #tpu.memory_space<vmem>>, vector<8x128xf32>,
    %c7_i32 = arith.constant 7 : i32
    %c8_i32_60 = arith.constant 8 : i32
    %250 = arith.muli %c7_i32, %c8_i32_60 : i32
    %251 = tpu.assume_multiple %250, 8 : i32
    %252 = arith.index_cast %251 : i32 to index
    %c0_61 = arith.constant 0 : index
    %253 = vector.load %arg13[%252, %c0_61] : memref<64x384xf32, #tpu.memory_space<vmem>>, vector<8x384xf32>
    %cst_62 = arith.constant dense<0.000000e+00> : vector<8x384xf32>
    %254 = tpu.matmul %247, %7, %cst_62 {dimension_numbers = #tpu.dot_dimension_numbers<[1], [0], [0], [1], [0, 0, 1, 1], [], []>} : vector<8x128xf32>, vector<128x384xf32>, vector<8x384xf32> -> vector<8x384xf32>
    %255 = vector.extract_strided_slice %253 {offsets = [0, 0], sizes = [8, 128], strides = [1, 1]} : vector<8x384xf32> to vector<8x128xf32>
    %256 = vector.extract_strided_slice %254 {offsets = [0, 0], sizes = [8, 128], strides = [1, 1]} : vector<8x384xf32> to vector<8x128xf32>
    %257 = arith.addf %255, %256 : vector<8x128xf32>
    %258 = arith.negf %257 : vector<8x128xf32>
    %259 = math.exp %258 : vector<8x128xf32>
    %cst_63 = arith.constant 1.000000e+00 : f32
    %260 = vector.broadcast %cst_63 : f32 to vector<8x128xf32>
    %261 = arith.addf %260, %259 : vector<8x128xf32>
    %262 = arith.divf %260, %261 : vector<8x128xf32>
    %263 = vector.extract_strided_slice %253 {offsets = [0, 128], sizes = [8, 128], strides = [1, 1]} : vector<8x384xf32> to vector<8x128xf32>
    %264 = vector.extract_strided_slice %254 {offsets = [0, 128], sizes = [8, 128], strides = [1, 1]} : vector<8x384xf32> to vector<8x128xf32>
    %265 = arith.addf %263, %264 : vector<8x128xf32>
    %266 = arith.negf %265 : vector<8x128xf32>
    %267 = math.exp %266 : vector<8x128xf32>
    %cst_64 = arith.constant 1.000000e+00 : f32
    %268 = vector.broadcast %cst_64 : f32 to vector<8x128xf32>
    %269 = arith.addf %268, %267 : vector<8x128xf32>
    %270 = arith.divf %268, %269 : vector<8x128xf32>
    %271 = vector.extract_strided_slice %253 {offsets = [0, 256], sizes = [8, 128], strides = [1, 1]} : vector<8x384xf32> to vector<8x128xf32>
    %272 = vector.extract_strided_slice %254 {offsets = [0, 256], sizes = [8, 128], strides = [1, 1]} : vector<8x384xf32> to vector<8x128xf32>
    %273 = arith.addf %272, %10 : vector<8x128xf32>
    %274 = arith.mulf %262, %273 : vector<8x128xf32>
    %275 = arith.addf %271, %274 : vector<8x128xf32>
    %276 = math.tanh %275 : vector<8x128xf32>
    %cst_65 = arith.constant 1.000000e+00 : f32
    %277 = vector.broadcast %cst_65 : f32 to vector<8x128xf32>
    %278 = arith.subf %277, %270 : vector<8x128xf32>
    %279 = arith.mulf %278, %276 : vector<8x128xf32>
    %280 = arith.mulf %270, %247 : vector<8x128xf32>
    %281 = arith.addf %279, %280 : vector<8x128xf32>
    %282 = arith.index_cast %251 : i32 to index
    %c0_66 = arith.constant 0 : index
    %283 = vector.load %arg14[%282, %c0_66] : memref<64x128xf32, #tpu.memory_space<vmem>>, vector<8x128xf32>
    tpu.vector_store %arg14[%282, %c0_66], %281 {strides = array<i32>} : memref<64x128xf32, #tpu.memory_space<vmem>>, vector<8x128xf32>,
    %c8_i32_67 = arith.constant 8 : i32
    %c0_68 = arith.constant 0 : index
    %c0_69 = arith.constant 0 : index
    %c0_70 = arith.constant 0 : index
    %284 = vector.load %arg12[%c0_68, %c0_69, %c0_70] : memref<2x8x128xf32, #tpu.memory_space<vmem>>, vector<1x8x128xf32>
    %285 = vector.shape_cast %284 : vector<1x8x128xf32> to vector<8x128xf32>
    %286 = vector.shape_cast %281 : vector<8x128xf32> to vector<1x8x128xf32>
    tpu.vector_store %arg12[%c0_68, %c0_69, %c0_70], %286 {strides = array<i32>} : memref<2x8x128xf32, #tpu.memory_space<vmem>>, vector<1x8x128xf32>,
    %c0_71 = arith.constant 0 : index
    %c0_72 = arith.constant 0 : index
    %287 = vector.load %arg14[%c0_71, %c0_72] : memref<64x128xf32, #tpu.memory_space<vmem>>, vector<64x128xf32>
    %c0_73 = arith.constant 0 : index
    %c0_74 = arith.constant 0 : index
    %288 = vector.load %arg5[%c0_73, %c0_74] : memref<128x384xf32, #tpu.memory_space<vmem>>, vector<128x384xf32>
    %cst_75 = arith.constant dense<0.000000e+00> : vector<64x384xf32>
    %289 = tpu.matmul %287, %288, %cst_75 {dimension_numbers = #tpu.dot_dimension_numbers<[1], [0], [0], [1], [0, 0, 1, 1], [], []>} : vector<64x128xf32>, vector<128x384xf32>, vector<64x384xf32> -> vector<64x384xf32>
    %c0_76 = arith.constant 0 : index
    %c0_77 = arith.constant 0 : index
    %290 = vector.load %arg7[%c0_76, %c0_77] : memref<1x384xf32, #tpu.memory_space<vmem>>, vector<1x384xf32>
    %291 = vector.broadcast %290 : vector<1x384xf32> to vector<64x384xf32>
    %292 = arith.addf %289, %291 : vector<64x384xf32>
    %c0_78 = arith.constant 0 : index
    %c0_79 = arith.constant 0 : index
    %293 = vector.load %arg13[%c0_78, %c0_79] : memref<64x384xf32, #tpu.memory_space<vmem>>, vector<64x384xf32>
    tpu.vector_store %arg13[%c0_78, %c0_79], %292 {strides = array<i32>} : memref<64x384xf32, #tpu.memory_space<vmem>>, vector<64x384xf32>,
    %c0_80 = arith.constant 0 : index
    %c0_81 = arith.constant 0 : index
    %294 = vector.load %arg6[%c0_80, %c0_81] : memref<128x384xf32, #tpu.memory_space<vmem>>, vector<128x384xf32>
    %c0_82 = arith.constant 0 : index
    %c0_83 = arith.constant 0 : index
    %295 = vector.load %arg8[%c0_82, %c0_83] : memref<1x128xf32, #tpu.memory_space<vmem>>, vector<1x128xf32>
    %296 = vector.shape_cast %295 : vector<1x128xf32> to vector<1x128xf32>
    %297 = vector.broadcast %296 : vector<1x128xf32> to vector<8x128xf32>
    %cst_84 = arith.constant 0.000000e+00 : f32
    %298 = vector.broadcast %cst_84 : f32 to vector<8x128xf32>
    %c0_i32_85 = arith.constant 0 : i32
    %c8_i32_86 = arith.constant 8 : i32
    %299 = arith.muli %c0_i32_85, %c8_i32_86 : i32
    %300 = tpu.assume_multiple %299, 8 : i32
    %301 = arith.index_cast %300 : i32 to index
    %c0_87 = arith.constant 0 : index
    %302 = vector.load %arg13[%301, %c0_87] : memref<64x384xf32, #tpu.memory_space<vmem>>, vector<8x384xf32>
    %cst_88 = arith.constant dense<0.000000e+00> : vector<8x384xf32>
    %303 = tpu.matmul %298, %294, %cst_88 {dimension_numbers = #tpu.dot_dimension_numbers<[1], [0], [0], [1], [0, 0, 1, 1], [], []>} : vector<8x128xf32>, vector<128x384xf32>, vector<8x384xf32> -> vector<8x384xf32>
    %304 = vector.extract_strided_slice %302 {offsets = [0, 0], sizes = [8, 128], strides = [1, 1]} : vector<8x384xf32> to vector<8x128xf32>
    %305 = vector.extract_strided_slice %303 {offsets = [0, 0], sizes = [8, 128], strides = [1, 1]} : vector<8x384xf32> to vector<8x128xf32>
    %306 = arith.addf %304, %305 : vector<8x128xf32>
    %307 = arith.negf %306 : vector<8x128xf32>
    %308 = math.exp %307 : vector<8x128xf32>
    %cst_89 = arith.constant 1.000000e+00 : f32
    %309 = vector.broadcast %cst_89 : f32 to vector<8x128xf32>
    %310 = arith.addf %309, %308 : vector<8x128xf32>
    %311 = arith.divf %309, %310 : vector<8x128xf32>
    %312 = vector.extract_strided_slice %302 {offsets = [0, 128], sizes = [8, 128], strides = [1, 1]} : vector<8x384xf32> to vector<8x128xf32>
    %313 = vector.extract_strided_slice %303 {offsets = [0, 128], sizes = [8, 128], strides = [1, 1]} : vector<8x384xf32> to vector<8x128xf32>
    %314 = arith.addf %312, %313 : vector<8x128xf32>
    %315 = arith.negf %314 : vector<8x128xf32>
    %316 = math.exp %315 : vector<8x128xf32>
    %cst_90 = arith.constant 1.000000e+00 : f32
    %317 = vector.broadcast %cst_90 : f32 to vector<8x128xf32>
    %318 = arith.addf %317, %316 : vector<8x128xf32>
    %319 = arith.divf %317, %318 : vector<8x128xf32>
    %320 = vector.extract_strided_slice %302 {offsets = [0, 256], sizes = [8, 128], strides = [1, 1]} : vector<8x384xf32> to vector<8x128xf32>
    %321 = vector.extract_strided_slice %303 {offsets = [0, 256], sizes = [8, 128], strides = [1, 1]} : vector<8x384xf32> to vector<8x128xf32>
    %322 = arith.addf %321, %297 : vector<8x128xf32>
    %323 = arith.mulf %311, %322 : vector<8x128xf32>
    %324 = arith.addf %320, %323 : vector<8x128xf32>
    %325 = math.tanh %324 : vector<8x128xf32>
    %cst_91 = arith.constant 1.000000e+00 : f32
    %326 = vector.broadcast %cst_91 : f32 to vector<8x128xf32>
    %327 = arith.subf %326, %319 : vector<8x128xf32>
    %328 = arith.mulf %327, %325 : vector<8x128xf32>
    %329 = arith.mulf %319, %298 : vector<8x128xf32>
    %330 = arith.addf %328, %329 : vector<8x128xf32>
    %331 = arith.index_cast %300 : i32 to index
    %c0_92 = arith.constant 0 : index
    %332 = vector.load %arg15[%331, %c0_92] : memref<64x128xf32, #tpu.memory_space<vmem>>, vector<8x128xf32>
    tpu.vector_store %arg15[%331, %c0_92], %330 {strides = array<i32>} : memref<64x128xf32, #tpu.memory_space<vmem>>, vector<8x128xf32>,
    %c1_i32_93 = arith.constant 1 : i32
    %c8_i32_94 = arith.constant 8 : i32
    %333 = arith.muli %c1_i32_93, %c8_i32_94 : i32
    %334 = tpu.assume_multiple %333, 8 : i32
    %335 = arith.index_cast %334 : i32 to index
    %c0_95 = arith.constant 0 : index
    %336 = vector.load %arg13[%335, %c0_95] : memref<64x384xf32, #tpu.memory_space<vmem>>, vector<8x384xf32>
    %cst_96 = arith.constant dense<0.000000e+00> : vector<8x384xf32>
    %337 = tpu.matmul %330, %294, %cst_96 {dimension_numbers = #tpu.dot_dimension_numbers<[1], [0], [0], [1], [0, 0, 1, 1], [], []>} : vector<8x128xf32>, vector<128x384xf32>, vector<8x384xf32> -> vector<8x384xf32>
    %338 = vector.extract_strided_slice %336 {offsets = [0, 0], sizes = [8, 128], strides = [1, 1]} : vector<8x384xf32> to vector<8x128xf32>
    %339 = vector.extract_strided_slice %337 {offsets = [0, 0], sizes = [8, 128], strides = [1, 1]} : vector<8x384xf32> to vector<8x128xf32>
    %340 = arith.addf %338, %339 : vector<8x128xf32>
    %341 = arith.negf %340 : vector<8x128xf32>
    %342 = math.exp %341 : vector<8x128xf32>
    %cst_97 = arith.constant 1.000000e+00 : f32
    %343 = vector.broadcast %cst_97 : f32 to vector<8x128xf32>
    %344 = arith.addf %343, %342 : vector<8x128xf32>
    %345 = arith.divf %343, %344 : vector<8x128xf32>
    %346 = vector.extract_strided_slice %336 {offsets = [0, 128], sizes = [8, 128], strides = [1, 1]} : vector<8x384xf32> to vector<8x128xf32>
    %347 = vector.extract_strided_slice %337 {offsets = [0, 128], sizes = [8, 128], strides = [1, 1]} : vector<8x384xf32> to vector<8x128xf32>
    %348 = arith.addf %346, %347 : vector<8x128xf32>
    %349 = arith.negf %348 : vector<8x128xf32>
    %350 = math.exp %349 : vector<8x128xf32>
    %cst_98 = arith.constant 1.000000e+00 : f32
    %351 = vector.broadcast %cst_98 : f32 to vector<8x128xf32>
    %352 = arith.addf %351, %350 : vector<8x128xf32>
    %353 = arith.divf %351, %352 : vector<8x128xf32>
    %354 = vector.extract_strided_slice %336 {offsets = [0, 256], sizes = [8, 128], strides = [1, 1]} : vector<8x384xf32> to vector<8x128xf32>
    %355 = vector.extract_strided_slice %337 {offsets = [0, 256], sizes = [8, 128], strides = [1, 1]} : vector<8x384xf32> to vector<8x128xf32>
    %356 = arith.addf %355, %297 : vector<8x128xf32>
    %357 = arith.mulf %345, %356 : vector<8x128xf32>
    %358 = arith.addf %354, %357 : vector<8x128xf32>
    %359 = math.tanh %358 : vector<8x128xf32>
    %cst_99 = arith.constant 1.000000e+00 : f32
    %360 = vector.broadcast %cst_99 : f32 to vector<8x128xf32>
    %361 = arith.subf %360, %353 : vector<8x128xf32>
    %362 = arith.mulf %361, %359 : vector<8x128xf32>
    %363 = arith.mulf %353, %330 : vector<8x128xf32>
    %364 = arith.addf %362, %363 : vector<8x128xf32>
    %365 = arith.index_cast %334 : i32 to index
    %c0_100 = arith.constant 0 : index
    %366 = vector.load %arg15[%365, %c0_100] : memref<64x128xf32, #tpu.memory_space<vmem>>, vector<8x128xf32>
    tpu.vector_store %arg15[%365, %c0_100], %364 {strides = array<i32>} : memref<64x128xf32, #tpu.memory_space<vmem>>, vector<8x128xf32>,
    %c2_i32_101 = arith.constant 2 : i32
    %c8_i32_102 = arith.constant 8 : i32
    %367 = arith.muli %c2_i32_101, %c8_i32_102 : i32
    %368 = tpu.assume_multiple %367, 8 : i32
    %369 = arith.index_cast %368 : i32 to index
    %c0_103 = arith.constant 0 : index
    %370 = vector.load %arg13[%369, %c0_103] : memref<64x384xf32, #tpu.memory_space<vmem>>, vector<8x384xf32>
    %cst_104 = arith.constant dense<0.000000e+00> : vector<8x384xf32>
    %371 = tpu.matmul %364, %294, %cst_104 {dimension_numbers = #tpu.dot_dimension_numbers<[1], [0], [0], [1], [0, 0, 1, 1], [], []>} : vector<8x128xf32>, vector<128x384xf32>, vector<8x384xf32> -> vector<8x384xf32>
    %372 = vector.extract_strided_slice %370 {offsets = [0, 0], sizes = [8, 128], strides = [1, 1]} : vector<8x384xf32> to vector<8x128xf32>
    %373 = vector.extract_strided_slice %371 {offsets = [0, 0], sizes = [8, 128], strides = [1, 1]} : vector<8x384xf32> to vector<8x128xf32>
    %374 = arith.addf %372, %373 : vector<8x128xf32>
    %375 = arith.negf %374 : vector<8x128xf32>
    %376 = math.exp %375 : vector<8x128xf32>
    %cst_105 = arith.constant 1.000000e+00 : f32
    %377 = vector.broadcast %cst_105 : f32 to vector<8x128xf32>
    %378 = arith.addf %377, %376 : vector<8x128xf32>
    %379 = arith.divf %377, %378 : vector<8x128xf32>
    %380 = vector.extract_strided_slice %370 {offsets = [0, 128], sizes = [8, 128], strides = [1, 1]} : vector<8x384xf32> to vector<8x128xf32>
    %381 = vector.extract_strided_slice %371 {offsets = [0, 128], sizes = [8, 128], strides = [1, 1]} : vector<8x384xf32> to vector<8x128xf32>
    %382 = arith.addf %380, %381 : vector<8x128xf32>
    %383 = arith.negf %382 : vector<8x128xf32>
    %384 = math.exp %383 : vector<8x128xf32>
    %cst_106 = arith.constant 1.000000e+00 : f32
    %385 = vector.broadcast %cst_106 : f32 to vector<8x128xf32>
    %386 = arith.addf %385, %384 : vector<8x128xf32>
    %387 = arith.divf %385, %386 : vector<8x128xf32>
    %388 = vector.extract_strided_slice %370 {offsets = [0, 256], sizes = [8, 128], strides = [1, 1]} : vector<8x384xf32> to vector<8x128xf32>
    %389 = vector.extract_strided_slice %371 {offsets = [0, 256], sizes = [8, 128], strides = [1, 1]} : vector<8x384xf32> to vector<8x128xf32>
    %390 = arith.addf %389, %297 : vector<8x128xf32>
    %391 = arith.mulf %379, %390 : vector<8x128xf32>
    %392 = arith.addf %388, %391 : vector<8x128xf32>
    %393 = math.tanh %392 : vector<8x128xf32>
    %cst_107 = arith.constant 1.000000e+00 : f32
    %394 = vector.broadcast %cst_107 : f32 to vector<8x128xf32>
    %395 = arith.subf %394, %387 : vector<8x128xf32>
    %396 = arith.mulf %395, %393 : vector<8x128xf32>
    %397 = arith.mulf %387, %364 : vector<8x128xf32>
    %398 = arith.addf %396, %397 : vector<8x128xf32>
    %399 = arith.index_cast %368 : i32 to index
    %c0_108 = arith.constant 0 : index
    %400 = vector.load %arg15[%399, %c0_108] : memref<64x128xf32, #tpu.memory_space<vmem>>, vector<8x128xf32>
    tpu.vector_store %arg15[%399, %c0_108], %398 {strides = array<i32>} : memref<64x128xf32, #tpu.memory_space<vmem>>, vector<8x128xf32>,
    %c3_i32_109 = arith.constant 3 : i32
    %c8_i32_110 = arith.constant 8 : i32
    %401 = arith.muli %c3_i32_109, %c8_i32_110 : i32
    %402 = tpu.assume_multiple %401, 8 : i32
    %403 = arith.index_cast %402 : i32 to index
    %c0_111 = arith.constant 0 : index
    %404 = vector.load %arg13[%403, %c0_111] : memref<64x384xf32, #tpu.memory_space<vmem>>, vector<8x384xf32>
    %cst_112 = arith.constant dense<0.000000e+00> : vector<8x384xf32>
    %405 = tpu.matmul %398, %294, %cst_112 {dimension_numbers = #tpu.dot_dimension_numbers<[1], [0], [0], [1], [0, 0, 1, 1], [], []>} : vector<8x128xf32>, vector<128x384xf32>, vector<8x384xf32> -> vector<8x384xf32>
    %406 = vector.extract_strided_slice %404 {offsets = [0, 0], sizes = [8, 128], strides = [1, 1]} : vector<8x384xf32> to vector<8x128xf32>
    %407 = vector.extract_strided_slice %405 {offsets = [0, 0], sizes = [8, 128], strides = [1, 1]} : vector<8x384xf32> to vector<8x128xf32>
    %408 = arith.addf %406, %407 : vector<8x128xf32>
    %409 = arith.negf %408 : vector<8x128xf32>
    %410 = math.exp %409 : vector<8x128xf32>
    %cst_113 = arith.constant 1.000000e+00 : f32
    %411 = vector.broadcast %cst_113 : f32 to vector<8x128xf32>
    %412 = arith.addf %411, %410 : vector<8x128xf32>
    %413 = arith.divf %411, %412 : vector<8x128xf32>
    %414 = vector.extract_strided_slice %404 {offsets = [0, 128], sizes = [8, 128], strides = [1, 1]} : vector<8x384xf32> to vector<8x128xf32>
    %415 = vector.extract_strided_slice %405 {offsets = [0, 128], sizes = [8, 128], strides = [1, 1]} : vector<8x384xf32> to vector<8x128xf32>
    %416 = arith.addf %414, %415 : vector<8x128xf32>
    %417 = arith.negf %416 : vector<8x128xf32>
    %418 = math.exp %417 : vector<8x128xf32>
    %cst_114 = arith.constant 1.000000e+00 : f32
    %419 = vector.broadcast %cst_114 : f32 to vector<8x128xf32>
    %420 = arith.addf %419, %418 : vector<8x128xf32>
    %421 = arith.divf %419, %420 : vector<8x128xf32>
    %422 = vector.extract_strided_slice %404 {offsets = [0, 256], sizes = [8, 128], strides = [1, 1]} : vector<8x384xf32> to vector<8x128xf32>
    %423 = vector.extract_strided_slice %405 {offsets = [0, 256], sizes = [8, 128], strides = [1, 1]} : vector<8x384xf32> to vector<8x128xf32>
    %424 = arith.addf %423, %297 : vector<8x128xf32>
    %425 = arith.mulf %413, %424 : vector<8x128xf32>
    %426 = arith.addf %422, %425 : vector<8x128xf32>
    %427 = math.tanh %426 : vector<8x128xf32>
    %cst_115 = arith.constant 1.000000e+00 : f32
    %428 = vector.broadcast %cst_115 : f32 to vector<8x128xf32>
    %429 = arith.subf %428, %421 : vector<8x128xf32>
    %430 = arith.mulf %429, %427 : vector<8x128xf32>
    %431 = arith.mulf %421, %398 : vector<8x128xf32>
    %432 = arith.addf %430, %431 : vector<8x128xf32>
    %433 = arith.index_cast %402 : i32 to index
    %c0_116 = arith.constant 0 : index
    %434 = vector.load %arg15[%433, %c0_116] : memref<64x128xf32, #tpu.memory_space<vmem>>, vector<8x128xf32>
    tpu.vector_store %arg15[%433, %c0_116], %432 {strides = array<i32>} : memref<64x128xf32, #tpu.memory_space<vmem>>, vector<8x128xf32>,
    %c4_i32_117 = arith.constant 4 : i32
    %c8_i32_118 = arith.constant 8 : i32
    %435 = arith.muli %c4_i32_117, %c8_i32_118 : i32
    %436 = tpu.assume_multiple %435, 8 : i32
    %437 = arith.index_cast %436 : i32 to index
    %c0_119 = arith.constant 0 : index
    %438 = vector.load %arg13[%437, %c0_119] : memref<64x384xf32, #tpu.memory_space<vmem>>, vector<8x384xf32>
    %cst_120 = arith.constant dense<0.000000e+00> : vector<8x384xf32>
    %439 = tpu.matmul %432, %294, %cst_120 {dimension_numbers = #tpu.dot_dimension_numbers<[1], [0], [0], [1], [0, 0, 1, 1], [], []>} : vector<8x128xf32>, vector<128x384xf32>, vector<8x384xf32> -> vector<8x384xf32>
    %440 = vector.extract_strided_slice %438 {offsets = [0, 0], sizes = [8, 128], strides = [1, 1]} : vector<8x384xf32> to vector<8x128xf32>
    %441 = vector.extract_strided_slice %439 {offsets = [0, 0], sizes = [8, 128], strides = [1, 1]} : vector<8x384xf32> to vector<8x128xf32>
    %442 = arith.addf %440, %441 : vector<8x128xf32>
    %443 = arith.negf %442 : vector<8x128xf32>
    %444 = math.exp %443 : vector<8x128xf32>
    %cst_121 = arith.constant 1.000000e+00 : f32
    %445 = vector.broadcast %cst_121 : f32 to vector<8x128xf32>
    %446 = arith.addf %445, %444 : vector<8x128xf32>
    %447 = arith.divf %445, %446 : vector<8x128xf32>
    %448 = vector.extract_strided_slice %438 {offsets = [0, 128], sizes = [8, 128], strides = [1, 1]} : vector<8x384xf32> to vector<8x128xf32>
    %449 = vector.extract_strided_slice %439 {offsets = [0, 128], sizes = [8, 128], strides = [1, 1]} : vector<8x384xf32> to vector<8x128xf32>
    %450 = arith.addf %448, %449 : vector<8x128xf32>
    %451 = arith.negf %450 : vector<8x128xf32>
    %452 = math.exp %451 : vector<8x128xf32>
    %cst_122 = arith.constant 1.000000e+00 : f32
    %453 = vector.broadcast %cst_122 : f32 to vector<8x128xf32>
    %454 = arith.addf %453, %452 : vector<8x128xf32>
    %455 = arith.divf %453, %454 : vector<8x128xf32>
    %456 = vector.extract_strided_slice %438 {offsets = [0, 256], sizes = [8, 128], strides = [1, 1]} : vector<8x384xf32> to vector<8x128xf32>
    %457 = vector.extract_strided_slice %439 {offsets = [0, 256], sizes = [8, 128], strides = [1, 1]} : vector<8x384xf32> to vector<8x128xf32>
    %458 = arith.addf %457, %297 : vector<8x128xf32>
    %459 = arith.mulf %447, %458 : vector<8x128xf32>
    %460 = arith.addf %456, %459 : vector<8x128xf32>
    %461 = math.tanh %460 : vector<8x128xf32>
    %cst_123 = arith.constant 1.000000e+00 : f32
    %462 = vector.broadcast %cst_123 : f32 to vector<8x128xf32>
    %463 = arith.subf %462, %455 : vector<8x128xf32>
    %464 = arith.mulf %463, %461 : vector<8x128xf32>
    %465 = arith.mulf %455, %432 : vector<8x128xf32>
    %466 = arith.addf %464, %465 : vector<8x128xf32>
    %467 = arith.index_cast %436 : i32 to index
    %c0_124 = arith.constant 0 : index
    %468 = vector.load %arg15[%467, %c0_124] : memref<64x128xf32, #tpu.memory_space<vmem>>, vector<8x128xf32>
    tpu.vector_store %arg15[%467, %c0_124], %466 {strides = array<i32>} : memref<64x128xf32, #tpu.memory_space<vmem>>, vector<8x128xf32>,
    %c5_i32_125 = arith.constant 5 : i32
    %c8_i32_126 = arith.constant 8 : i32
    %469 = arith.muli %c5_i32_125, %c8_i32_126 : i32
    %470 = tpu.assume_multiple %469, 8 : i32
    %471 = arith.index_cast %470 : i32 to index
    %c0_127 = arith.constant 0 : index
    %472 = vector.load %arg13[%471, %c0_127] : memref<64x384xf32, #tpu.memory_space<vmem>>, vector<8x384xf32>
    %cst_128 = arith.constant dense<0.000000e+00> : vector<8x384xf32>
    %473 = tpu.matmul %466, %294, %cst_128 {dimension_numbers = #tpu.dot_dimension_numbers<[1], [0], [0], [1], [0, 0, 1, 1], [], []>} : vector<8x128xf32>, vector<128x384xf32>, vector<8x384xf32> -> vector<8x384xf32>
    %474 = vector.extract_strided_slice %472 {offsets = [0, 0], sizes = [8, 128], strides = [1, 1]} : vector<8x384xf32> to vector<8x128xf32>
    %475 = vector.extract_strided_slice %473 {offsets = [0, 0], sizes = [8, 128], strides = [1, 1]} : vector<8x384xf32> to vector<8x128xf32>
    %476 = arith.addf %474, %475 : vector<8x128xf32>
    %477 = arith.negf %476 : vector<8x128xf32>
    %478 = math.exp %477 : vector<8x128xf32>
    %cst_129 = arith.constant 1.000000e+00 : f32
    %479 = vector.broadcast %cst_129 : f32 to vector<8x128xf32>
    %480 = arith.addf %479, %478 : vector<8x128xf32>
    %481 = arith.divf %479, %480 : vector<8x128xf32>
    %482 = vector.extract_strided_slice %472 {offsets = [0, 128], sizes = [8, 128], strides = [1, 1]} : vector<8x384xf32> to vector<8x128xf32>
    %483 = vector.extract_strided_slice %473 {offsets = [0, 128], sizes = [8, 128], strides = [1, 1]} : vector<8x384xf32> to vector<8x128xf32>
    %484 = arith.addf %482, %483 : vector<8x128xf32>
    %485 = arith.negf %484 : vector<8x128xf32>
    %486 = math.exp %485 : vector<8x128xf32>
    %cst_130 = arith.constant 1.000000e+00 : f32
    %487 = vector.broadcast %cst_130 : f32 to vector<8x128xf32>
    %488 = arith.addf %487, %486 : vector<8x128xf32>
    %489 = arith.divf %487, %488 : vector<8x128xf32>
    %490 = vector.extract_strided_slice %472 {offsets = [0, 256], sizes = [8, 128], strides = [1, 1]} : vector<8x384xf32> to vector<8x128xf32>
    %491 = vector.extract_strided_slice %473 {offsets = [0, 256], sizes = [8, 128], strides = [1, 1]} : vector<8x384xf32> to vector<8x128xf32>
    %492 = arith.addf %491, %297 : vector<8x128xf32>
    %493 = arith.mulf %481, %492 : vector<8x128xf32>
    %494 = arith.addf %490, %493 : vector<8x128xf32>
    %495 = math.tanh %494 : vector<8x128xf32>
    %cst_131 = arith.constant 1.000000e+00 : f32
    %496 = vector.broadcast %cst_131 : f32 to vector<8x128xf32>
    %497 = arith.subf %496, %489 : vector<8x128xf32>
    %498 = arith.mulf %497, %495 : vector<8x128xf32>
    %499 = arith.mulf %489, %466 : vector<8x128xf32>
    %500 = arith.addf %498, %499 : vector<8x128xf32>
    %501 = arith.index_cast %470 : i32 to index
    %c0_132 = arith.constant 0 : index
    %502 = vector.load %arg15[%501, %c0_132] : memref<64x128xf32, #tpu.memory_space<vmem>>, vector<8x128xf32>
    tpu.vector_store %arg15[%501, %c0_132], %500 {strides = array<i32>} : memref<64x128xf32, #tpu.memory_space<vmem>>, vector<8x128xf32>,
    %c6_i32_133 = arith.constant 6 : i32
    %c8_i32_134 = arith.constant 8 : i32
    %503 = arith.muli %c6_i32_133, %c8_i32_134 : i32
    %504 = tpu.assume_multiple %503, 8 : i32
    %505 = arith.index_cast %504 : i32 to index
    %c0_135 = arith.constant 0 : index
    %506 = vector.load %arg13[%505, %c0_135] : memref<64x384xf32, #tpu.memory_space<vmem>>, vector<8x384xf32>
    %cst_136 = arith.constant dense<0.000000e+00> : vector<8x384xf32>
    %507 = tpu.matmul %500, %294, %cst_136 {dimension_numbers = #tpu.dot_dimension_numbers<[1], [0], [0], [1], [0, 0, 1, 1], [], []>} : vector<8x128xf32>, vector<128x384xf32>, vector<8x384xf32> -> vector<8x384xf32>
    %508 = vector.extract_strided_slice %506 {offsets = [0, 0], sizes = [8, 128], strides = [1, 1]} : vector<8x384xf32> to vector<8x128xf32>
    %509 = vector.extract_strided_slice %507 {offsets = [0, 0], sizes = [8, 128], strides = [1, 1]} : vector<8x384xf32> to vector<8x128xf32>
    %510 = arith.addf %508, %509 : vector<8x128xf32>
    %511 = arith.negf %510 : vector<8x128xf32>
    %512 = math.exp %511 : vector<8x128xf32>
    %cst_137 = arith.constant 1.000000e+00 : f32
    %513 = vector.broadcast %cst_137 : f32 to vector<8x128xf32>
    %514 = arith.addf %513, %512 : vector<8x128xf32>
    %515 = arith.divf %513, %514 : vector<8x128xf32>
    %516 = vector.extract_strided_slice %506 {offsets = [0, 128], sizes = [8, 128], strides = [1, 1]} : vector<8x384xf32> to vector<8x128xf32>
    %517 = vector.extract_strided_slice %507 {offsets = [0, 128], sizes = [8, 128], strides = [1, 1]} : vector<8x384xf32> to vector<8x128xf32>
    %518 = arith.addf %516, %517 : vector<8x128xf32>
    %519 = arith.negf %518 : vector<8x128xf32>
    %520 = math.exp %519 : vector<8x128xf32>
    %cst_138 = arith.constant 1.000000e+00 : f32
    %521 = vector.broadcast %cst_138 : f32 to vector<8x128xf32>
    %522 = arith.addf %521, %520 : vector<8x128xf32>
    %523 = arith.divf %521, %522 : vector<8x128xf32>
    %524 = vector.extract_strided_slice %506 {offsets = [0, 256], sizes = [8, 128], strides = [1, 1]} : vector<8x384xf32> to vector<8x128xf32>
    %525 = vector.extract_strided_slice %507 {offsets = [0, 256], sizes = [8, 128], strides = [1, 1]} : vector<8x384xf32> to vector<8x128xf32>
    %526 = arith.addf %525, %297 : vector<8x128xf32>
    %527 = arith.mulf %515, %526 : vector<8x128xf32>
    %528 = arith.addf %524, %527 : vector<8x128xf32>
    %529 = math.tanh %528 : vector<8x128xf32>
    %cst_139 = arith.constant 1.000000e+00 : f32
    %530 = vector.broadcast %cst_139 : f32 to vector<8x128xf32>
    %531 = arith.subf %530, %523 : vector<8x128xf32>
    %532 = arith.mulf %531, %529 : vector<8x128xf32>
    %533 = arith.mulf %523, %500 : vector<8x128xf32>
    %534 = arith.addf %532, %533 : vector<8x128xf32>
    %535 = arith.index_cast %504 : i32 to index
    %c0_140 = arith.constant 0 : index
    %536 = vector.load %arg15[%535, %c0_140] : memref<64x128xf32, #tpu.memory_space<vmem>>, vector<8x128xf32>
    tpu.vector_store %arg15[%535, %c0_140], %534 {strides = array<i32>} : memref<64x128xf32, #tpu.memory_space<vmem>>, vector<8x128xf32>,
    %c7_i32_141 = arith.constant 7 : i32
    %c8_i32_142 = arith.constant 8 : i32
    %537 = arith.muli %c7_i32_141, %c8_i32_142 : i32
    %538 = tpu.assume_multiple %537, 8 : i32
    %539 = arith.index_cast %538 : i32 to index
    %c0_143 = arith.constant 0 : index
    %540 = vector.load %arg13[%539, %c0_143] : memref<64x384xf32, #tpu.memory_space<vmem>>, vector<8x384xf32>
    %cst_144 = arith.constant dense<0.000000e+00> : vector<8x384xf32>
    %541 = tpu.matmul %534, %294, %cst_144 {dimension_numbers = #tpu.dot_dimension_numbers<[1], [0], [0], [1], [0, 0, 1, 1], [], []>} : vector<8x128xf32>, vector<128x384xf32>, vector<8x384xf32> -> vector<8x384xf32>
    %542 = vector.extract_strided_slice %540 {offsets = [0, 0], sizes = [8, 128], strides = [1, 1]} : vector<8x384xf32> to vector<8x128xf32>
    %543 = vector.extract_strided_slice %541 {offsets = [0, 0], sizes = [8, 128], strides = [1, 1]} : vector<8x384xf32> to vector<8x128xf32>
    %544 = arith.addf %542, %543 : vector<8x128xf32>
    %545 = arith.negf %544 : vector<8x128xf32>
    %546 = math.exp %545 : vector<8x128xf32>
    %cst_145 = arith.constant 1.000000e+00 : f32
    %547 = vector.broadcast %cst_145 : f32 to vector<8x128xf32>
    %548 = arith.addf %547, %546 : vector<8x128xf32>
    %549 = arith.divf %547, %548 : vector<8x128xf32>
    %550 = vector.extract_strided_slice %540 {offsets = [0, 128], sizes = [8, 128], strides = [1, 1]} : vector<8x384xf32> to vector<8x128xf32>
    %551 = vector.extract_strided_slice %541 {offsets = [0, 128], sizes = [8, 128], strides = [1, 1]} : vector<8x384xf32> to vector<8x128xf32>
    %552 = arith.addf %550, %551 : vector<8x128xf32>
    %553 = arith.negf %552 : vector<8x128xf32>
    %554 = math.exp %553 : vector<8x128xf32>
    %cst_146 = arith.constant 1.000000e+00 : f32
    %555 = vector.broadcast %cst_146 : f32 to vector<8x128xf32>
    %556 = arith.addf %555, %554 : vector<8x128xf32>
    %557 = arith.divf %555, %556 : vector<8x128xf32>
    %558 = vector.extract_strided_slice %540 {offsets = [0, 256], sizes = [8, 128], strides = [1, 1]} : vector<8x384xf32> to vector<8x128xf32>
    %559 = vector.extract_strided_slice %541 {offsets = [0, 256], sizes = [8, 128], strides = [1, 1]} : vector<8x384xf32> to vector<8x128xf32>
    %560 = arith.addf %559, %297 : vector<8x128xf32>
    %561 = arith.mulf %549, %560 : vector<8x128xf32>
    %562 = arith.addf %558, %561 : vector<8x128xf32>
    %563 = math.tanh %562 : vector<8x128xf32>
    %cst_147 = arith.constant 1.000000e+00 : f32
    %564 = vector.broadcast %cst_147 : f32 to vector<8x128xf32>
    %565 = arith.subf %564, %557 : vector<8x128xf32>
    %566 = arith.mulf %565, %563 : vector<8x128xf32>
    %567 = arith.mulf %557, %534 : vector<8x128xf32>
    %568 = arith.addf %566, %567 : vector<8x128xf32>
    %569 = arith.index_cast %538 : i32 to index
    %c0_148 = arith.constant 0 : index
    %570 = vector.load %arg15[%569, %c0_148] : memref<64x128xf32, #tpu.memory_space<vmem>>, vector<8x128xf32>
    tpu.vector_store %arg15[%569, %c0_148], %568 {strides = array<i32>} : memref<64x128xf32, #tpu.memory_space<vmem>>, vector<8x128xf32>,
    %c8_i32_149 = arith.constant 8 : i32
    %c1 = arith.constant 1 : index
    %c0_150 = arith.constant 0 : index
    %c0_151 = arith.constant 0 : index
    %571 = vector.load %arg12[%c1, %c0_150, %c0_151] : memref<2x8x128xf32, #tpu.memory_space<vmem>>, vector<1x8x128xf32>
    %572 = vector.shape_cast %571 : vector<1x8x128xf32> to vector<8x128xf32>
    %573 = vector.shape_cast %568 : vector<8x128xf32> to vector<1x8x128xf32>
    tpu.vector_store %arg12[%c1, %c0_150, %c0_151], %573 {strides = array<i32>} : memref<2x8x128xf32, #tpu.memory_space<vmem>>, vector<1x8x128xf32>,
    %c0_152 = arith.constant 0 : index
    %c0_153 = arith.constant 0 : index
    %574 = vector.load %arg15[%c0_152, %c0_153] : memref<64x128xf32, #tpu.memory_space<vmem>>, vector<64x128xf32>
    %c0_154 = arith.constant 0 : index
    %c0_155 = arith.constant 0 : index
    %575 = vector.load %arg9[%c0_154, %c0_155] : memref<128x128xf32, #tpu.memory_space<vmem>>, vector<128x128xf32>
    %cst_156 = arith.constant dense<0.000000e+00> : vector<64x128xf32>
    %576 = tpu.matmul %574, %575, %cst_156 {dimension_numbers = #tpu.dot_dimension_numbers<[1], [0], [0], [1], [0, 0, 1, 1], [], []>} : vector<64x128xf32>, vector<128x128xf32>, vector<64x128xf32> -> vector<64x128xf32>
    %c0_157 = arith.constant 0 : index
    %c0_158 = arith.constant 0 : index
    %577 = vector.load %arg10[%c0_157, %c0_158] : memref<1x128xf32, #tpu.memory_space<vmem>>, vector<1x128xf32>
    %578 = vector.broadcast %577 : vector<1x128xf32> to vector<64x128xf32>
    %579 = arith.addf %576, %578 : vector<64x128xf32>
    %c0_159 = arith.constant 0 : index
    %c0_160 = arith.constant 0 : index
    %580 = vector.load %arg11[%c0_159, %c0_160] : memref<64x128xf32, #tpu.memory_space<vmem>>, vector<64x128xf32>
    tpu.vector_store %arg11[%c0_159, %c0_160], %579 {strides = array<i32>} : memref<64x128xf32, #tpu.memory_space<vmem>>, vector<64x128xf32>,
    return
  }
}

</mosaic_0001>

<llo_original>
// kernel: basic_gru_forward.1
$region0: #{basic_gru_forward.1}
  #allocation0 [shape = 'u32[]', space=smem, size = 0x4, offset = 0x4, fixed_abs, tag = 'smem constant byte address 0x4 - core index']
  #allocation1 [shape = 'u32[72,128]{1,0:T(1,128)}', space=vmem, size = 0x9000, scoped, tag = 'internal scratch']
  #allocation2 [shape = 'f32[64,384]{1,0:T(8,128)}', space=vmem, size = 0x18000, scoped, tag = 'scratch operand']
  #allocation3 [shape = 'f32[64,128]{1,0:T(8,128)}', space=vmem, size = 0x8000, scoped, tag = 'scratch operand']
  #allocation4 [shape = 'f32[64,128]{1,0:T(8,128)}', space=vmem, size = 0x8000, scoped, tag = 'scratch operand']
  %s0 = inlined_call_operand.vmem [shape: f32[64,128], index: 0, kind: input, shape index: {}]
  %s1 = inlined_call_operand.hbm [shape: f32[128,384], index: 1, kind: input, shape index: {}]
  %s2 = inlined_call_operand.hbm [shape: f32[128,384], index: 2, kind: input, shape index: {}]
  %s3 = inlined_call_operand.vmem [shape: f32[1,384], index: 3, kind: input, shape index: {}]
  %s4 = inlined_call_operand.vmem [shape: f32[1,128], index: 4, kind: input, shape index: {}]
  %s5 = inlined_call_operand.hbm [shape: f32[128,384], index: 5, kind: input, shape index: {}]
  %s6 = inlined_call_operand.hbm [shape: f32[128,384], index: 6, kind: input, shape index: {}]
  %s7 = inlined_call_operand.vmem [shape: f32[1,384], index: 7, kind: input, shape index: {}]
  %s8 = inlined_call_operand.vmem [shape: f32[1,128], index: 8, kind: input, shape index: {}]
  %s9 = inlined_call_operand.hbm [shape: f32[128,128], index: 9, kind: input, shape index: {}]
  %s10 = inlined_call_operand.vmem [shape: f32[1,128], index: 10, kind: input, shape index: {}]
  %s11 = inlined_call_operand.vmem [shape: f32[64,128], index: 11, kind: output, shape index: {0}]
  %s12 = inlined_call_operand.vmem [shape: f32[2,8,128], index: 12, kind: output, shape index: {1}]
  %13 = xla_tuple %s11, %s12
  %s14 = sld [smem:[#allocation0]]
  $region82: #{basic_gru_forward.1} parent=0
    _
  %s16 = ssub.s32 1, %s14
  %s17 = scalar_select 0, %s16, %s14
  $region1: #{basic_gru_forward.1} parent=0
    #allocation5 [shape = 'u8[196608]{0}', space=vmem, size = 0x30000, scoped, tag = 'input window, operand 1, single buffered']
    #allocation6 [shape = 's32[1]{0}', space=sflag, size = 0x4, scoped, tag = 'scoped memory for basic_gru_forward.1']
    #allocation7 [shape = 'u8[196608]{0}', space=vmem, size = 0x30000, scoped, tag = 'input window, operand 2, single buffered']
    #allocation8 [shape = 's32[1]{0}', space=sflag, size = 0x4, scoped, tag = 'scoped memory for basic_gru_forward.1']
    #allocation9 [shape = 'u8[196608]{0}', space=vmem, size = 0x30000, scoped, tag = 'input window, operand 5, single buffered']
    #allocation10 [shape = 'u8[196608]{0}', space=vmem, size = 0x30000, scoped, tag = 'input window, operand 6, single buffered']
    #allocation11 [shape = 's32[1]{0}', space=sflag, size = 0x4, scoped, tag = 'scoped memory for basic_gru_forward.1']
    #allocation12 [shape = 'u8[65536]{0}', space=vmem, size = 0x10000, scoped, tag = 'input window, operand 9, single buffered']
    %18 = vsyncpa [#allocation6], 0
    %19 = vsyncpa [#allocation8], 0
    %20 = vsyncpa [#allocation11], 0
    // Predicated region
    $region2: #{basic_gru_forward.1} parent=1 // pred_check
      _
    $region3: #{basic_gru_forward.1} parent=1 // pred_check_branch
      %22 = sbr.rel (0) target = $region5
    $region4: #{basic_gru_forward.1} parent=1 // pred_region
      _
    $region5: #{basic_gru_forward.1} parent=1 // pred_fallthru
      _
    // Predicated region
    $region6: #{basic_gru_forward.1} parent=1 // pred_check
      _
    $region7: #{basic_gru_forward.1} parent=1 // pred_check_branch
      %24 = sbr.rel (0) target = $region9
    $region8: #{basic_gru_forward.1} parent=1 // pred_region
      %26 = vsyncadd [#allocation6], 0
      %s27 = sshll.u32 %s1, 4
      %s28 = int_to_ptr.hbm [resolvable:$true] %s27
      %s29 = sshll.u32 [#allocation5], 4
      %s30 = int_to_ptr.vmem [resolvable:$true] %s29
      %35 = dma.hbm_to_vmem [thread:$0]  %s28, 6144, %s30, [#allocation6], 384, 384, 24
    $region9: #{basic_gru_forward.1} parent=1 // pred_fallthru
      _
    // Predicated region
    $region10: #{basic_gru_forward.1} parent=1 // pred_check
      _
    $region11: #{basic_gru_forward.1} parent=1 // pred_check_branch
      %37 = sbr.rel (0) target = $region13
    $region12: #{basic_gru_forward.1} parent=1 // pred_region
      %39 = vsyncadd [#allocation8], 0
      %s40 = sshll.u32 %s2, 4
      %s41 = int_to_ptr.hbm [resolvable:$true] %s40
      %s42 = sshll.u32 [#allocation7], 4
      %s43 = int_to_ptr.vmem [resolvable:$true] %s42
      %48 = dma.hbm_to_vmem [thread:$0]  %s41, 6144, %s43, [#allocation8], 384, 384, 24
    $region13: #{basic_gru_forward.1} parent=1 // pred_fallthru
      _
    // Predicated region
    $region14: #{basic_gru_forward.1} parent=1 // pred_check
      _
    $region15: #{basic_gru_forward.1} parent=1 // pred_check_branch
      %50 = sbr.rel (0) target = $region17
    $region16: #{basic_gru_forward.1} parent=1 // pred_region
      _
    $region17: #{basic_gru_forward.1} parent=1 // pred_fallthru
      _
    // Predicated region
    $region18: #{basic_gru_forward.1} parent=1 // pred_check
      _
    $region19: #{basic_gru_forward.1} parent=1 // pred_check_branch
      %52 = sbr.rel (0) target = $region21
    $region20: #{basic_gru_forward.1} parent=1 // pred_region
      _
    $region21: #{basic_gru_forward.1} parent=1 // pred_fallthru
      _
    // Predicated region
    $region22: #{basic_gru_forward.1} parent=1 // pred_check
      _
    $region23: #{basic_gru_forward.1} parent=1 // pred_check_branch
      %54 = sbr.rel (0) target = $region25
    $region24: #{basic_gru_forward.1} parent=1 // pred_region
      %56 = vsyncadd [#allocation8], 0
      %s57 = sshll.u32 %s5, 4
      %s58 = int_to_ptr.hbm [resolvable:$true] %s57
      %s59 = sshll.u32 [#allocation9], 4
      %s60 = int_to_ptr.vmem [resolvable:$true] %s59
      %65 = dma.hbm_to_vmem [thread:$0]  %s58, 6144, %s60, [#allocation8], 384, 384, 24
    $region25: #{basic_gru_forward.1} parent=1 // pred_fallthru
      _
    // Predicated region
    $region26: #{basic_gru_forward.1} parent=1 // pred_check
      _
    $region27: #{basic_gru_forward.1} parent=1 // pred_check_branch
      %67 = sbr.rel (0) target = $region29
    $region28: #{basic_gru_forward.1} parent=1 // pred_region
      %69 = vsyncadd [#allocation11], 0
      %s70 = sshll.u32 %s6, 4
      %s71 = int_to_ptr.hbm [resolvable:$true] %s70
      %s72 = sshll.u32 [#allocation10], 4
      %s73 = int_to_ptr.vmem [resolvable:$true] %s72
      %78 = dma.hbm_to_vmem [thread:$0]  %s71, 6144, %s73, [#allocation11], 384, 384, 24
    $region29: #{basic_gru_forward.1} parent=1 // pred_fallthru
      _
    // Predicated region
    $region30: #{basic_gru_forward.1} parent=1 // pred_check
      _
    $region31: #{basic_gru_forward.1} parent=1 // pred_check_branch
      %80 = sbr.rel (0) target = $region33
    $region32: #{basic_gru_forward.1} parent=1 // pred_region
      _
    $region33: #{basic_gru_forward.1} parent=1 // pred_fallthru
      _
    // Predicated region
    $region34: #{basic_gru_forward.1} parent=1 // pred_check
      _
    $region35: #{basic_gru_forward.1} parent=1 // pred_check_branch
      %82 = sbr.rel (0) target = $region37
    $region36: #{basic_gru_forward.1} parent=1 // pred_region
      _
    $region37: #{basic_gru_forward.1} parent=1 // pred_fallthru
      _
    // Predicated region
    $region38: #{basic_gru_forward.1} parent=1 // pred_check
      _
    $region39: #{basic_gru_forward.1} parent=1 // pred_check_branch
      %84 = sbr.rel (0) target = $region41
    $region40: #{basic_gru_forward.1} parent=1 // pred_region
      %86 = vsyncadd [#allocation11], 0
      %s87 = sshll.u32 %s9, 4
      %s88 = int_to_ptr.hbm [resolvable:$true] %s87
      %s89 = sshll.u32 [#allocation12], 4
      %s90 = int_to_ptr.vmem [resolvable:$true] %s89
      %95 = dma.hbm_to_vmem [thread:$0]  %s88, 2048, %s90, [#allocation11], 128, 128, 8
    $region41: #{basic_gru_forward.1} parent=1 // pred_fallthru
      _
    // Predicated region
    $region42: #{basic_gru_forward.1} parent=1 // pred_check
      _
    $region43: #{basic_gru_forward.1} parent=1 // pred_check_branch
      %97 = sbr.rel (0) target = $region45
    $region44: #{basic_gru_forward.1} parent=1 // pred_region
      _
    $region45: #{basic_gru_forward.1} parent=1 // pred_fallthru
      _
    // Predicated region
    $region46: #{basic_gru_forward.1} parent=1 // pred_check
      _
    $region47: #{basic_gru_forward.1} parent=1 // pred_check_branch
      %99 = sbr.rel (0) target = $region49
    $region48: #{basic_gru_forward.1} parent=1 // pred_region
      %101 = dma.done [#allocation6], 6144
    $region49: #{basic_gru_forward.1} parent=1 // pred_fallthru
      _
    // Predicated region
    $region50: #{basic_gru_forward.1} parent=1 // pred_check
      _
    $region51: #{basic_gru_forward.1} parent=1 // pred_check_branch
      %103 = sbr.rel (0) target = $region53
    $region52: #{basic_gru_forward.1} parent=1 // pred_region
      %105 = dma.done [#allocation8], 6144
    $region53: #{basic_gru_forward.1} parent=1 // pred_fallthru
      _
    // Predicated region
    $region54: #{basic_gru_forward.1} parent=1 // pred_check
      _
    $region55: #{basic_gru_forward.1} parent=1 // pred_check_branch
      %107 = sbr.rel (0) target = $region57
    $region56: #{basic_gru_forward.1} parent=1 // pred_region
      %109 = dma.done [#allocation8], 6144
    $region57: #{basic_gru_forward.1} parent=1 // pred_fallthru
      _
    // Predicated region
    $region58: #{basic_gru_forward.1} parent=1 // pred_check
      _
    $region59: #{basic_gru_forward.1} parent=1 // pred_check_branch
      %111 = sbr.rel (0) target = $region61
    $region60: #{basic_gru_forward.1} parent=1 // pred_region
      %113 = dma.done [#allocation11], 6144
    $region61: #{basic_gru_forward.1} parent=1 // pred_fallthru
      _
    // Predicated region
    $region62: #{basic_gru_forward.1} parent=1 // pred_check
      _
    $region63: #{basic_gru_forward.1} parent=1 // pred_check_branch
      %115 = sbr.rel (0) target = $region65
    $region64: #{basic_gru_forward.1} parent=1 // pred_region
      %117 = dma.done [#allocation11], 2048
    $region65: #{basic_gru_forward.1} parent=1 // pred_fallthru
      _
    %v118 = vld [vmem:[%s0] sm:$0xff]
    %v119 = vld [vmem:[%s0 + $0x8] sm:$0xff]
    %v120 = vld [vmem:[%s0 + $0x10] sm:$0xff]
    %v121 = vld [vmem:[%s0 + $0x18] sm:$0xff]
    %v122 = vld [vmem:[%s0 + $0x20] sm:$0xff]
    %v123 = vld [vmem:[%s0 + $0x28] sm:$0xff]
    %v124 = vld [vmem:[%s0 + $0x30] sm:$0xff]
    %v125 = vld [vmem:[%s0 + $0x38] sm:$0xff]
    %v126 = vld [vmem:[#allocation5] sm:$0xff]
    %v127 = vld [vmem:[#allocation5 + $0x8] sm:$0xff]
    %v128 = vld [vmem:[#allocation5 + $0x10] sm:$0xff]
    %v129 = vld [vmem:[#allocation5 + $0x18] sm:$0xff]
    %v130 = vld [vmem:[#allocation5 + $0x20] sm:$0xff]
    %v131 = vld [vmem:[#allocation5 + $0x28] sm:$0xff]
    %v132 = vld [vmem:[#allocation5 + $0x30] sm:$0xff]
    %v133 = vld [vmem:[#allocation5 + $0x38] sm:$0xff]
    %v134 = vld [vmem:[#allocation5 + $0x40] sm:$0xff]
    %v135 = vld [vmem:[#allocation5 + $0x48] sm:$0xff]
    %v136 = vld [vmem:[#allocation5 + $0x50] sm:$0xff]
    %v137 = vld [vmem:[#allocation5 + $0x58] sm:$0xff]
    %v138 = vld [vmem:[#allocation5 + $0x60] sm:$0xff]
    %v139 = vld [vmem:[#allocation5 + $0x68] sm:$0xff]
    %v140 = vld [vmem:[#allocation5 + $0x70] sm:$0xff]
    %v141 = vld [vmem:[#allocation5 + $0x78] sm:$0xff]
    %v142 = vld [vmem:[#allocation5 + $0x80] sm:$0xff]
    %v143 = vld [vmem:[#allocation5 + $0x88] sm:$0xff]
    %v144 = vld [vmem:[#allocation5 + $0x90] sm:$0xff]
    %v145 = vld [vmem:[#allocation5 + $0x98] sm:$0xff]
    %v146 = vld [vmem:[#allocation5 + $0xa0] sm:$0xff]
    %v147 = vld [vmem:[#allocation5 + $0xa8] sm:$0xff]
    %v148 = vld [vmem:[#allocation5 + $0xb0] sm:$0xff]
    %v149 = vld [vmem:[#allocation5 + $0xb8] sm:$0xff]
    %v150 = vld [vmem:[#allocation5 + $0xc0] sm:$0xff]
    %v151 = vld [vmem:[#allocation5 + $0xc8] sm:$0xff]
    %v152 = vld [vmem:[#allocation5 + $0xd0] sm:$0xff]
    %v153 = vld [vmem:[#allocation5 + $0xd8] sm:$0xff]
    %v154 = vld [vmem:[#allocation5 + $0xe0] sm:$0xff]
    %v155 = vld [vmem:[#allocation5 + $0xe8] sm:$0xff]
    %v156 = vld [vmem:[#allocation5 + $0xf0] sm:$0xff]
    %v157 = vld [vmem:[#allocation5 + $0xf8] sm:$0xff]
    %v158 = vld [vmem:[#allocation5 + $0x100] sm:$0xff]
    %v159 = vld [vmem:[#allocation5 + $0x108] sm:$0xff]
    %v160 = vld [vmem:[#allocation5 + $0x110] sm:$0xff]
    %v161 = vld [vmem:[#allocation5 + $0x118] sm:$0xff]
    %v162 = vld [vmem:[#allocation5 + $0x120] sm:$0xff]
    %v163 = vld [vmem:[#allocation5 + $0x128] sm:$0xff]
    %v164 = vld [vmem:[#allocation5 + $0x130] sm:$0xff]
    %v165 = vld [vmem:[#allocation5 + $0x138] sm:$0xff]
    %v166 = vld [vmem:[#allocation5 + $0x140] sm:$0xff]
    %v167 = vld [vmem:[#allocation5 + $0x148] sm:$0xff]
    %v168 = vld [vmem:[#allocation5 + $0x150] sm:$0xff]
    %v169 = vld [vmem:[#allocation5 + $0x158] sm:$0xff]
    %v170 = vld [vmem:[#allocation5 + $0x160] sm:$0xff]
    %v171 = vld [vmem:[#allocation5 + $0x168] sm:$0xff]
    %v172 = vld [vmem:[#allocation5 + $0x170] sm:$0xff]
    %v173 = vld [vmem:[#allocation5 + $0x178] sm:$0xff]
    %v174 = vld [vmem:[%s3] sm:$0x7]
    %v176 = vperm.slane %v174, 0
    %v177 = vperm.slane %v174, 1
    %v178 = vperm.slane %v174, 2
    %182 = vmatpush.msra.mxu0 %v171
    %183 = vmatpush.msra.mxu0 %v168
    %184 = vmatpush.msra.mxu0 %v165
    %185 = vmatpush.msra.mxu0 %v162
    %186 = vmatpush.msra.mxu0 %v159
    %187 = vmatpush.msra.mxu0 %v156
    %188 = vmatpush.msra.mxu0 %v153
    %189 = vmatpush.msra.mxu0 %v150
    %190 = vmatpush.msra.mxu0 %v147
    %191 = vmatpush.msra.mxu0 %v144
    %192 = vmatpush.msra.mxu0 %v141
    %193 = vmatpush.msra.mxu0 %v138
    %194 = vmatpush.msra.mxu0 %v135
    %195 = vmatpush.msra.mxu0 %v132
    %196 = vmatpush.msra.mxu0 %v129
    %197 = vmatpush.msra.mxu0 %v126
    %198 = vmatmul.f32.gmra.mxu0 %v118
    %v199 = vpop.f32.mrf.mxu0
    %v200 = vadd.f32 %v176, %v199
    %201 = vmatmul.f32.gmra.mxu0 %v119
    %v202 = vpop.f32.mrf.mxu0
    %v203 = vadd.f32 %v176, %v202
    %204 = vmatmul.f32.gmra.mxu0 %v120
    %v205 = vpop.f32.mrf.mxu0
    %v206 = vadd.f32 %v176, %v205
    %207 = vmatmul.f32.gmra.mxu0 %v121
    %v208 = vpop.f32.mrf.mxu0
    %v209 = vadd.f32 %v176, %v208
    %210 = vmatmul.f32.gmra.mxu0 %v122
    %v211 = vpop.f32.mrf.mxu0
    %v212 = vadd.f32 %v176, %v211
    %213 = vmatmul.f32.gmra.mxu0 %v123
    %v214 = vpop.f32.mrf.mxu0
    %v215 = vadd.f32 %v176, %v214
    %216 = vmatmul.f32.gmra.mxu0 %v124
    %v217 = vpop.f32.mrf.mxu0
    %v218 = vadd.f32 %v176, %v217
    %219 = vmatmul.f32.gmra.mxu0 %v125
    %v220 = vpop.f32.mrf.mxu0
    %v221 = vadd.f32 %v176, %v220
    %222 = vdwg.mxu0
    %223 = vmatpush.msra.mxu0 %v172
    %224 = vmatpush.msra.mxu0 %v169
    %225 = vmatpush.msra.mxu0 %v166
    %226 = vmatpush.msra.mxu0 %v163
    %227 = vmatpush.msra.mxu0 %v160
    %228 = vmatpush.msra.mxu0 %v157
    %229 = vmatpush.msra.mxu0 %v154
    %230 = vmatpush.msra.mxu0 %v151
    %231 = vmatpush.msra.mxu0 %v148
    %232 = vmatpush.msra.mxu0 %v145
    %233 = vmatpush.msra.mxu0 %v142
    %234 = vmatpush.msra.mxu0 %v139
    %235 = vmatpush.msra.mxu0 %v136
    %236 = vmatpush.msra.mxu0 %v133
    %237 = vmatpush.msra.mxu0 %v130
    %238 = vmatpush.msra.mxu0 %v127
    %239 = vmatmul.f32.gmra.mxu0 %v118
    %v240 = vpop.f32.mrf.mxu0
    %v241 = vadd.f32 %v177, %v240
    %242 = vmatmul.f32.gmra.mxu0 %v119
    %v243 = vpop.f32.mrf.mxu0
    %v244 = vadd.f32 %v177, %v243
    %245 = vmatmul.f32.gmra.mxu0 %v120
    %v246 = vpop.f32.mrf.mxu0
    %v247 = vadd.f32 %v177, %v246
    %248 = vmatmul.f32.gmra.mxu0 %v121
    %v249 = vpop.f32.mrf.mxu0
    %v250 = vadd.f32 %v177, %v249
    %251 = vmatmul.f32.gmra.mxu0 %v122
    %v252 = vpop.f32.mrf.mxu0
    %v253 = vadd.f32 %v177, %v252
    %254 = vmatmul.f32.gmra.mxu0 %v123
    %v255 = vpop.f32.mrf.mxu0
    %v256 = vadd.f32 %v177, %v255
    %257 = vmatmul.f32.gmra.mxu0 %v124
    %v258 = vpop.f32.mrf.mxu0
    %v259 = vadd.f32 %v177, %v258
    %260 = vmatmul.f32.gmra.mxu0 %v125
    %v261 = vpop.f32.mrf.mxu0
    %v262 = vadd.f32 %v177, %v261
    %263 = vdwg.mxu0
    %264 = vmatpush.msra.mxu0 %v173
    %265 = vmatpush.msra.mxu0 %v170
    %266 = vmatpush.msra.mxu0 %v167
    %267 = vmatpush.msra.mxu0 %v164
    %268 = vmatpush.msra.mxu0 %v161
    %269 = vmatpush.msra.mxu0 %v158
    %270 = vmatpush.msra.mxu0 %v155
    %271 = vmatpush.msra.mxu0 %v152
    %272 = vmatpush.msra.mxu0 %v149
    %273 = vmatpush.msra.mxu0 %v146
    %274 = vmatpush.msra.mxu0 %v143
    %275 = vmatpush.msra.mxu0 %v140
    %276 = vmatpush.msra.mxu0 %v137
    %277 = vmatpush.msra.mxu0 %v134
    %278 = vmatpush.msra.mxu0 %v131
    %279 = vmatpush.msra.mxu0 %v128
    %280 = vmatmul.f32.gmra.mxu0 %v118
    %v281 = vpop.f32.mrf.mxu0
    %v282 = vadd.f32 %v178, %v281
    %283 = vmatmul.f32.gmra.mxu0 %v119
    %v284 = vpop.f32.mrf.mxu0
    %v285 = vadd.f32 %v178, %v284
    %286 = vmatmul.f32.gmra.mxu0 %v120
    %v287 = vpop.f32.mrf.mxu0
    %v288 = vadd.f32 %v178, %v287
    %289 = vmatmul.f32.gmra.mxu0 %v121
    %v290 = vpop.f32.mrf.mxu0
    %v291 = vadd.f32 %v178, %v290
    %292 = vmatmul.f32.gmra.mxu0 %v122
    %v293 = vpop.f32.mrf.mxu0
    %v294 = vadd.f32 %v178, %v293
    %295 = vmatmul.f32.gmra.mxu0 %v123
    %v296 = vpop.f32.mrf.mxu0
    %v297 = vadd.f32 %v178, %v296
    %298 = vmatmul.f32.gmra.mxu0 %v124
    %v299 = vpop.f32.mrf.mxu0
    %v300 = vadd.f32 %v178, %v299
    %301 = vmatmul.f32.gmra.mxu0 %v125
    %v302 = vpop.f32.mrf.mxu0
    %v303 = vadd.f32 %v178, %v302
    %304 = vdwg.mxu0
    %305 = vst [vmem:[#allocation2] sm:$0xff] %v200
    %306 = vst [vmem:[#allocation2 + $0x8] sm:$0xff] %v241
    %307 = vst [vmem:[#allocation2 + $0x10] sm:$0xff] %v282
    %308 = vst [vmem:[#allocation2 + $0x18] sm:$0xff] %v203
    %309 = vst [vmem:[#allocation2 + $0x20] sm:$0xff] %v244
    %310 = vst [vmem:[#allocation2 + $0x28] sm:$0xff] %v285
    %311 = vst [vmem:[#allocation2 + $0x30] sm:$0xff] %v206
    %312 = vst [vmem:[#allocation2 + $0x38] sm:$0xff] %v247
    %313 = vst [vmem:[#allocation2 + $0x40] sm:$0xff] %v288
    %314 = vst [vmem:[#allocation2 + $0x48] sm:$0xff] %v209
    %315 = vst [vmem:[#allocation2 + $0x50] sm:$0xff] %v250
    %316 = vst [vmem:[#allocation2 + $0x58] sm:$0xff] %v291
    %317 = vst [vmem:[#allocation2 + $0x60] sm:$0xff] %v212
    %318 = vst [vmem:[#allocation2 + $0x68] sm:$0xff] %v253
    %319 = vst [vmem:[#allocation2 + $0x70] sm:$0xff] %v294
    %320 = vst [vmem:[#allocation2 + $0x78] sm:$0xff] %v215
    %321 = vst [vmem:[#allocation2 + $0x80] sm:$0xff] %v256
    %322 = vst [vmem:[#allocation2 + $0x88] sm:$0xff] %v297
    %323 = vst [vmem:[#allocation2 + $0x90] sm:$0xff] %v218
    %324 = vst [vmem:[#allocation2 + $0x98] sm:$0xff] %v259
    %325 = vst [vmem:[#allocation2 + $0xa0] sm:$0xff] %v300
    %326 = vst [vmem:[#allocation2 + $0xa8] sm:$0xff] %v221
    %327 = vst [vmem:[#allocation2 + $0xb0] sm:$0xff] %v262
    %328 = vst [vmem:[#allocation2 + $0xb8] sm:$0xff] %v303
    %v329 = vld [vmem:[#allocation7] sm:$0xff]
    %v330 = vld [vmem:[#allocation7 + $0x8] sm:$0xff]
    %v331 = vld [vmem:[#allocation7 + $0x10] sm:$0xff]
    %v332 = vld [vmem:[#allocation7 + $0x18] sm:$0xff]
    %v333 = vld [vmem:[#allocation7 + $0x20] sm:$0xff]
    %v334 = vld [vmem:[#allocation7 + $0x28] sm:$0xff]
    %v335 = vld [vmem:[#allocation7 + $0x30] sm:$0xff]
    %v336 = vld [vmem:[#allocation7 + $0x38] sm:$0xff]
    %v337 = vld [vmem:[#allocation7 + $0x40] sm:$0xff]
    %v338 = vld [vmem:[#allocation7 + $0x48] sm:$0xff]
    %v339 = vld [vmem:[#allocation7 + $0x50] sm:$0xff]
    %v340 = vld [vmem:[#allocation7 + $0x58] sm:$0xff]
    %v341 = vld [vmem:[#allocation7 + $0x60] sm:$0xff]
    %v342 = vld [vmem:[#allocation7 + $0x68] sm:$0xff]
    %v343 = vld [vmem:[#allocation7 + $0x70] sm:$0xff]
    %v344 = vld [vmem:[#allocation7 + $0x78] sm:$0xff]
    %v345 = vld [vmem:[#allocation7 + $0x80] sm:$0xff]
    %v346 = vld [vmem:[#allocation7 + $0x88] sm:$0xff]
    %v347 = vld [vmem:[#allocation7 + $0x90] sm:$0xff]
    %v348 = vld [vmem:[#allocation7 + $0x98] sm:$0xff]
    %v349 = vld [vmem:[#allocation7 + $0xa0] sm:$0xff]
    %v350 = vld [vmem:[#allocation7 + $0xa8] sm:$0xff]
    %v351 = vld [vmem:[#allocation7 + $0xb0] sm:$0xff]
    %v352 = vld [vmem:[#allocation7 + $0xb8] sm:$0xff]
    %v353 = vld [vmem:[#allocation7 + $0xc0] sm:$0xff]
    %v354 = vld [vmem:[#allocation7 + $0xc8] sm:$0xff]
    %v355 = vld [vmem:[#allocation7 + $0xd0] sm:$0xff]
    %v356 = vld [vmem:[#allocation7 + $0xd8] sm:$0xff]
    %v357 = vld [vmem:[#allocation7 + $0xe0] sm:$0xff]
    %v358 = vld [vmem:[#allocation7 + $0xe8] sm:$0xff]
    %v359 = vld [vmem:[#allocation7 + $0xf0] sm:$0xff]
    %v360 = vld [vmem:[#allocation7 + $0xf8] sm:$0xff]
    %v361 = vld [vmem:[#allocation7 + $0x100] sm:$0xff]
    %v362 = vld [vmem:[#allocation7 + $0x108] sm:$0xff]
    %v363 = vld [vmem:[#allocation7 + $0x110] sm:$0xff]
    %v364 = vld [vmem:[#allocation7 + $0x118] sm:$0xff]
    %v365 = vld [vmem:[#allocation7 + $0x120] sm:$0xff]
    %v366 = vld [vmem:[#allocation7 + $0x128] sm:$0xff]
    %v367 = vld [vmem:[#allocation7 + $0x130] sm:$0xff]
    %v368 = vld [vmem:[#allocation7 + $0x138] sm:$0xff]
    %v369 = vld [vmem:[#allocation7 + $0x140] sm:$0xff]
    %v370 = vld [vmem:[#allocation7 + $0x148] sm:$0xff]
    %v371 = vld [vmem:[#allocation7 + $0x150] sm:$0xff]
    %v372 = vld [vmem:[#allocation7 + $0x158] sm:$0xff]
    %v373 = vld [vmem:[#allocation7 + $0x160] sm:$0xff]
    %v374 = vld [vmem:[#allocation7 + $0x168] sm:$0xff]
    %v375 = vld [vmem:[#allocation7 + $0x170] sm:$0xff]
    %v376 = vld [vmem:[#allocation7 + $0x178] sm:$0xff]
    %v377 = vld [vmem:[%s4] sm:$0x1]
    %v379 = vperm.slane %v377, 0
    %s381 = smul.u32 0, 3
    %s382 = smul.addr %s381, 8
    %s383 = scalar_lea.vmem [#allocation2], %s382
    %v384 = vld [vmem:[%s383] sm:$0xff]
    %v385 = vld [vmem:[%s383 + $0x8] sm:$0xff]
    %v386 = vld [vmem:[%s383 + $0x10] sm:$0xff]
    %387 = vmatpush.msra.mxu0 %v374
    %388 = vmatpush.msra.mxu0 %v371
    %389 = vmatpush.msra.mxu0 %v368
    %390 = vmatpush.msra.mxu0 %v365
    %391 = vmatpush.msra.mxu0 %v362
    %392 = vmatpush.msra.mxu0 %v359
    %393 = vmatpush.msra.mxu0 %v356
    %394 = vmatpush.msra.mxu0 %v353
    %395 = vmatpush.msra.mxu0 %v350
    %396 = vmatpush.msra.mxu0 %v347
    %397 = vmatpush.msra.mxu0 %v344
    %398 = vmatpush.msra.mxu0 %v341
    %399 = vmatpush.msra.mxu0 %v338
    %400 = vmatpush.msra.mxu0 %v335
    %401 = vmatpush.msra.mxu0 %v332
    %402 = vmatpush.msra.mxu0 %v329
    %403 = vmatmul.f32.gmra.mxu0 0.0
    %v404 = vpop.f32.mrf.mxu0
    %v405 = vadd.f32 0.0, %v404
    %406 = vdwg.mxu0
    %407 = vmatpush.msra.mxu0 %v375
    %408 = vmatpush.msra.mxu0 %v372
    %409 = vmatpush.msra.mxu0 %v369
    %410 = vmatpush.msra.mxu0 %v366
    %411 = vmatpush.msra.mxu0 %v363
    %412 = vmatpush.msra.mxu0 %v360
    %413 = vmatpush.msra.mxu0 %v357
    %414 = vmatpush.msra.mxu0 %v354
    %415 = vmatpush.msra.mxu0 %v351
    %416 = vmatpush.msra.mxu0 %v348
    %417 = vmatpush.msra.mxu0 %v345
    %418 = vmatpush.msra.mxu0 %v342
    %419 = vmatpush.msra.mxu0 %v339
    %420 = vmatpush.msra.mxu0 %v336
    %421 = vmatpush.msra.mxu0 %v333
    %422 = vmatpush.msra.mxu0 %v330
    %423 = vmatmul.f32.gmra.mxu0 0.0
    %v424 = vpop.f32.mrf.mxu0
    %v425 = vadd.f32 0.0, %v424
    %426 = vdwg.mxu0
    %427 = vmatpush.msra.mxu0 %v376
    %428 = vmatpush.msra.mxu0 %v373
    %429 = vmatpush.msra.mxu0 %v370
    %430 = vmatpush.msra.mxu0 %v367
    %431 = vmatpush.msra.mxu0 %v364
    %432 = vmatpush.msra.mxu0 %v361
    %433 = vmatpush.msra.mxu0 %v358
    %434 = vmatpush.msra.mxu0 %v355
    %435 = vmatpush.msra.mxu0 %v352
    %436 = vmatpush.msra.mxu0 %v349
    %437 = vmatpush.msra.mxu0 %v346
    %438 = vmatpush.msra.mxu0 %v343
    %439 = vmatpush.msra.mxu0 %v340
    %440 = vmatpush.msra.mxu0 %v337
    %441 = vmatpush.msra.mxu0 %v334
    %442 = vmatpush.msra.mxu0 %v331
    %443 = vmatmul.f32.gmra.mxu0 0.0
    %v444 = vpop.f32.mrf.mxu0
    %v445 = vadd.f32 0.0, %v444
    %446 = vdwg.mxu0
    %v447 = vadd.f32 %v384, %v405
    %v448 = vxor.u32 %v447, 2147483648
    %v449 = vmul.f32 %v448, 1.442695
    %v450 = vpow.pop %v449
    %v451 = vadd.f32 %v450, 1.0
    %v452 = vrcp.pop %v451
    %v453 = vmul.f32 %v451, %v452
    %v454 = vsub.f32 1.0, %v453
    %v455 = vmul.f32 %v452, %v454
    %v456 = vadd.f32 %v452, %v455
    %vm457 = vweird.f32 %v451
    %vm458 = vweird.f32 %v452
    %vm459 = vmor %vm457, %vm458
    %v460 = vsel %vm459, %v452, %v456
    %v461 = vand.u32 2147483647, %v451
    %vm462 = vcmp.eq.f32.partialorder %v461, 8.507059e+37
    %v463 = vand.u32 %v451, 2147483648
    %v464 = vor.u32 1.1754944e-38, %v463
    %v465 = vsel %vm462, %v464, %v460
    %v466 = vmul.f32 1.0, %v465
    %v467 = vadd.f32 %v385, %v425
    %v468 = vxor.u32 %v467, 2147483648
    %v469 = vmul.f32 %v468, 1.442695
    %v470 = vpow.pop %v469
    %v471 = vadd.f32 %v470, 1.0
    %v472 = vrcp.pop %v471
    %v473 = vmul.f32 %v471, %v472
    %v474 = vsub.f32 1.0, %v473
    %v475 = vmul.f32 %v472, %v474
    %v476 = vadd.f32 %v472, %v475
    %vm477 = vweird.f32 %v471
    %vm478 = vweird.f32 %v472
    %vm479 = vmor %vm477, %vm478
    %v480 = vsel %vm479, %v472, %v476
    %v481 = vand.u32 2147483647, %v471
    %vm482 = vcmp.eq.f32.partialorder %v481, 8.507059e+37
    %v483 = vand.u32 %v471, 2147483648
    %v484 = vor.u32 1.1754944e-38, %v483
    %v485 = vsel %vm482, %v484, %v480
    %v486 = vmul.f32 1.0, %v485
    %v487 = vadd.f32 %v445, %v379
    %v488 = vmul.f32 %v466, %v487
    %v489 = vadd.f32 %v386, %v488
    %v490 = vtanh.pop %v489
    %v491 = vsub.f32 1.0, %v486
    %v492 = vmul.f32 %v491, %v490
    %v493 = vmul.f32 %v486, 0.0
    %v494 = vadd.f32 %v492, %v493
    %495 = vst [vmem:[#allocation3] sm:$0xff] %v494
    %s496 = smul.u32 1, 3
    %s497 = smul.addr %s496, 8
    %s498 = scalar_lea.vmem [#allocation2], %s497
    %v499 = vld [vmem:[%s498] sm:$0xff]
    %v500 = vld [vmem:[%s498 + $0x8] sm:$0xff]
    %v501 = vld [vmem:[%s498 + $0x10] sm:$0xff]
    %502 = vmatpush.msra.mxu0 %v374
    %503 = vmatpush.msra.mxu0 %v371
    %504 = vmatpush.msra.mxu0 %v368
    %505 = vmatpush.msra.mxu0 %v365
    %506 = vmatpush.msra.mxu0 %v362
    %507 = vmatpush.msra.mxu0 %v359
    %508 = vmatpush.msra.mxu0 %v356
    %509 = vmatpush.msra.mxu0 %v353
    %510 = vmatpush.msra.mxu0 %v350
    %511 = vmatpush.msra.mxu0 %v347
    %512 = vmatpush.msra.mxu0 %v344
    %513 = vmatpush.msra.mxu0 %v341
    %514 = vmatpush.msra.mxu0 %v338
    %515 = vmatpush.msra.mxu0 %v335
    %516 = vmatpush.msra.mxu0 %v332
    %517 = vmatpush.msra.mxu0 %v329
    %518 = vmatmul.f32.gmra.mxu0 %v494
    %v519 = vpop.f32.mrf.mxu0
    %v520 = vadd.f32 0.0, %v519
    %521 = vdwg.mxu0
    %522 = vmatpush.msra.mxu0 %v375
    %523 = vmatpush.msra.mxu0 %v372
    %524 = vmatpush.msra.mxu0 %v369
    %525 = vmatpush.msra.mxu0 %v366
    %526 = vmatpush.msra.mxu0 %v363
    %527 = vmatpush.msra.mxu0 %v360
    %528 = vmatpush.msra.mxu0 %v357
    %529 = vmatpush.msra.mxu0 %v354
    %530 = vmatpush.msra.mxu0 %v351
    %531 = vmatpush.msra.mxu0 %v348
    %532 = vmatpush.msra.mxu0 %v345
    %533 = vmatpush.msra.mxu0 %v342
    %534 = vmatpush.msra.mxu0 %v339
    %535 = vmatpush.msra.mxu0 %v336
    %536 = vmatpush.msra.mxu0 %v333
    %537 = vmatpush.msra.mxu0 %v330
    %538 = vmatmul.f32.gmra.mxu0 %v494
    %v539 = vpop.f32.mrf.mxu0
    %v540 = vadd.f32 0.0, %v539
    %541 = vdwg.mxu0
    %542 = vmatpush.msra.mxu0 %v376
    %543 = vmatpush.msra.mxu0 %v373
    %544 = vmatpush.msra.mxu0 %v370
    %545 = vmatpush.msra.mxu0 %v367
    %546 = vmatpush.msra.mxu0 %v364
    %547 = vmatpush.msra.mxu0 %v361
    %548 = vmatpush.msra.mxu0 %v358
    %549 = vmatpush.msra.mxu0 %v355
    %550 = vmatpush.msra.mxu0 %v352
    %551 = vmatpush.msra.mxu0 %v349
    %552 = vmatpush.msra.mxu0 %v346
    %553 = vmatpush.msra.mxu0 %v343
    %554 = vmatpush.msra.mxu0 %v340
    %555 = vmatpush.msra.mxu0 %v337
    %556 = vmatpush.msra.mxu0 %v334
    %557 = vmatpush.msra.mxu0 %v331
    %558 = vmatmul.f32.gmra.mxu0 %v494
    %v559 = vpop.f32.mrf.mxu0
    %v560 = vadd.f32 0.0, %v559
    %561 = vdwg.mxu0
    %v562 = vadd.f32 %v499, %v520
    %v563 = vxor.u32 %v562, 2147483648
    %v564 = vmul.f32 %v563, 1.442695
    %v565 = vpow.pop %v564
    %v566 = vadd.f32 %v565, 1.0
    %v567 = vrcp.pop %v566
    %v568 = vmul.f32 %v566, %v567
    %v569 = vsub.f32 1.0, %v568
    %v570 = vmul.f32 %v567, %v569
    %v571 = vadd.f32 %v567, %v570
    %vm572 = vweird.f32 %v566
    %vm573 = vweird.f32 %v567
    %vm574 = vmor %vm572, %vm573
    %v575 = vsel %vm574, %v567, %v571
    %v576 = vand.u32 2147483647, %v566
    %vm577 = vcmp.eq.f32.partialorder %v576, 8.507059e+37
    %v578 = vand.u32 %v566, 2147483648
    %v579 = vor.u32 1.1754944e-38, %v578
    %v580 = vsel %vm577, %v579, %v575
    %v581 = vmul.f32 1.0, %v580
    %v582 = vadd.f32 %v500, %v540
    %v583 = vxor.u32 %v582, 2147483648
    %v584 = vmul.f32 %v583, 1.442695
    %v585 = vpow.pop %v584
    %v586 = vadd.f32 %v585, 1.0
    %v587 = vrcp.pop %v586
    %v588 = vmul.f32 %v586, %v587
    %v589 = vsub.f32 1.0, %v588
    %v590 = vmul.f32 %v587, %v589
    %v591 = vadd.f32 %v587, %v590
    %vm592 = vweird.f32 %v586
    %vm593 = vweird.f32 %v587
    %vm594 = vmor %vm592, %vm593
    %v595 = vsel %vm594, %v587, %v591
    %v596 = vand.u32 2147483647, %v586
    %vm597 = vcmp.eq.f32.partialorder %v596, 8.507059e+37
    %v598 = vand.u32 %v586, 2147483648
    %v599 = vor.u32 1.1754944e-38, %v598
    %v600 = vsel %vm597, %v599, %v595
    %v601 = vmul.f32 1.0, %v600
    %v602 = vadd.f32 %v560, %v379
    %v603 = vmul.f32 %v581, %v602
    %v604 = vadd.f32 %v501, %v603
    %v605 = vtanh.pop %v604
    %v606 = vsub.f32 1.0, %v601
    %v607 = vmul.f32 %v606, %v605
    %v608 = vmul.f32 %v601, %v494
    %v609 = vadd.f32 %v607, %v608
    %s610 = scalar_lea.vmem [#allocation3], 8
    %611 = vst [vmem:[%s610] sm:$0xff] %v609
    %s612 = smul.u32 2, 3
    %s613 = smul.addr %s612, 8
    %s614 = scalar_lea.vmem [#allocation2], %s613
    %v615 = vld [vmem:[%s614] sm:$0xff]
    %v616 = vld [vmem:[%s614 + $0x8] sm:$0xff]
    %v617 = vld [vmem:[%s614 + $0x10] sm:$0xff]
    %618 = vmatpush.msra.mxu0 %v374
    %619 = vmatpush.msra.mxu0 %v371
    %620 = vmatpush.msra.mxu0 %v368
    %621 = vmatpush.msra.mxu0 %v365
    %622 = vmatpush.msra.mxu0 %v362
    %623 = vmatpush.msra.mxu0 %v359
    %624 = vmatpush.msra.mxu0 %v356
    %625 = vmatpush.msra.mxu0 %v353
    %626 = vmatpush.msra.mxu0 %v350
    %627 = vmatpush.msra.mxu0 %v347
    %628 = vmatpush.msra.mxu0 %v344
    %629 = vmatpush.msra.mxu0 %v341
    %630 = vmatpush.msra.mxu0 %v338
    %631 = vmatpush.msra.mxu0 %v335
    %632 = vmatpush.msra.mxu0 %v332
    %633 = vmatpush.msra.mxu0 %v329
    %634 = vmatmul.f32.gmra.mxu0 %v609
    %v635 = vpop.f32.mrf.mxu0
    %v636 = vadd.f32 0.0, %v635
    %637 = vdwg.mxu0
    %638 = vmatpush.msra.mxu0 %v375
    %639 = vmatpush.msra.mxu0 %v372
    %640 = vmatpush.msra.mxu0 %v369
    %641 = vmatpush.msra.mxu0 %v366
    %642 = vmatpush.msra.mxu0 %v363
    %643 = vmatpush.msra.mxu0 %v360
    %644 = vmatpush.msra.mxu0 %v357
    %645 = vmatpush.msra.mxu0 %v354
    %646 = vmatpush.msra.mxu0 %v351
    %647 = vmatpush.msra.mxu0 %v348
    %648 = vmatpush.msra.mxu0 %v345
    %649 = vmatpush.msra.mxu0 %v342
    %650 = vmatpush.msra.mxu0 %v339
    %651 = vmatpush.msra.mxu0 %v336
    %652 = vmatpush.msra.mxu0 %v333
    %653 = vmatpush.msra.mxu0 %v330
    %654 = vmatmul.f32.gmra.mxu0 %v609
    %v655 = vpop.f32.mrf.mxu0
    %v656 = vadd.f32 0.0, %v655
    %657 = vdwg.mxu0
    %658 = vmatpush.msra.mxu0 %v376
    %659 = vmatpush.msra.mxu0 %v373
    %660 = vmatpush.msra.mxu0 %v370
    %661 = vmatpush.msra.mxu0 %v367
    %662 = vmatpush.msra.mxu0 %v364
    %663 = vmatpush.msra.mxu0 %v361
    %664 = vmatpush.msra.mxu0 %v358
    %665 = vmatpush.msra.mxu0 %v355
    %666 = vmatpush.msra.mxu0 %v352
    %667 = vmatpush.msra.mxu0 %v349
    %668 = vmatpush.msra.mxu0 %v346
    %669 = vmatpush.msra.mxu0 %v343
    %670 = vmatpush.msra.mxu0 %v340
    %671 = vmatpush.msra.mxu0 %v337
    %672 = vmatpush.msra.mxu0 %v334
    %673 = vmatpush.msra.mxu0 %v331
    %674 = vmatmul.f32.gmra.mxu0 %v609
    %v675 = vpop.f32.mrf.mxu0
    %v676 = vadd.f32 0.0, %v675
    %677 = vdwg.mxu0
    %v678 = vadd.f32 %v615, %v636
    %v679 = vxor.u32 %v678, 2147483648
    %v680 = vmul.f32 %v679, 1.442695
    %v681 = vpow.pop %v680
    %v682 = vadd.f32 %v681, 1.0
    %v683 = vrcp.pop %v682
    %v684 = vmul.f32 %v682, %v683
    %v685 = vsub.f32 1.0, %v684
    %v686 = vmul.f32 %v683, %v685
    %v687 = vadd.f32 %v683, %v686
    %vm688 = vweird.f32 %v682
    %vm689 = vweird.f32 %v683
    %vm690 = vmor %vm688, %vm689
    %v691 = vsel %vm690, %v683, %v687
    %v692 = vand.u32 2147483647, %v682
    %vm693 = vcmp.eq.f32.partialorder %v692, 8.507059e+37
    %v694 = vand.u32 %v682, 2147483648
    %v695 = vor.u32 1.1754944e-38, %v694
    %v696 = vsel %vm693, %v695, %v691
    %v697 = vmul.f32 1.0, %v696
    %v698 = vadd.f32 %v616, %v656
    %v699 = vxor.u32 %v698, 2147483648
    %v700 = vmul.f32 %v699, 1.442695
    %v701 = vpow.pop %v700
    %v702 = vadd.f32 %v701, 1.0
    %v703 = vrcp.pop %v702
    %v704 = vmul.f32 %v702, %v703
    %v705 = vsub.f32 1.0, %v704
    %v706 = vmul.f32 %v703, %v705
    %v707 = vadd.f32 %v703, %v706
    %vm708 = vweird.f32 %v702
    %vm709 = vweird.f32 %v703
    %vm710 = vmor %vm708, %vm709
    %v711 = vsel %vm710, %v703, %v707
    %v712 = vand.u32 2147483647, %v702
    %vm713 = vcmp.eq.f32.partialorder %v712, 8.507059e+37
    %v714 = vand.u32 %v702, 2147483648
    %v715 = vor.u32 1.1754944e-38, %v714
    %v716 = vsel %vm713, %v715, %v711
    %v717 = vmul.f32 1.0, %v716
    %v718 = vadd.f32 %v676, %v379
    %v719 = vmul.f32 %v697, %v718
    %v720 = vadd.f32 %v617, %v719
    %v721 = vtanh.pop %v720
    %v722 = vsub.f32 1.0, %v717
    %v723 = vmul.f32 %v722, %v721
    %v724 = vmul.f32 %v717, %v609
    %v725 = vadd.f32 %v723, %v724
    %s726 = scalar_lea.vmem [#allocation3], 16
    %727 = vst [vmem:[%s726] sm:$0xff] %v725
    %s728 = smul.u32 3, 3
    %s729 = smul.addr %s728, 8
    %s730 = scalar_lea.vmem [#allocation2], %s729
    %v731 = vld [vmem:[%s730] sm:$0xff]
    %v732 = vld [vmem:[%s730 + $0x8] sm:$0xff]
    %v733 = vld [vmem:[%s730 + $0x10] sm:$0xff]
    %734 = vmatpush.msra.mxu0 %v374
    %735 = vmatpush.msra.mxu0 %v371
    %736 = vmatpush.msra.mxu0 %v368
    %737 = vmatpush.msra.mxu0 %v365
    %738 = vmatpush.msra.mxu0 %v362
    %739 = vmatpush.msra.mxu0 %v359
    %740 = vmatpush.msra.mxu0 %v356
    %741 = vmatpush.msra.mxu0 %v353
    %742 = vmatpush.msra.mxu0 %v350
    %743 = vmatpush.msra.mxu0 %v347
    %744 = vmatpush.msra.mxu0 %v344
    %745 = vmatpush.msra.mxu0 %v341
    %746 = vmatpush.msra.mxu0 %v338
    %747 = vmatpush.msra.mxu0 %v335
    %748 = vmatpush.msra.mxu0 %v332
    %749 = vmatpush.msra.mxu0 %v329
    %750 = vmatmul.f32.gmra.mxu0 %v725
    %v751 = vpop.f32.mrf.mxu0
    %v752 = vadd.f32 0.0, %v751
    %753 = vdwg.mxu0
    %754 = vmatpush.msra.mxu0 %v375
    %755 = vmatpush.msra.mxu0 %v372
    %756 = vmatpush.msra.mxu0 %v369
    %757 = vmatpush.msra.mxu0 %v366
    %758 = vmatpush.msra.mxu0 %v363
    %759 = vmatpush.msra.mxu0 %v360
    %760 = vmatpush.msra.mxu0 %v357
    %761 = vmatpush.msra.mxu0 %v354
    %762 = vmatpush.msra.mxu0 %v351
    %763 = vmatpush.msra.mxu0 %v348
    %764 = vmatpush.msra.mxu0 %v345
    %765 = vmatpush.msra.mxu0 %v342
    %766 = vmatpush.msra.mxu0 %v339
    %767 = vmatpush.msra.mxu0 %v336
    %768 = vmatpush.msra.mxu0 %v333
    %769 = vmatpush.msra.mxu0 %v330
    %770 = vmatmul.f32.gmra.mxu0 %v725
    %v771 = vpop.f32.mrf.mxu0
    %v772 = vadd.f32 0.0, %v771
    %773 = vdwg.mxu0
    %774 = vmatpush.msra.mxu0 %v376
    %775 = vmatpush.msra.mxu0 %v373
    %776 = vmatpush.msra.mxu0 %v370
    %777 = vmatpush.msra.mxu0 %v367
    %778 = vmatpush.msra.mxu0 %v364
    %779 = vmatpush.msra.mxu0 %v361
    %780 = vmatpush.msra.mxu0 %v358
    %781 = vmatpush.msra.mxu0 %v355
    %782 = vmatpush.msra.mxu0 %v352
    %783 = vmatpush.msra.mxu0 %v349
    %784 = vmatpush.msra.mxu0 %v346
    %785 = vmatpush.msra.mxu0 %v343
    %786 = vmatpush.msra.mxu0 %v340
    %787 = vmatpush.msra.mxu0 %v337
    %788 = vmatpush.msra.mxu0 %v334
    %789 = vmatpush.msra.mxu0 %v331
    %790 = vmatmul.f32.gmra.mxu0 %v725
    %v791 = vpop.f32.mrf.mxu0
    %v792 = vadd.f32 0.0, %v791
    %793 = vdwg.mxu0
    %v794 = vadd.f32 %v731, %v752
    %v795 = vxor.u32 %v794, 2147483648
    %v796 = vmul.f32 %v795, 1.442695
    %v797 = vpow.pop %v796
    %v798 = vadd.f32 %v797, 1.0
    %v799 = vrcp.pop %v798
    %v800 = vmul.f32 %v798, %v799
    %v801 = vsub.f32 1.0, %v800
    %v802 = vmul.f32 %v799, %v801
    %v803 = vadd.f32 %v799, %v802
    %vm804 = vweird.f32 %v798
    %vm805 = vweird.f32 %v799
    %vm806 = vmor %vm804, %vm805
    %v807 = vsel %vm806, %v799, %v803
    %v808 = vand.u32 2147483647, %v798
    %vm809 = vcmp.eq.f32.partialorder %v808, 8.507059e+37
    %v810 = vand.u32 %v798, 2147483648
    %v811 = vor.u32 1.1754944e-38, %v810
    %v812 = vsel %vm809, %v811, %v807
    %v813 = vmul.f32 1.0, %v812
    %v814 = vadd.f32 %v732, %v772
    %v815 = vxor.u32 %v814, 2147483648
    %v816 = vmul.f32 %v815, 1.442695
    %v817 = vpow.pop %v816
    %v818 = vadd.f32 %v817, 1.0
    %v819 = vrcp.pop %v818
    %v820 = vmul.f32 %v818, %v819
    %v821 = vsub.f32 1.0, %v820
    %v822 = vmul.f32 %v819, %v821
    %v823 = vadd.f32 %v819, %v822
    %vm824 = vweird.f32 %v818
    %vm825 = vweird.f32 %v819
    %vm826 = vmor %vm824, %vm825
    %v827 = vsel %vm826, %v819, %v823
    %v828 = vand.u32 2147483647, %v818
    %vm829 = vcmp.eq.f32.partialorder %v828, 8.507059e+37
    %v830 = vand.u32 %v818, 2147483648
    %v831 = vor.u32 1.1754944e-38, %v830
    %v832 = vsel %vm829, %v831, %v827
    %v833 = vmul.f32 1.0, %v832
    %v834 = vadd.f32 %v792, %v379
    %v835 = vmul.f32 %v813, %v834
    %v836 = vadd.f32 %v733, %v835
    %v837 = vtanh.pop %v836
    %v838 = vsub.f32 1.0, %v833
    %v839 = vmul.f32 %v838, %v837
    %v840 = vmul.f32 %v833, %v725
    %v841 = vadd.f32 %v839, %v840
    %s842 = scalar_lea.vmem [#allocation3], 24
    %843 = vst [vmem:[%s842] sm:$0xff] %v841
    %s844 = smul.u32 4, 3
    %s845 = smul.addr %s844, 8
    %s846 = scalar_lea.vmem [#allocation2], %s845
    %v847 = vld [vmem:[%s846] sm:$0xff]
    %v848 = vld [vmem:[%s846 + $0x8] sm:$0xff]
    %v849 = vld [vmem:[%s846 + $0x10] sm:$0xff]
    %850 = vmatpush.msra.mxu0 %v374
    %851 = vmatpush.msra.mxu0 %v371
    %852 = vmatpush.msra.mxu0 %v368
    %853 = vmatpush.msra.mxu0 %v365
    %854 = vmatpush.msra.mxu0 %v362
    %855 = vmatpush.msra.mxu0 %v359
    %856 = vmatpush.msra.mxu0 %v356
    %857 = vmatpush.msra.mxu0 %v353
    %858 = vmatpush.msra.mxu0 %v350
    %859 = vmatpush.msra.mxu0 %v347
    %860 = vmatpush.msra.mxu0 %v344
    %861 = vmatpush.msra.mxu0 %v341
    %862 = vmatpush.msra.mxu0 %v338
    %863 = vmatpush.msra.mxu0 %v335
    %864 = vmatpush.msra.mxu0 %v332
    %865 = vmatpush.msra.mxu0 %v329
    %866 = vmatmul.f32.gmra.mxu0 %v841
    %v867 = vpop.f32.mrf.mxu0
    %v868 = vadd.f32 0.0, %v867
    %869 = vdwg.mxu0
    %870 = vmatpush.msra.mxu0 %v375
    %871 = vmatpush.msra.mxu0 %v372
    %872 = vmatpush.msra.mxu0 %v369
    %873 = vmatpush.msra.mxu0 %v366
    %874 = vmatpush.msra.mxu0 %v363
    %875 = vmatpush.msra.mxu0 %v360
    %876 = vmatpush.msra.mxu0 %v357
    %877 = vmatpush.msra.mxu0 %v354
    %878 = vmatpush.msra.mxu0 %v351
    %879 = vmatpush.msra.mxu0 %v348
    %880 = vmatpush.msra.mxu0 %v345
    %881 = vmatpush.msra.mxu0 %v342
    %882 = vmatpush.msra.mxu0 %v339
    %883 = vmatpush.msra.mxu0 %v336
    %884 = vmatpush.msra.mxu0 %v333
    %885 = vmatpush.msra.mxu0 %v330
    %886 = vmatmul.f32.gmra.mxu0 %v841
    %v887 = vpop.f32.mrf.mxu0
    %v888 = vadd.f32 0.0, %v887
    %889 = vdwg.mxu0
    %890 = vmatpush.msra.mxu0 %v376
    %891 = vmatpush.msra.mxu0 %v373
    %892 = vmatpush.msra.mxu0 %v370
    %893 = vmatpush.msra.mxu0 %v367
    %894 = vmatpush.msra.mxu0 %v364
    %895 = vmatpush.msra.mxu0 %v361
    %896 = vmatpush.msra.mxu0 %v358
    %897 = vmatpush.msra.mxu0 %v355
    %898 = vmatpush.msra.mxu0 %v352
    %899 = vmatpush.msra.mxu0 %v349
    %900 = vmatpush.msra.mxu0 %v346
    %901 = vmatpush.msra.mxu0 %v343
    %902 = vmatpush.msra.mxu0 %v340
    %903 = vmatpush.msra.mxu0 %v337
    %904 = vmatpush.msra.mxu0 %v334
    %905 = vmatpush.msra.mxu0 %v331
    %906 = vmatmul.f32.gmra.mxu0 %v841
    %v907 = vpop.f32.mrf.mxu0
    %v908 = vadd.f32 0.0, %v907
    %909 = vdwg.mxu0
    %v910 = vadd.f32 %v847, %v868
    %v911 = vxor.u32 %v910, 2147483648
    %v912 = vmul.f32 %v911, 1.442695
    %v913 = vpow.pop %v912
    %v914 = vadd.f32 %v913, 1.0
    %v915 = vrcp.pop %v914
    %v916 = vmul.f32 %v914, %v915
    %v917 = vsub.f32 1.0, %v916
    %v918 = vmul.f32 %v915, %v917
    %v919 = vadd.f32 %v915, %v918
    %vm920 = vweird.f32 %v914
    %vm921 = vweird.f32 %v915
    %vm922 = vmor %vm920, %vm921
    %v923 = vsel %vm922, %v915, %v919
    %v924 = vand.u32 2147483647, %v914
    %vm925 = vcmp.eq.f32.partialorder %v924, 8.507059e+37
    %v926 = vand.u32 %v914, 2147483648
    %v927 = vor.u32 1.1754944e-38, %v926
    %v928 = vsel %vm925, %v927, %v923
    %v929 = vmul.f32 1.0, %v928
    %v930 = vadd.f32 %v848, %v888
    %v931 = vxor.u32 %v930, 2147483648
    %v932 = vmul.f32 %v931, 1.442695
    %v933 = vpow.pop %v932
    %v934 = vadd.f32 %v933, 1.0
    %v935 = vrcp.pop %v934
    %v936 = vmul.f32 %v934, %v935
    %v937 = vsub.f32 1.0, %v936
    %v938 = vmul.f32 %v935, %v937
    %v939 = vadd.f32 %v935, %v938
    %vm940 = vweird.f32 %v934
    %vm941 = vweird.f32 %v935
    %vm942 = vmor %vm940, %vm941
    %v943 = vsel %vm942, %v935, %v939
    %v944 = vand.u32 2147483647, %v934
    %vm945 = vcmp.eq.f32.partialorder %v944, 8.507059e+37
    %v946 = vand.u32 %v934, 2147483648
    %v947 = vor.u32 1.1754944e-38, %v946
    %v948 = vsel %vm945, %v947, %v943
    %v949 = vmul.f32 1.0, %v948
    %v950 = vadd.f32 %v908, %v379
    %v951 = vmul.f32 %v929, %v950
    %v952 = vadd.f32 %v849, %v951
    %v953 = vtanh.pop %v952
    %v954 = vsub.f32 1.0, %v949
    %v955 = vmul.f32 %v954, %v953
    %v956 = vmul.f32 %v949, %v841
    %v957 = vadd.f32 %v955, %v956
    %s958 = scalar_lea.vmem [#allocation3], 32
    %959 = vst [vmem:[%s958] sm:$0xff] %v957
    %s960 = smul.u32 5, 3
    %s961 = smul.addr %s960, 8
    %s962 = scalar_lea.vmem [#allocation2], %s961
    %v963 = vld [vmem:[%s962] sm:$0xff]
    %v964 = vld [vmem:[%s962 + $0x8] sm:$0xff]
    %v965 = vld [vmem:[%s962 + $0x10] sm:$0xff]
    %966 = vmatpush.msra.mxu0 %v374
    %967 = vmatpush.msra.mxu0 %v371
    %968 = vmatpush.msra.mxu0 %v368
    %969 = vmatpush.msra.mxu0 %v365
    %970 = vmatpush.msra.mxu0 %v362
    %971 = vmatpush.msra.mxu0 %v359
    %972 = vmatpush.msra.mxu0 %v356
    %973 = vmatpush.msra.mxu0 %v353
    %974 = vmatpush.msra.mxu0 %v350
    %975 = vmatpush.msra.mxu0 %v347
    %976 = vmatpush.msra.mxu0 %v344
    %977 = vmatpush.msra.mxu0 %v341
    %978 = vmatpush.msra.mxu0 %v338
    %979 = vmatpush.msra.mxu0 %v335
    %980 = vmatpush.msra.mxu0 %v332
    %981 = vmatpush.msra.mxu0 %v329
    %982 = vmatmul.f32.gmra.mxu0 %v957
    %v983 = vpop.f32.mrf.mxu0
    %v984 = vadd.f32 0.0, %v983
    %985 = vdwg.mxu0
    %986 = vmatpush.msra.mxu0 %v375
    %987 = vmatpush.msra.mxu0 %v372
    %988 = vmatpush.msra.mxu0 %v369
    %989 = vmatpush.msra.mxu0 %v366
    %990 = vmatpush.msra.mxu0 %v363
    %991 = vmatpush.msra.mxu0 %v360
    %992 = vmatpush.msra.mxu0 %v357
    %993 = vmatpush.msra.mxu0 %v354
    %994 = vmatpush.msra.mxu0 %v351
    %995 = vmatpush.msra.mxu0 %v348
    %996 = vmatpush.msra.mxu0 %v345
    %997 = vmatpush.msra.mxu0 %v342
    %998 = vmatpush.msra.mxu0 %v339
    %999 = vmatpush.msra.mxu0 %v336
    %1000 = vmatpush.msra.mxu0 %v333
    %1001 = vmatpush.msra.mxu0 %v330
    %1002 = vmatmul.f32.gmra.mxu0 %v957
    %v1003 = vpop.f32.mrf.mxu0
    %v1004 = vadd.f32 0.0, %v1003
    %1005 = vdwg.mxu0
    %1006 = vmatpush.msra.mxu0 %v376
    %1007 = vmatpush.msra.mxu0 %v373
    %1008 = vmatpush.msra.mxu0 %v370
    %1009 = vmatpush.msra.mxu0 %v367
    %1010 = vmatpush.msra.mxu0 %v364
    %1011 = vmatpush.msra.mxu0 %v361
    %1012 = vmatpush.msra.mxu0 %v358
    %1013 = vmatpush.msra.mxu0 %v355
    %1014 = vmatpush.msra.mxu0 %v352
    %1015 = vmatpush.msra.mxu0 %v349
    %1016 = vmatpush.msra.mxu0 %v346
    %1017 = vmatpush.msra.mxu0 %v343
    %1018 = vmatpush.msra.mxu0 %v340
    %1019 = vmatpush.msra.mxu0 %v337
    %1020 = vmatpush.msra.mxu0 %v334
    %1021 = vmatpush.msra.mxu0 %v331
    %1022 = vmatmul.f32.gmra.mxu0 %v957
    %v1023 = vpop.f32.mrf.mxu0
    %v1024 = vadd.f32 0.0, %v1023
    %1025 = vdwg.mxu0
    %v1026 = vadd.f32 %v963, %v984
    %v1027 = vxor.u32 %v1026, 2147483648
    %v1028 = vmul.f32 %v1027, 1.442695
    %v1029 = vpow.pop %v1028
    %v1030 = vadd.f32 %v1029, 1.0
    %v1031 = vrcp.pop %v1030
    %v1032 = vmul.f32 %v1030, %v1031
    %v1033 = vsub.f32 1.0, %v1032
    %v1034 = vmul.f32 %v1031, %v1033
    %v1035 = vadd.f32 %v1031, %v1034
    %vm1036 = vweird.f32 %v1030
    %vm1037 = vweird.f32 %v1031
    %vm1038 = vmor %vm1036, %vm1037
    %v1039 = vsel %vm1038, %v1031, %v1035
    %v1040 = vand.u32 2147483647, %v1030
    %vm1041 = vcmp.eq.f32.partialorder %v1040, 8.507059e+37
    %v1042 = vand.u32 %v1030, 2147483648
    %v1043 = vor.u32 1.1754944e-38, %v1042
    %v1044 = vsel %vm1041, %v1043, %v1039
    %v1045 = vmul.f32 1.0, %v1044
    %v1046 = vadd.f32 %v964, %v1004
    %v1047 = vxor.u32 %v1046, 2147483648
    %v1048 = vmul.f32 %v1047, 1.442695
    %v1049 = vpow.pop %v1048
    %v1050 = vadd.f32 %v1049, 1.0
    %v1051 = vrcp.pop %v1050
    %v1052 = vmul.f32 %v1050, %v1051
    %v1053 = vsub.f32 1.0, %v1052
    %v1054 = vmul.f32 %v1051, %v1053
    %v1055 = vadd.f32 %v1051, %v1054
    %vm1056 = vweird.f32 %v1050
    %vm1057 = vweird.f32 %v1051
    %vm1058 = vmor %vm1056, %vm1057
    %v1059 = vsel %vm1058, %v1051, %v1055
    %v1060 = vand.u32 2147483647, %v1050
    %vm1061 = vcmp.eq.f32.partialorder %v1060, 8.507059e+37
    %v1062 = vand.u32 %v1050, 2147483648
    %v1063 = vor.u32 1.1754944e-38, %v1062
    %v1064 = vsel %vm1061, %v1063, %v1059
    %v1065 = vmul.f32 1.0, %v1064
    %v1066 = vadd.f32 %v1024, %v379
    %v1067 = vmul.f32 %v1045, %v1066
    %v1068 = vadd.f32 %v965, %v1067
    %v1069 = vtanh.pop %v1068
    %v1070 = vsub.f32 1.0, %v1065
    %v1071 = vmul.f32 %v1070, %v1069
    %v1072 = vmul.f32 %v1065, %v957
    %v1073 = vadd.f32 %v1071, %v1072
    %s1074 = scalar_lea.vmem [#allocation3], 40
    %1075 = vst [vmem:[%s1074] sm:$0xff] %v1073
    %s1076 = smul.u32 6, 3
    %s1077 = smul.addr %s1076, 8
    %s1078 = scalar_lea.vmem [#allocation2], %s1077
    %v1079 = vld [vmem:[%s1078] sm:$0xff]
    %v1080 = vld [vmem:[%s1078 + $0x8] sm:$0xff]
    %v1081 = vld [vmem:[%s1078 + $0x10] sm:$0xff]
    %1082 = vmatpush.msra.mxu0 %v374
    %1083 = vmatpush.msra.mxu0 %v371
    %1084 = vmatpush.msra.mxu0 %v368
    %1085 = vmatpush.msra.mxu0 %v365
    %1086 = vmatpush.msra.mxu0 %v362
    %1087 = vmatpush.msra.mxu0 %v359
    %1088 = vmatpush.msra.mxu0 %v356
    %1089 = vmatpush.msra.mxu0 %v353
    %1090 = vmatpush.msra.mxu0 %v350
    %1091 = vmatpush.msra.mxu0 %v347
    %1092 = vmatpush.msra.mxu0 %v344
    %1093 = vmatpush.msra.mxu0 %v341
    %1094 = vmatpush.msra.mxu0 %v338
    %1095 = vmatpush.msra.mxu0 %v335
    %1096 = vmatpush.msra.mxu0 %v332
    %1097 = vmatpush.msra.mxu0 %v329
    %1098 = vmatmul.f32.gmra.mxu0 %v1073
    %v1099 = vpop.f32.mrf.mxu0
    %v1100 = vadd.f32 0.0, %v1099
    %1101 = vdwg.mxu0
    %1102 = vmatpush.msra.mxu0 %v375
    %1103 = vmatpush.msra.mxu0 %v372
    %1104 = vmatpush.msra.mxu0 %v369
    %1105 = vmatpush.msra.mxu0 %v366
    %1106 = vmatpush.msra.mxu0 %v363
    %1107 = vmatpush.msra.mxu0 %v360
    %1108 = vmatpush.msra.mxu0 %v357
    %1109 = vmatpush.msra.mxu0 %v354
    %1110 = vmatpush.msra.mxu0 %v351
    %1111 = vmatpush.msra.mxu0 %v348
    %1112 = vmatpush.msra.mxu0 %v345
    %1113 = vmatpush.msra.mxu0 %v342
    %1114 = vmatpush.msra.mxu0 %v339
    %1115 = vmatpush.msra.mxu0 %v336
    %1116 = vmatpush.msra.mxu0 %v333
    %1117 = vmatpush.msra.mxu0 %v330
    %1118 = vmatmul.f32.gmra.mxu0 %v1073
    %v1119 = vpop.f32.mrf.mxu0
    %v1120 = vadd.f32 0.0, %v1119
    %1121 = vdwg.mxu0
    %1122 = vmatpush.msra.mxu0 %v376
    %1123 = vmatpush.msra.mxu0 %v373
    %1124 = vmatpush.msra.mxu0 %v370
    %1125 = vmatpush.msra.mxu0 %v367
    %1126 = vmatpush.msra.mxu0 %v364
    %1127 = vmatpush.msra.mxu0 %v361
    %1128 = vmatpush.msra.mxu0 %v358
    %1129 = vmatpush.msra.mxu0 %v355
    %1130 = vmatpush.msra.mxu0 %v352
    %1131 = vmatpush.msra.mxu0 %v349
    %1132 = vmatpush.msra.mxu0 %v346
    %1133 = vmatpush.msra.mxu0 %v343
    %1134 = vmatpush.msra.mxu0 %v340
    %1135 = vmatpush.msra.mxu0 %v337
    %1136 = vmatpush.msra.mxu0 %v334
    %1137 = vmatpush.msra.mxu0 %v331
    %1138 = vmatmul.f32.gmra.mxu0 %v1073
    %v1139 = vpop.f32.mrf.mxu0
    %v1140 = vadd.f32 0.0, %v1139
    %1141 = vdwg.mxu0
    %v1142 = vadd.f32 %v1079, %v1100
    %v1143 = vxor.u32 %v1142, 2147483648
    %v1144 = vmul.f32 %v1143, 1.442695
    %v1145 = vpow.pop %v1144
    %v1146 = vadd.f32 %v1145, 1.0
    %v1147 = vrcp.pop %v1146
    %v1148 = vmul.f32 %v1146, %v1147
    %v1149 = vsub.f32 1.0, %v1148
    %v1150 = vmul.f32 %v1147, %v1149
    %v1151 = vadd.f32 %v1147, %v1150
    %vm1152 = vweird.f32 %v1146
    %vm1153 = vweird.f32 %v1147
    %vm1154 = vmor %vm1152, %vm1153
    %v1155 = vsel %vm1154, %v1147, %v1151
    %v1156 = vand.u32 2147483647, %v1146
    %vm1157 = vcmp.eq.f32.partialorder %v1156, 8.507059e+37
    %v1158 = vand.u32 %v1146, 2147483648
    %v1159 = vor.u32 1.1754944e-38, %v1158
    %v1160 = vsel %vm1157, %v1159, %v1155
    %v1161 = vmul.f32 1.0, %v1160
    %v1162 = vadd.f32 %v1080, %v1120
    %v1163 = vxor.u32 %v1162, 2147483648
    %v1164 = vmul.f32 %v1163, 1.442695
    %v1165 = vpow.pop %v1164
    %v1166 = vadd.f32 %v1165, 1.0
    %v1167 = vrcp.pop %v1166
    %v1168 = vmul.f32 %v1166, %v1167
    %v1169 = vsub.f32 1.0, %v1168
    %v1170 = vmul.f32 %v1167, %v1169
    %v1171 = vadd.f32 %v1167, %v1170
    %vm1172 = vweird.f32 %v1166
    %vm1173 = vweird.f32 %v1167
    %vm1174 = vmor %vm1172, %vm1173
    %v1175 = vsel %vm1174, %v1167, %v1171
    %v1176 = vand.u32 2147483647, %v1166
    %vm1177 = vcmp.eq.f32.partialorder %v1176, 8.507059e+37
    %v1178 = vand.u32 %v1166, 2147483648
    %v1179 = vor.u32 1.1754944e-38, %v1178
    %v1180 = vsel %vm1177, %v1179, %v1175
    %v1181 = vmul.f32 1.0, %v1180
    %v1182 = vadd.f32 %v1140, %v379
    %v1183 = vmul.f32 %v1161, %v1182
    %v1184 = vadd.f32 %v1081, %v1183
    %v1185 = vtanh.pop %v1184
    %v1186 = vsub.f32 1.0, %v1181
    %v1187 = vmul.f32 %v1186, %v1185
    %v1188 = vmul.f32 %v1181, %v1073
    %v1189 = vadd.f32 %v1187, %v1188
    %s1190 = scalar_lea.vmem [#allocation3], 48
    %1191 = vst [vmem:[%s1190] sm:$0xff] %v1189
    %s1192 = smul.u32 7, 3
    %s1193 = smul.addr %s1192, 8
    %s1194 = scalar_lea.vmem [#allocation2], %s1193
    %v1195 = vld [vmem:[%s1194] sm:$0xff]
    %v1196 = vld [vmem:[%s1194 + $0x8] sm:$0xff]
    %v1197 = vld [vmem:[%s1194 + $0x10] sm:$0xff]
    %1198 = vmatpush.msra.mxu0 %v374
    %1199 = vmatpush.msra.mxu0 %v371
    %1200 = vmatpush.msra.mxu0 %v368
    %1201 = vmatpush.msra.mxu0 %v365
    %1202 = vmatpush.msra.mxu0 %v362
    %1203 = vmatpush.msra.mxu0 %v359
    %1204 = vmatpush.msra.mxu0 %v356
    %1205 = vmatpush.msra.mxu0 %v353
    %1206 = vmatpush.msra.mxu0 %v350
    %1207 = vmatpush.msra.mxu0 %v347
    %1208 = vmatpush.msra.mxu0 %v344
    %1209 = vmatpush.msra.mxu0 %v341
    %1210 = vmatpush.msra.mxu0 %v338
    %1211 = vmatpush.msra.mxu0 %v335
    %1212 = vmatpush.msra.mxu0 %v332
    %1213 = vmatpush.msra.mxu0 %v329
    %1214 = vmatmul.f32.gmra.mxu0 %v1189
    %v1215 = vpop.f32.mrf.mxu0
    %v1216 = vadd.f32 0.0, %v1215
    %1217 = vdwg.mxu0
    %1218 = vmatpush.msra.mxu0 %v375
    %1219 = vmatpush.msra.mxu0 %v372
    %1220 = vmatpush.msra.mxu0 %v369
    %1221 = vmatpush.msra.mxu0 %v366
    %1222 = vmatpush.msra.mxu0 %v363
    %1223 = vmatpush.msra.mxu0 %v360
    %1224 = vmatpush.msra.mxu0 %v357
    %1225 = vmatpush.msra.mxu0 %v354
    %1226 = vmatpush.msra.mxu0 %v351
    %1227 = vmatpush.msra.mxu0 %v348
    %1228 = vmatpush.msra.mxu0 %v345
    %1229 = vmatpush.msra.mxu0 %v342
    %1230 = vmatpush.msra.mxu0 %v339
    %1231 = vmatpush.msra.mxu0 %v336
    %1232 = vmatpush.msra.mxu0 %v333
    %1233 = vmatpush.msra.mxu0 %v330
    %1234 = vmatmul.f32.gmra.mxu0 %v1189
    %v1235 = vpop.f32.mrf.mxu0
    %v1236 = vadd.f32 0.0, %v1235
    %1237 = vdwg.mxu0
    %1238 = vmatpush.msra.mxu0 %v376
    %1239 = vmatpush.msra.mxu0 %v373
    %1240 = vmatpush.msra.mxu0 %v370
    %1241 = vmatpush.msra.mxu0 %v367
    %1242 = vmatpush.msra.mxu0 %v364
    %1243 = vmatpush.msra.mxu0 %v361
    %1244 = vmatpush.msra.mxu0 %v358
    %1245 = vmatpush.msra.mxu0 %v355
    %1246 = vmatpush.msra.mxu0 %v352
    %1247 = vmatpush.msra.mxu0 %v349
    %1248 = vmatpush.msra.mxu0 %v346
    %1249 = vmatpush.msra.mxu0 %v343
    %1250 = vmatpush.msra.mxu0 %v340
    %1251 = vmatpush.msra.mxu0 %v337
    %1252 = vmatpush.msra.mxu0 %v334
    %1253 = vmatpush.msra.mxu0 %v331
    %1254 = vmatmul.f32.gmra.mxu0 %v1189
    %v1255 = vpop.f32.mrf.mxu0
    %v1256 = vadd.f32 0.0, %v1255
    %1257 = vdwg.mxu0
    %v1258 = vadd.f32 %v1195, %v1216
    %v1259 = vxor.u32 %v1258, 2147483648
    %v1260 = vmul.f32 %v1259, 1.442695
    %v1261 = vpow.pop %v1260
    %v1262 = vadd.f32 %v1261, 1.0
    %v1263 = vrcp.pop %v1262
    %v1264 = vmul.f32 %v1262, %v1263
    %v1265 = vsub.f32 1.0, %v1264
    %v1266 = vmul.f32 %v1263, %v1265
    %v1267 = vadd.f32 %v1263, %v1266
    %vm1268 = vweird.f32 %v1262
    %vm1269 = vweird.f32 %v1263
    %vm1270 = vmor %vm1268, %vm1269
    %v1271 = vsel %vm1270, %v1263, %v1267
    %v1272 = vand.u32 2147483647, %v1262
    %vm1273 = vcmp.eq.f32.partialorder %v1272, 8.507059e+37
    %v1274 = vand.u32 %v1262, 2147483648
    %v1275 = vor.u32 1.1754944e-38, %v1274
    %v1276 = vsel %vm1273, %v1275, %v1271
    %v1277 = vmul.f32 1.0, %v1276
    %v1278 = vadd.f32 %v1196, %v1236
    %v1279 = vxor.u32 %v1278, 2147483648
    %v1280 = vmul.f32 %v1279, 1.442695
    %v1281 = vpow.pop %v1280
    %v1282 = vadd.f32 %v1281, 1.0
    %v1283 = vrcp.pop %v1282
    %v1284 = vmul.f32 %v1282, %v1283
    %v1285 = vsub.f32 1.0, %v1284
    %v1286 = vmul.f32 %v1283, %v1285
    %v1287 = vadd.f32 %v1283, %v1286
    %vm1288 = vweird.f32 %v1282
    %vm1289 = vweird.f32 %v1283
    %vm1290 = vmor %vm1288, %vm1289
    %v1291 = vsel %vm1290, %v1283, %v1287
    %v1292 = vand.u32 2147483647, %v1282
    %vm1293 = vcmp.eq.f32.partialorder %v1292, 8.507059e+37
    %v1294 = vand.u32 %v1282, 2147483648
    %v1295 = vor.u32 1.1754944e-38, %v1294
    %v1296 = vsel %vm1293, %v1295, %v1291
    %v1297 = vmul.f32 1.0, %v1296
    %v1298 = vadd.f32 %v1256, %v379
    %v1299 = vmul.f32 %v1277, %v1298
    %v1300 = vadd.f32 %v1197, %v1299
    %v1301 = vtanh.pop %v1300
    %v1302 = vsub.f32 1.0, %v1297
    %v1303 = vmul.f32 %v1302, %v1301
    %v1304 = vmul.f32 %v1297, %v1189
    %v1305 = vadd.f32 %v1303, %v1304
    %s1306 = scalar_lea.vmem [#allocation3], 56
    %1307 = vst [vmem:[%s1306] sm:$0xff] %v1305
    %1308 = vst [vmem:[%s12] sm:$0xff] %v1305
    %v1309 = vld [vmem:[#allocation3] sm:$0xff]
    %v1310 = vld [vmem:[#allocation3 + $0x8] sm:$0xff]
    %v1311 = vld [vmem:[#allocation3 + $0x10] sm:$0xff]
    %v1312 = vld [vmem:[#allocation3 + $0x18] sm:$0xff]
    %v1313 = vld [vmem:[#allocation3 + $0x20] sm:$0xff]
    %v1314 = vld [vmem:[#allocation3 + $0x28] sm:$0xff]
    %v1315 = vld [vmem:[#allocation3 + $0x30] sm:$0xff]
    %v1316 = vld [vmem:[#allocation3 + $0x38] sm:$0xff]
    %v1317 = vld [vmem:[#allocation9] sm:$0xff]
    %v1318 = vld [vmem:[#allocation9 + $0x8] sm:$0xff]
    %v1319 = vld [vmem:[#allocation9 + $0x10] sm:$0xff]
    %v1320 = vld [vmem:[#allocation9 + $0x18] sm:$0xff]
    %v1321 = vld [vmem:[#allocation9 + $0x20] sm:$0xff]
    %v1322 = vld [vmem:[#allocation9 + $0x28] sm:$0xff]
    %v1323 = vld [vmem:[#allocation9 + $0x30] sm:$0xff]
    %v1324 = vld [vmem:[#allocation9 + $0x38] sm:$0xff]
    %v1325 = vld [vmem:[#allocation9 + $0x40] sm:$0xff]
    %v1326 = vld [vmem:[#allocation9 + $0x48] sm:$0xff]
    %v1327 = vld [vmem:[#allocation9 + $0x50] sm:$0xff]
    %v1328 = vld [vmem:[#allocation9 + $0x58] sm:$0xff]
    %v1329 = vld [vmem:[#allocation9 + $0x60] sm:$0xff]
    %v1330 = vld [vmem:[#allocation9 + $0x68] sm:$0xff]
    %v1331 = vld [vmem:[#allocation9 + $0x70] sm:$0xff]
    %v1332 = vld [vmem:[#allocation9 + $0x78] sm:$0xff]
    %v1333 = vld [vmem:[#allocation9 + $0x80] sm:$0xff]
    %v1334 = vld [vmem:[#allocation9 + $0x88] sm:$0xff]
    %v1335 = vld [vmem:[#allocation9 + $0x90] sm:$0xff]
    %v1336 = vld [vmem:[#allocation9 + $0x98] sm:$0xff]
    %v1337 = vld [vmem:[#allocation9 + $0xa0] sm:$0xff]
    %v1338 = vld [vmem:[#allocation9 + $0xa8] sm:$0xff]
    %v1339 = vld [vmem:[#allocation9 + $0xb0] sm:$0xff]
    %v1340 = vld [vmem:[#allocation9 + $0xb8] sm:$0xff]
    %v1341 = vld [vmem:[#allocation9 + $0xc0] sm:$0xff]
    %v1342 = vld [vmem:[#allocation9 + $0xc8] sm:$0xff]
    %v1343 = vld [vmem:[#allocation9 + $0xd0] sm:$0xff]
    %v1344 = vld [vmem:[#allocation9 + $0xd8] sm:$0xff]
    %v1345 = vld [vmem:[#allocation9 + $0xe0] sm:$0xff]
    %v1346 = vld [vmem:[#allocation9 + $0xe8] sm:$0xff]
    %v1347 = vld [vmem:[#allocation9 + $0xf0] sm:$0xff]
    %v1348 = vld [vmem:[#allocation9 + $0xf8] sm:$0xff]
    %v1349 = vld [vmem:[#allocation9 + $0x100] sm:$0xff]
    %v1350 = vld [vmem:[#allocation9 + $0x108] sm:$0xff]
    %v1351 = vld [vmem:[#allocation9 + $0x110] sm:$0xff]
    %v1352 = vld [vmem:[#allocation9 + $0x118] sm:$0xff]
    %v1353 = vld [vmem:[#allocation9 + $0x120] sm:$0xff]
    %v1354 = vld [vmem:[#allocation9 + $0x128] sm:$0xff]
    %v1355 = vld [vmem:[#allocation9 + $0x130] sm:$0xff]
    %v1356 = vld [vmem:[#allocation9 + $0x138] sm:$0xff]
    %v1357 = vld [vmem:[#allocation9 + $0x140] sm:$0xff]
    %v1358 = vld [vmem:[#allocation9 + $0x148] sm:$0xff]
    %v1359 = vld [vmem:[#allocation9 + $0x150] sm:$0xff]
    %v1360 = vld [vmem:[#allocation9 + $0x158] sm:$0xff]
    %v1361 = vld [vmem:[#allocation9 + $0x160] sm:$0xff]
    %v1362 = vld [vmem:[#allocation9 + $0x168] sm:$0xff]
    %v1363 = vld [vmem:[#allocation9 + $0x170] sm:$0xff]
    %v1364 = vld [vmem:[#allocation9 + $0x178] sm:$0xff]
    %v1365 = vld [vmem:[%s7] sm:$0x7]
    %v1367 = vperm.slane %v1365, 0
    %v1368 = vperm.slane %v1365, 1
    %v1369 = vperm.slane %v1365, 2
    %1373 = vmatpush.msra.mxu0 %v1362
    %1374 = vmatpush.msra.mxu0 %v1359
    %1375 = vmatpush.msra.mxu0 %v1356
    %1376 = vmatpush.msra.mxu0 %v1353
    %1377 = vmatpush.msra.mxu0 %v1350
    %1378 = vmatpush.msra.mxu0 %v1347
    %1379 = vmatpush.msra.mxu0 %v1344
    %1380 = vmatpush.msra.mxu0 %v1341
    %1381 = vmatpush.msra.mxu0 %v1338
    %1382 = vmatpush.msra.mxu0 %v1335
    %1383 = vmatpush.msra.mxu0 %v1332
    %1384 = vmatpush.msra.mxu0 %v1329
    %1385 = vmatpush.msra.mxu0 %v1326
    %1386 = vmatpush.msra.mxu0 %v1323
    %1387 = vmatpush.msra.mxu0 %v1320
    %1388 = vmatpush.msra.mxu0 %v1317
    %1389 = vmatmul.f32.gmra.mxu0 %v1309
    %v1390 = vpop.f32.mrf.mxu0
    %v1391 = vadd.f32 %v1367, %v1390
    %1392 = vmatmul.f32.gmra.mxu0 %v1310
    %v1393 = vpop.f32.mrf.mxu0
    %v1394 = vadd.f32 %v1367, %v1393
    %1395 = vmatmul.f32.gmra.mxu0 %v1311
    %v1396 = vpop.f32.mrf.mxu0
    %v1397 = vadd.f32 %v1367, %v1396
    %1398 = vmatmul.f32.gmra.mxu0 %v1312
    %v1399 = vpop.f32.mrf.mxu0
    %v1400 = vadd.f32 %v1367, %v1399
    %1401 = vmatmul.f32.gmra.mxu0 %v1313
    %v1402 = vpop.f32.mrf.mxu0
    %v1403 = vadd.f32 %v1367, %v1402
    %1404 = vmatmul.f32.gmra.mxu0 %v1314
    %v1405 = vpop.f32.mrf.mxu0
    %v1406 = vadd.f32 %v1367, %v1405
    %1407 = vmatmul.f32.gmra.mxu0 %v1315
    %v1408 = vpop.f32.mrf.mxu0
    %v1409 = vadd.f32 %v1367, %v1408
    %1410 = vmatmul.f32.gmra.mxu0 %v1316
    %v1411 = vpop.f32.mrf.mxu0
    %v1412 = vadd.f32 %v1367, %v1411
    %1413 = vdwg.mxu0
    %1414 = vmatpush.msra.mxu0 %v1363
    %1415 = vmatpush.msra.mxu0 %v1360
    %1416 = vmatpush.msra.mxu0 %v1357
    %1417 = vmatpush.msra.mxu0 %v1354
    %1418 = vmatpush.msra.mxu0 %v1351
    %1419 = vmatpush.msra.mxu0 %v1348
    %1420 = vmatpush.msra.mxu0 %v1345
    %1421 = vmatpush.msra.mxu0 %v1342
    %1422 = vmatpush.msra.mxu0 %v1339
    %1423 = vmatpush.msra.mxu0 %v1336
    %1424 = vmatpush.msra.mxu0 %v1333
    %1425 = vmatpush.msra.mxu0 %v1330
    %1426 = vmatpush.msra.mxu0 %v1327
    %1427 = vmatpush.msra.mxu0 %v1324
    %1428 = vmatpush.msra.mxu0 %v1321
    %1429 = vmatpush.msra.mxu0 %v1318
    %1430 = vmatmul.f32.gmra.mxu0 %v1309
    %v1431 = vpop.f32.mrf.mxu0
    %v1432 = vadd.f32 %v1368, %v1431
    %1433 = vmatmul.f32.gmra.mxu0 %v1310
    %v1434 = vpop.f32.mrf.mxu0
    %v1435 = vadd.f32 %v1368, %v1434
    %1436 = vmatmul.f32.gmra.mxu0 %v1311
    %v1437 = vpop.f32.mrf.mxu0
    %v1438 = vadd.f32 %v1368, %v1437
    %1439 = vmatmul.f32.gmra.mxu0 %v1312
    %v1440 = vpop.f32.mrf.mxu0
    %v1441 = vadd.f32 %v1368, %v1440
    %1442 = vmatmul.f32.gmra.mxu0 %v1313
    %v1443 = vpop.f32.mrf.mxu0
    %v1444 = vadd.f32 %v1368, %v1443
    %1445 = vmatmul.f32.gmra.mxu0 %v1314
    %v1446 = vpop.f32.mrf.mxu0
    %v1447 = vadd.f32 %v1368, %v1446
    %1448 = vmatmul.f32.gmra.mxu0 %v1315
    %v1449 = vpop.f32.mrf.mxu0
    %v1450 = vadd.f32 %v1368, %v1449
    %1451 = vmatmul.f32.gmra.mxu0 %v1316
    %v1452 = vpop.f32.mrf.mxu0
    %v1453 = vadd.f32 %v1368, %v1452
    %1454 = vdwg.mxu0
    %1455 = vmatpush.msra.mxu0 %v1364
    %1456 = vmatpush.msra.mxu0 %v1361
    %1457 = vmatpush.msra.mxu0 %v1358
    %1458 = vmatpush.msra.mxu0 %v1355
    %1459 = vmatpush.msra.mxu0 %v1352
    %1460 = vmatpush.msra.mxu0 %v1349
    %1461 = vmatpush.msra.mxu0 %v1346
    %1462 = vmatpush.msra.mxu0 %v1343
    %1463 = vmatpush.msra.mxu0 %v1340
    %1464 = vmatpush.msra.mxu0 %v1337
    %1465 = vmatpush.msra.mxu0 %v1334
    %1466 = vmatpush.msra.mxu0 %v1331
    %1467 = vmatpush.msra.mxu0 %v1328
    %1468 = vmatpush.msra.mxu0 %v1325
    %1469 = vmatpush.msra.mxu0 %v1322
    %1470 = vmatpush.msra.mxu0 %v1319
    %1471 = vmatmul.f32.gmra.mxu0 %v1309
    %v1472 = vpop.f32.mrf.mxu0
    %v1473 = vadd.f32 %v1369, %v1472
    %1474 = vmatmul.f32.gmra.mxu0 %v1310
    %v1475 = vpop.f32.mrf.mxu0
    %v1476 = vadd.f32 %v1369, %v1475
    %1477 = vmatmul.f32.gmra.mxu0 %v1311
    %v1478 = vpop.f32.mrf.mxu0
    %v1479 = vadd.f32 %v1369, %v1478
    %1480 = vmatmul.f32.gmra.mxu0 %v1312
    %v1481 = vpop.f32.mrf.mxu0
    %v1482 = vadd.f32 %v1369, %v1481
    %1483 = vmatmul.f32.gmra.mxu0 %v1313
    %v1484 = vpop.f32.mrf.mxu0
    %v1485 = vadd.f32 %v1369, %v1484
    %1486 = vmatmul.f32.gmra.mxu0 %v1314
    %v1487 = vpop.f32.mrf.mxu0
    %v1488 = vadd.f32 %v1369, %v1487
    %1489 = vmatmul.f32.gmra.mxu0 %v1315
    %v1490 = vpop.f32.mrf.mxu0
    %v1491 = vadd.f32 %v1369, %v1490
    %1492 = vmatmul.f32.gmra.mxu0 %v1316
    %v1493 = vpop.f32.mrf.mxu0
    %v1494 = vadd.f32 %v1369, %v1493
    %1495 = vdwg.mxu0
    %1496 = vst [vmem:[#allocation2] sm:$0xff] %v1391
    %1497 = vst [vmem:[#allocation2 + $0x8] sm:$0xff] %v1432
    %1498 = vst [vmem:[#allocation2 + $0x10] sm:$0xff] %v1473
    %1499 = vst [vmem:[#allocation2 + $0x18] sm:$0xff] %v1394
    %1500 = vst [vmem:[#allocation2 + $0x20] sm:$0xff] %v1435
    %1501 = vst [vmem:[#allocation2 + $0x28] sm:$0xff] %v1476
    %1502 = vst [vmem:[#allocation2 + $0x30] sm:$0xff] %v1397
    %1503 = vst [vmem:[#allocation2 + $0x38] sm:$0xff] %v1438
    %1504 = vst [vmem:[#allocation2 + $0x40] sm:$0xff] %v1479
    %1505 = vst [vmem:[#allocation2 + $0x48] sm:$0xff] %v1400
    %1506 = vst [vmem:[#allocation2 + $0x50] sm:$0xff] %v1441
    %1507 = vst [vmem:[#allocation2 + $0x58] sm:$0xff] %v1482
    %1508 = vst [vmem:[#allocation2 + $0x60] sm:$0xff] %v1403
    %1509 = vst [vmem:[#allocation2 + $0x68] sm:$0xff] %v1444
    %1510 = vst [vmem:[#allocation2 + $0x70] sm:$0xff] %v1485
    %1511 = vst [vmem:[#allocation2 + $0x78] sm:$0xff] %v1406
    %1512 = vst [vmem:[#allocation2 + $0x80] sm:$0xff] %v1447
    %1513 = vst [vmem:[#allocation2 + $0x88] sm:$0xff] %v1488
    %1514 = vst [vmem:[#allocation2 + $0x90] sm:$0xff] %v1409
    %1515 = vst [vmem:[#allocation2 + $0x98] sm:$0xff] %v1450
    %1516 = vst [vmem:[#allocation2 + $0xa0] sm:$0xff] %v1491
    %1517 = vst [vmem:[#allocation2 + $0xa8] sm:$0xff] %v1412
    %1518 = vst [vmem:[#allocation2 + $0xb0] sm:$0xff] %v1453
    %1519 = vst [vmem:[#allocation2 + $0xb8] sm:$0xff] %v1494
    %v1520 = vld [vmem:[#allocation10] sm:$0xff]
    %v1521 = vld [vmem:[#allocation10 + $0x8] sm:$0xff]
    %v1522 = vld [vmem:[#allocation10 + $0x10] sm:$0xff]
    %v1523 = vld [vmem:[#allocation10 + $0x18] sm:$0xff]
    %v1524 = vld [vmem:[#allocation10 + $0x20] sm:$0xff]
    %v1525 = vld [vmem:[#allocation10 + $0x28] sm:$0xff]
    %v1526 = vld [vmem:[#allocation10 + $0x30] sm:$0xff]
    %v1527 = vld [vmem:[#allocation10 + $0x38] sm:$0xff]
    %v1528 = vld [vmem:[#allocation10 + $0x40] sm:$0xff]
    %v1529 = vld [vmem:[#allocation10 + $0x48] sm:$0xff]
    %v1530 = vld [vmem:[#allocation10 + $0x50] sm:$0xff]
    %v1531 = vld [vmem:[#allocation10 + $0x58] sm:$0xff]
    %v1532 = vld [vmem:[#allocation10 + $0x60] sm:$0xff]
    %v1533 = vld [vmem:[#allocation10 + $0x68] sm:$0xff]
    %v1534 = vld [vmem:[#allocation10 + $0x70] sm:$0xff]
    %v1535 = vld [vmem:[#allocation10 + $0x78] sm:$0xff]
    %v1536 = vld [vmem:[#allocation10 + $0x80] sm:$0xff]
    %v1537 = vld [vmem:[#allocation10 + $0x88] sm:$0xff]
    %v1538 = vld [vmem:[#allocation10 + $0x90] sm:$0xff]
    %v1539 = vld [vmem:[#allocation10 + $0x98] sm:$0xff]
    %v1540 = vld [vmem:[#allocation10 + $0xa0] sm:$0xff]
    %v1541 = vld [vmem:[#allocation10 + $0xa8] sm:$0xff]
    %v1542 = vld [vmem:[#allocation10 + $0xb0] sm:$0xff]
    %v1543 = vld [vmem:[#allocation10 + $0xb8] sm:$0xff]
    %v1544 = vld [vmem:[#allocation10 + $0xc0] sm:$0xff]
    %v1545 = vld [vmem:[#allocation10 + $0xc8] sm:$0xff]
    %v1546 = vld [vmem:[#allocation10 + $0xd0] sm:$0xff]
    %v1547 = vld [vmem:[#allocation10 + $0xd8] sm:$0xff]
    %v1548 = vld [vmem:[#allocation10 + $0xe0] sm:$0xff]
    %v1549 = vld [vmem:[#allocation10 + $0xe8] sm:$0xff]
    %v1550 = vld [vmem:[#allocation10 + $0xf0] sm:$0xff]
    %v1551 = vld [vmem:[#allocation10 + $0xf8] sm:$0xff]
    %v1552 = vld [vmem:[#allocation10 + $0x100] sm:$0xff]
    %v1553 = vld [vmem:[#allocation10 + $0x108] sm:$0xff]
    %v1554 = vld [vmem:[#allocation10 + $0x110] sm:$0xff]
    %v1555 = vld [vmem:[#allocation10 + $0x118] sm:$0xff]
    %v1556 = vld [vmem:[#allocation10 + $0x120] sm:$0xff]
    %v1557 = vld [vmem:[#allocation10 + $0x128] sm:$0xff]
    %v1558 = vld [vmem:[#allocation10 + $0x130] sm:$0xff]
    %v1559 = vld [vmem:[#allocation10 + $0x138] sm:$0xff]
    %v1560 = vld [vmem:[#allocation10 + $0x140] sm:$0xff]
    %v1561 = vld [vmem:[#allocation10 + $0x148] sm:$0xff]
    %v1562 = vld [vmem:[#allocation10 + $0x150] sm:$0xff]
    %v1563 = vld [vmem:[#allocation10 + $0x158] sm:$0xff]
    %v1564 = vld [vmem:[#allocation10 + $0x160] sm:$0xff]
    %v1565 = vld [vmem:[#allocation10 + $0x168] sm:$0xff]
    %v1566 = vld [vmem:[#allocation10 + $0x170] sm:$0xff]
    %v1567 = vld [vmem:[#allocation10 + $0x178] sm:$0xff]
    %v1568 = vld [vmem:[%s8] sm:$0x1]
    %v1570 = vperm.slane %v1568, 0
    %v1572 = vld [vmem:[%s383] sm:$0xff]
    %v1573 = vld [vmem:[%s383 + $0x8] sm:$0xff]
    %v1574 = vld [vmem:[%s383 + $0x10] sm:$0xff]
    %1575 = vmatpush.msra.mxu0 %v1565
    %1576 = vmatpush.msra.mxu0 %v1562
    %1577 = vmatpush.msra.mxu0 %v1559
    %1578 = vmatpush.msra.mxu0 %v1556
    %1579 = vmatpush.msra.mxu0 %v1553
    %1580 = vmatpush.msra.mxu0 %v1550
    %1581 = vmatpush.msra.mxu0 %v1547
    %1582 = vmatpush.msra.mxu0 %v1544
    %1583 = vmatpush.msra.mxu0 %v1541
    %1584 = vmatpush.msra.mxu0 %v1538
    %1585 = vmatpush.msra.mxu0 %v1535
    %1586 = vmatpush.msra.mxu0 %v1532
    %1587 = vmatpush.msra.mxu0 %v1529
    %1588 = vmatpush.msra.mxu0 %v1526
    %1589 = vmatpush.msra.mxu0 %v1523
    %1590 = vmatpush.msra.mxu0 %v1520
    %1591 = vmatmul.f32.gmra.mxu0 0.0
    %v1592 = vpop.f32.mrf.mxu0
    %v1593 = vadd.f32 0.0, %v1592
    %1594 = vdwg.mxu0
    %1595 = vmatpush.msra.mxu0 %v1566
    %1596 = vmatpush.msra.mxu0 %v1563
    %1597 = vmatpush.msra.mxu0 %v1560
    %1598 = vmatpush.msra.mxu0 %v1557
    %1599 = vmatpush.msra.mxu0 %v1554
    %1600 = vmatpush.msra.mxu0 %v1551
    %1601 = vmatpush.msra.mxu0 %v1548
    %1602 = vmatpush.msra.mxu0 %v1545
    %1603 = vmatpush.msra.mxu0 %v1542
    %1604 = vmatpush.msra.mxu0 %v1539
    %1605 = vmatpush.msra.mxu0 %v1536
    %1606 = vmatpush.msra.mxu0 %v1533
    %1607 = vmatpush.msra.mxu0 %v1530
    %1608 = vmatpush.msra.mxu0 %v1527
    %1609 = vmatpush.msra.mxu0 %v1524
    %1610 = vmatpush.msra.mxu0 %v1521
    %1611 = vmatmul.f32.gmra.mxu0 0.0
    %v1612 = vpop.f32.mrf.mxu0
    %v1613 = vadd.f32 0.0, %v1612
    %1614 = vdwg.mxu0
    %1615 = vmatpush.msra.mxu0 %v1567
    %1616 = vmatpush.msra.mxu0 %v1564
    %1617 = vmatpush.msra.mxu0 %v1561
    %1618 = vmatpush.msra.mxu0 %v1558
    %1619 = vmatpush.msra.mxu0 %v1555
    %1620 = vmatpush.msra.mxu0 %v1552
    %1621 = vmatpush.msra.mxu0 %v1549
    %1622 = vmatpush.msra.mxu0 %v1546
    %1623 = vmatpush.msra.mxu0 %v1543
    %1624 = vmatpush.msra.mxu0 %v1540
    %1625 = vmatpush.msra.mxu0 %v1537
    %1626 = vmatpush.msra.mxu0 %v1534
    %1627 = vmatpush.msra.mxu0 %v1531
    %1628 = vmatpush.msra.mxu0 %v1528
    %1629 = vmatpush.msra.mxu0 %v1525
    %1630 = vmatpush.msra.mxu0 %v1522
    %1631 = vmatmul.f32.gmra.mxu0 0.0
    %v1632 = vpop.f32.mrf.mxu0
    %v1633 = vadd.f32 0.0, %v1632
    %1634 = vdwg.mxu0
    %v1635 = vadd.f32 %v1572, %v1593
    %v1636 = vxor.u32 %v1635, 2147483648
    %v1637 = vmul.f32 %v1636, 1.442695
    %v1638 = vpow.pop %v1637
    %v1639 = vadd.f32 %v1638, 1.0
    %v1640 = vrcp.pop %v1639
    %v1641 = vmul.f32 %v1639, %v1640
    %v1642 = vsub.f32 1.0, %v1641
    %v1643 = vmul.f32 %v1640, %v1642
    %v1644 = vadd.f32 %v1640, %v1643
    %vm1645 = vweird.f32 %v1639
    %vm1646 = vweird.f32 %v1640
    %vm1647 = vmor %vm1645, %vm1646
    %v1648 = vsel %vm1647, %v1640, %v1644
    %v1649 = vand.u32 2147483647, %v1639
    %vm1650 = vcmp.eq.f32.partialorder %v1649, 8.507059e+37
    %v1651 = vand.u32 %v1639, 2147483648
    %v1652 = vor.u32 1.1754944e-38, %v1651
    %v1653 = vsel %vm1650, %v1652, %v1648
    %v1654 = vmul.f32 1.0, %v1653
    %v1655 = vadd.f32 %v1573, %v1613
    %v1656 = vxor.u32 %v1655, 2147483648
    %v1657 = vmul.f32 %v1656, 1.442695
    %v1658 = vpow.pop %v1657
    %v1659 = vadd.f32 %v1658, 1.0
    %v1660 = vrcp.pop %v1659
    %v1661 = vmul.f32 %v1659, %v1660
    %v1662 = vsub.f32 1.0, %v1661
    %v1663 = vmul.f32 %v1660, %v1662
    %v1664 = vadd.f32 %v1660, %v1663
    %vm1665 = vweird.f32 %v1659
    %vm1666 = vweird.f32 %v1660
    %vm1667 = vmor %vm1665, %vm1666
    %v1668 = vsel %vm1667, %v1660, %v1664
    %v1669 = vand.u32 2147483647, %v1659
    %vm1670 = vcmp.eq.f32.partialorder %v1669, 8.507059e+37
    %v1671 = vand.u32 %v1659, 2147483648
    %v1672 = vor.u32 1.1754944e-38, %v1671
    %v1673 = vsel %vm1670, %v1672, %v1668
    %v1674 = vmul.f32 1.0, %v1673
    %v1675 = vadd.f32 %v1633, %v1570
    %v1676 = vmul.f32 %v1654, %v1675
    %v1677 = vadd.f32 %v1574, %v1676
    %v1678 = vtanh.pop %v1677
    %v1679 = vsub.f32 1.0, %v1674
    %v1680 = vmul.f32 %v1679, %v1678
    %v1681 = vmul.f32 %v1674, 0.0
    %v1682 = vadd.f32 %v1680, %v1681
    %1683 = vst [vmem:[#allocation4] sm:$0xff] %v1682
    %v1684 = vld [vmem:[%s498] sm:$0xff]
    %v1685 = vld [vmem:[%s498 + $0x8] sm:$0xff]
    %v1686 = vld [vmem:[%s498 + $0x10] sm:$0xff]
    %1687 = vmatpush.msra.mxu0 %v1565
    %1688 = vmatpush.msra.mxu0 %v1562
    %1689 = vmatpush.msra.mxu0 %v1559
    %1690 = vmatpush.msra.mxu0 %v1556
    %1691 = vmatpush.msra.mxu0 %v1553
    %1692 = vmatpush.msra.mxu0 %v1550
    %1693 = vmatpush.msra.mxu0 %v1547
    %1694 = vmatpush.msra.mxu0 %v1544
    %1695 = vmatpush.msra.mxu0 %v1541
    %1696 = vmatpush.msra.mxu0 %v1538
    %1697 = vmatpush.msra.mxu0 %v1535
    %1698 = vmatpush.msra.mxu0 %v1532
    %1699 = vmatpush.msra.mxu0 %v1529
    %1700 = vmatpush.msra.mxu0 %v1526
    %1701 = vmatpush.msra.mxu0 %v1523
    %1702 = vmatpush.msra.mxu0 %v1520
    %1703 = vmatmul.f32.gmra.mxu0 %v1682
    %v1704 = vpop.f32.mrf.mxu0
    %v1705 = vadd.f32 0.0, %v1704
    %1706 = vdwg.mxu0
    %1707 = vmatpush.msra.mxu0 %v1566
    %1708 = vmatpush.msra.mxu0 %v1563
    %1709 = vmatpush.msra.mxu0 %v1560
    %1710 = vmatpush.msra.mxu0 %v1557
    %1711 = vmatpush.msra.mxu0 %v1554
    %1712 = vmatpush.msra.mxu0 %v1551
    %1713 = vmatpush.msra.mxu0 %v1548
    %1714 = vmatpush.msra.mxu0 %v1545
    %1715 = vmatpush.msra.mxu0 %v1542
    %1716 = vmatpush.msra.mxu0 %v1539
    %1717 = vmatpush.msra.mxu0 %v1536
    %1718 = vmatpush.msra.mxu0 %v1533
    %1719 = vmatpush.msra.mxu0 %v1530
    %1720 = vmatpush.msra.mxu0 %v1527
    %1721 = vmatpush.msra.mxu0 %v1524
    %1722 = vmatpush.msra.mxu0 %v1521
    %1723 = vmatmul.f32.gmra.mxu0 %v1682
    %v1724 = vpop.f32.mrf.mxu0
    %v1725 = vadd.f32 0.0, %v1724
    %1726 = vdwg.mxu0
    %1727 = vmatpush.msra.mxu0 %v1567
    %1728 = vmatpush.msra.mxu0 %v1564
    %1729 = vmatpush.msra.mxu0 %v1561
    %1730 = vmatpush.msra.mxu0 %v1558
    %1731 = vmatpush.msra.mxu0 %v1555
    %1732 = vmatpush.msra.mxu0 %v1552
    %1733 = vmatpush.msra.mxu0 %v1549
    %1734 = vmatpush.msra.mxu0 %v1546
    %1735 = vmatpush.msra.mxu0 %v1543
    %1736 = vmatpush.msra.mxu0 %v1540
    %1737 = vmatpush.msra.mxu0 %v1537
    %1738 = vmatpush.msra.mxu0 %v1534
    %1739 = vmatpush.msra.mxu0 %v1531
    %1740 = vmatpush.msra.mxu0 %v1528
    %1741 = vmatpush.msra.mxu0 %v1525
    %1742 = vmatpush.msra.mxu0 %v1522
    %1743 = vmatmul.f32.gmra.mxu0 %v1682
    %v1744 = vpop.f32.mrf.mxu0
    %v1745 = vadd.f32 0.0, %v1744
    %1746 = vdwg.mxu0
    %v1747 = vadd.f32 %v1684, %v1705
    %v1748 = vxor.u32 %v1747, 2147483648
    %v1749 = vmul.f32 %v1748, 1.442695
    %v1750 = vpow.pop %v1749
    %v1751 = vadd.f32 %v1750, 1.0
    %v1752 = vrcp.pop %v1751
    %v1753 = vmul.f32 %v1751, %v1752
    %v1754 = vsub.f32 1.0, %v1753
    %v1755 = vmul.f32 %v1752, %v1754
    %v1756 = vadd.f32 %v1752, %v1755
    %vm1757 = vweird.f32 %v1751
    %vm1758 = vweird.f32 %v1752
    %vm1759 = vmor %vm1757, %vm1758
    %v1760 = vsel %vm1759, %v1752, %v1756
    %v1761 = vand.u32 2147483647, %v1751
    %vm1762 = vcmp.eq.f32.partialorder %v1761, 8.507059e+37
    %v1763 = vand.u32 %v1751, 2147483648
    %v1764 = vor.u32 1.1754944e-38, %v1763
    %v1765 = vsel %vm1762, %v1764, %v1760
    %v1766 = vmul.f32 1.0, %v1765
    %v1767 = vadd.f32 %v1685, %v1725
    %v1768 = vxor.u32 %v1767, 2147483648
    %v1769 = vmul.f32 %v1768, 1.442695
    %v1770 = vpow.pop %v1769
    %v1771 = vadd.f32 %v1770, 1.0
    %v1772 = vrcp.pop %v1771
    %v1773 = vmul.f32 %v1771, %v1772
    %v1774 = vsub.f32 1.0, %v1773
    %v1775 = vmul.f32 %v1772, %v1774
    %v1776 = vadd.f32 %v1772, %v1775
    %vm1777 = vweird.f32 %v1771
    %vm1778 = vweird.f32 %v1772
    %vm1779 = vmor %vm1777, %vm1778
    %v1780 = vsel %vm1779, %v1772, %v1776
    %v1781 = vand.u32 2147483647, %v1771
    %vm1782 = vcmp.eq.f32.partialorder %v1781, 8.507059e+37
    %v1783 = vand.u32 %v1771, 2147483648
    %v1784 = vor.u32 1.1754944e-38, %v1783
    %v1785 = vsel %vm1782, %v1784, %v1780
    %v1786 = vmul.f32 1.0, %v1785
    %v1787 = vadd.f32 %v1745, %v1570
    %v1788 = vmul.f32 %v1766, %v1787
    %v1789 = vadd.f32 %v1686, %v1788
    %v1790 = vtanh.pop %v1789
    %v1791 = vsub.f32 1.0, %v1786
    %v1792 = vmul.f32 %v1791, %v1790
    %v1793 = vmul.f32 %v1786, %v1682
    %v1794 = vadd.f32 %v1792, %v1793
    %s1795 = scalar_lea.vmem [#allocation4], 8
    %1796 = vst [vmem:[%s1795] sm:$0xff] %v1794
    %v1797 = vld [vmem:[%s614] sm:$0xff]
    %v1798 = vld [vmem:[%s614 + $0x8] sm:$0xff]
    %v1799 = vld [vmem:[%s614 + $0x10] sm:$0xff]
    %1800 = vmatpush.msra.mxu0 %v1565
    %1801 = vmatpush.msra.mxu0 %v1562
    %1802 = vmatpush.msra.mxu0 %v1559
    %1803 = vmatpush.msra.mxu0 %v1556
    %1804 = vmatpush.msra.mxu0 %v1553
    %1805 = vmatpush.msra.mxu0 %v1550
    %1806 = vmatpush.msra.mxu0 %v1547
    %1807 = vmatpush.msra.mxu0 %v1544
    %1808 = vmatpush.msra.mxu0 %v1541
    %1809 = vmatpush.msra.mxu0 %v1538
    %1810 = vmatpush.msra.mxu0 %v1535
    %1811 = vmatpush.msra.mxu0 %v1532
    %1812 = vmatpush.msra.mxu0 %v1529
    %1813 = vmatpush.msra.mxu0 %v1526
    %1814 = vmatpush.msra.mxu0 %v1523
    %1815 = vmatpush.msra.mxu0 %v1520
    %1816 = vmatmul.f32.gmra.mxu0 %v1794
    %v1817 = vpop.f32.mrf.mxu0
    %v1818 = vadd.f32 0.0, %v1817
    %1819 = vdwg.mxu0
    %1820 = vmatpush.msra.mxu0 %v1566
    %1821 = vmatpush.msra.mxu0 %v1563
    %1822 = vmatpush.msra.mxu0 %v1560
    %1823 = vmatpush.msra.mxu0 %v1557
    %1824 = vmatpush.msra.mxu0 %v1554
    %1825 = vmatpush.msra.mxu0 %v1551
    %1826 = vmatpush.msra.mxu0 %v1548
    %1827 = vmatpush.msra.mxu0 %v1545
    %1828 = vmatpush.msra.mxu0 %v1542
    %1829 = vmatpush.msra.mxu0 %v1539
    %1830 = vmatpush.msra.mxu0 %v1536
    %1831 = vmatpush.msra.mxu0 %v1533
    %1832 = vmatpush.msra.mxu0 %v1530
    %1833 = vmatpush.msra.mxu0 %v1527
    %1834 = vmatpush.msra.mxu0 %v1524
    %1835 = vmatpush.msra.mxu0 %v1521
    %1836 = vmatmul.f32.gmra.mxu0 %v1794
    %v1837 = vpop.f32.mrf.mxu0
    %v1838 = vadd.f32 0.0, %v1837
    %1839 = vdwg.mxu0
    %1840 = vmatpush.msra.mxu0 %v1567
    %1841 = vmatpush.msra.mxu0 %v1564
    %1842 = vmatpush.msra.mxu0 %v1561
    %1843 = vmatpush.msra.mxu0 %v1558
    %1844 = vmatpush.msra.mxu0 %v1555
    %1845 = vmatpush.msra.mxu0 %v1552
    %1846 = vmatpush.msra.mxu0 %v1549
    %1847 = vmatpush.msra.mxu0 %v1546
    %1848 = vmatpush.msra.mxu0 %v1543
    %1849 = vmatpush.msra.mxu0 %v1540
    %1850 = vmatpush.msra.mxu0 %v1537
    %1851 = vmatpush.msra.mxu0 %v1534
    %1852 = vmatpush.msra.mxu0 %v1531
    %1853 = vmatpush.msra.mxu0 %v1528
    %1854 = vmatpush.msra.mxu0 %v1525
    %1855 = vmatpush.msra.mxu0 %v1522
    %1856 = vmatmul.f32.gmra.mxu0 %v1794
    %v1857 = vpop.f32.mrf.mxu0
    %v1858 = vadd.f32 0.0, %v1857
    %1859 = vdwg.mxu0
    %v1860 = vadd.f32 %v1797, %v1818
    %v1861 = vxor.u32 %v1860, 2147483648
    %v1862 = vmul.f32 %v1861, 1.442695
    %v1863 = vpow.pop %v1862
    %v1864 = vadd.f32 %v1863, 1.0
    %v1865 = vrcp.pop %v1864
    %v1866 = vmul.f32 %v1864, %v1865
    %v1867 = vsub.f32 1.0, %v1866
    %v1868 = vmul.f32 %v1865, %v1867
    %v1869 = vadd.f32 %v1865, %v1868
    %vm1870 = vweird.f32 %v1864
    %vm1871 = vweird.f32 %v1865
    %vm1872 = vmor %vm1870, %vm1871
    %v1873 = vsel %vm1872, %v1865, %v1869
    %v1874 = vand.u32 2147483647, %v1864
    %vm1875 = vcmp.eq.f32.partialorder %v1874, 8.507059e+37
    %v1876 = vand.u32 %v1864, 2147483648
    %v1877 = vor.u32 1.1754944e-38, %v1876
    %v1878 = vsel %vm1875, %v1877, %v1873
    %v1879 = vmul.f32 1.0, %v1878
    %v1880 = vadd.f32 %v1798, %v1838
    %v1881 = vxor.u32 %v1880, 2147483648
    %v1882 = vmul.f32 %v1881, 1.442695
    %v1883 = vpow.pop %v1882
    %v1884 = vadd.f32 %v1883, 1.0
    %v1885 = vrcp.pop %v1884
    %v1886 = vmul.f32 %v1884, %v1885
    %v1887 = vsub.f32 1.0, %v1886
    %v1888 = vmul.f32 %v1885, %v1887
    %v1889 = vadd.f32 %v1885, %v1888
    %vm1890 = vweird.f32 %v1884
    %vm1891 = vweird.f32 %v1885
    %vm1892 = vmor %vm1890, %vm1891
    %v1893 = vsel %vm1892, %v1885, %v1889
    %v1894 = vand.u32 2147483647, %v1884
    %vm1895 = vcmp.eq.f32.partialorder %v1894, 8.507059e+37
    %v1896 = vand.u32 %v1884, 2147483648
    %v1897 = vor.u32 1.1754944e-38, %v1896
    %v1898 = vsel %vm1895, %v1897, %v1893
    %v1899 = vmul.f32 1.0, %v1898
    %v1900 = vadd.f32 %v1858, %v1570
    %v1901 = vmul.f32 %v1879, %v1900
    %v1902 = vadd.f32 %v1799, %v1901
    %v1903 = vtanh.pop %v1902
    %v1904 = vsub.f32 1.0, %v1899
    %v1905 = vmul.f32 %v1904, %v1903
    %v1906 = vmul.f32 %v1899, %v1794
    %v1907 = vadd.f32 %v1905, %v1906
    %s1908 = scalar_lea.vmem [#allocation4], 16
    %1909 = vst [vmem:[%s1908] sm:$0xff] %v1907
    %v1910 = vld [vmem:[%s730] sm:$0xff]
    %v1911 = vld [vmem:[%s730 + $0x8] sm:$0xff]
    %v1912 = vld [vmem:[%s730 + $0x10] sm:$0xff]
    %1913 = vmatpush.msra.mxu0 %v1565
    %1914 = vmatpush.msra.mxu0 %v1562
    %1915 = vmatpush.msra.mxu0 %v1559
    %1916 = vmatpush.msra.mxu0 %v1556
    %1917 = vmatpush.msra.mxu0 %v1553
    %1918 = vmatpush.msra.mxu0 %v1550
    %1919 = vmatpush.msra.mxu0 %v1547
    %1920 = vmatpush.msra.mxu0 %v1544
    %1921 = vmatpush.msra.mxu0 %v1541
    %1922 = vmatpush.msra.mxu0 %v1538
    %1923 = vmatpush.msra.mxu0 %v1535
    %1924 = vmatpush.msra.mxu0 %v1532
    %1925 = vmatpush.msra.mxu0 %v1529
    %1926 = vmatpush.msra.mxu0 %v1526
    %1927 = vmatpush.msra.mxu0 %v1523
    %1928 = vmatpush.msra.mxu0 %v1520
    %1929 = vmatmul.f32.gmra.mxu0 %v1907
    %v1930 = vpop.f32.mrf.mxu0
    %v1931 = vadd.f32 0.0, %v1930
    %1932 = vdwg.mxu0
    %1933 = vmatpush.msra.mxu0 %v1566
    %1934 = vmatpush.msra.mxu0 %v1563
    %1935 = vmatpush.msra.mxu0 %v1560
    %1936 = vmatpush.msra.mxu0 %v1557
    %1937 = vmatpush.msra.mxu0 %v1554
    %1938 = vmatpush.msra.mxu0 %v1551
    %1939 = vmatpush.msra.mxu0 %v1548
    %1940 = vmatpush.msra.mxu0 %v1545
    %1941 = vmatpush.msra.mxu0 %v1542
    %1942 = vmatpush.msra.mxu0 %v1539
    %1943 = vmatpush.msra.mxu0 %v1536
    %1944 = vmatpush.msra.mxu0 %v1533
    %1945 = vmatpush.msra.mxu0 %v1530
    %1946 = vmatpush.msra.mxu0 %v1527
    %1947 = vmatpush.msra.mxu0 %v1524
    %1948 = vmatpush.msra.mxu0 %v1521
    %1949 = vmatmul.f32.gmra.mxu0 %v1907
    %v1950 = vpop.f32.mrf.mxu0
    %v1951 = vadd.f32 0.0, %v1950
    %1952 = vdwg.mxu0
    %1953 = vmatpush.msra.mxu0 %v1567
    %1954 = vmatpush.msra.mxu0 %v1564
    %1955 = vmatpush.msra.mxu0 %v1561
    %1956 = vmatpush.msra.mxu0 %v1558
    %1957 = vmatpush.msra.mxu0 %v1555
    %1958 = vmatpush.msra.mxu0 %v1552
    %1959 = vmatpush.msra.mxu0 %v1549
    %1960 = vmatpush.msra.mxu0 %v1546
    %1961 = vmatpush.msra.mxu0 %v1543
    %1962 = vmatpush.msra.mxu0 %v1540
    %1963 = vmatpush.msra.mxu0 %v1537
    %1964 = vmatpush.msra.mxu0 %v1534
    %1965 = vmatpush.msra.mxu0 %v1531
    %1966 = vmatpush.msra.mxu0 %v1528
    %1967 = vmatpush.msra.mxu0 %v1525
    %1968 = vmatpush.msra.mxu0 %v1522
    %1969 = vmatmul.f32.gmra.mxu0 %v1907
    %v1970 = vpop.f32.mrf.mxu0
    %v1971 = vadd.f32 0.0, %v1970
    %1972 = vdwg.mxu0
    %v1973 = vadd.f32 %v1910, %v1931
    %v1974 = vxor.u32 %v1973, 2147483648
    %v1975 = vmul.f32 %v1974, 1.442695
    %v1976 = vpow.pop %v1975
    %v1977 = vadd.f32 %v1976, 1.0
    %v1978 = vrcp.pop %v1977
    %v1979 = vmul.f32 %v1977, %v1978
    %v1980 = vsub.f32 1.0, %v1979
    %v1981 = vmul.f32 %v1978, %v1980
    %v1982 = vadd.f32 %v1978, %v1981
    %vm1983 = vweird.f32 %v1977
    %vm1984 = vweird.f32 %v1978
    %vm1985 = vmor %vm1983, %vm1984
    %v1986 = vsel %vm1985, %v1978, %v1982
    %v1987 = vand.u32 2147483647, %v1977
    %vm1988 = vcmp.eq.f32.partialorder %v1987, 8.507059e+37
    %v1989 = vand.u32 %v1977, 2147483648
    %v1990 = vor.u32 1.1754944e-38, %v1989
    %v1991 = vsel %vm1988, %v1990, %v1986
    %v1992 = vmul.f32 1.0, %v1991
    %v1993 = vadd.f32 %v1911, %v1951
    %v1994 = vxor.u32 %v1993, 2147483648
    %v1995 = vmul.f32 %v1994, 1.442695
    %v1996 = vpow.pop %v1995
    %v1997 = vadd.f32 %v1996, 1.0
    %v1998 = vrcp.pop %v1997
    %v1999 = vmul.f32 %v1997, %v1998
    %v2000 = vsub.f32 1.0, %v1999
    %v2001 = vmul.f32 %v1998, %v2000
    %v2002 = vadd.f32 %v1998, %v2001
    %vm2003 = vweird.f32 %v1997
    %vm2004 = vweird.f32 %v1998
    %vm2005 = vmor %vm2003, %vm2004
    %v2006 = vsel %vm2005, %v1998, %v2002
    %v2007 = vand.u32 2147483647, %v1997
    %vm2008 = vcmp.eq.f32.partialorder %v2007, 8.507059e+37
    %v2009 = vand.u32 %v1997, 2147483648
    %v2010 = vor.u32 1.1754944e-38, %v2009
    %v2011 = vsel %vm2008, %v2010, %v2006
    %v2012 = vmul.f32 1.0, %v2011
    %v2013 = vadd.f32 %v1971, %v1570
    %v2014 = vmul.f32 %v1992, %v2013
    %v2015 = vadd.f32 %v1912, %v2014
    %v2016 = vtanh.pop %v2015
    %v2017 = vsub.f32 1.0, %v2012
    %v2018 = vmul.f32 %v2017, %v2016
    %v2019 = vmul.f32 %v2012, %v1907
    %v2020 = vadd.f32 %v2018, %v2019
    %s2021 = scalar_lea.vmem [#allocation4], 24
    %2022 = vst [vmem:[%s2021] sm:$0xff] %v2020
    %v2023 = vld [vmem:[%s846] sm:$0xff]
    %v2024 = vld [vmem:[%s846 + $0x8] sm:$0xff]
    %v2025 = vld [vmem:[%s846 + $0x10] sm:$0xff]
    %2026 = vmatpush.msra.mxu0 %v1565
    %2027 = vmatpush.msra.mxu0 %v1562
    %2028 = vmatpush.msra.mxu0 %v1559
    %2029 = vmatpush.msra.mxu0 %v1556
    %2030 = vmatpush.msra.mxu0 %v1553
    %2031 = vmatpush.msra.mxu0 %v1550
    %2032 = vmatpush.msra.mxu0 %v1547
    %2033 = vmatpush.msra.mxu0 %v1544
    %2034 = vmatpush.msra.mxu0 %v1541
    %2035 = vmatpush.msra.mxu0 %v1538
    %2036 = vmatpush.msra.mxu0 %v1535
    %2037 = vmatpush.msra.mxu0 %v1532
    %2038 = vmatpush.msra.mxu0 %v1529
    %2039 = vmatpush.msra.mxu0 %v1526
    %2040 = vmatpush.msra.mxu0 %v1523
    %2041 = vmatpush.msra.mxu0 %v1520
    %2042 = vmatmul.f32.gmra.mxu0 %v2020
    %v2043 = vpop.f32.mrf.mxu0
    %v2044 = vadd.f32 0.0, %v2043
    %2045 = vdwg.mxu0
    %2046 = vmatpush.msra.mxu0 %v1566
    %2047 = vmatpush.msra.mxu0 %v1563
    %2048 = vmatpush.msra.mxu0 %v1560
    %2049 = vmatpush.msra.mxu0 %v1557
    %2050 = vmatpush.msra.mxu0 %v1554
    %2051 = vmatpush.msra.mxu0 %v1551
    %2052 = vmatpush.msra.mxu0 %v1548
    %2053 = vmatpush.msra.mxu0 %v1545
    %2054 = vmatpush.msra.mxu0 %v1542
    %2055 = vmatpush.msra.mxu0 %v1539
    %2056 = vmatpush.msra.mxu0 %v1536
    %2057 = vmatpush.msra.mxu0 %v1533
    %2058 = vmatpush.msra.mxu0 %v1530
    %2059 = vmatpush.msra.mxu0 %v1527
    %2060 = vmatpush.msra.mxu0 %v1524
    %2061 = vmatpush.msra.mxu0 %v1521
    %2062 = vmatmul.f32.gmra.mxu0 %v2020
    %v2063 = vpop.f32.mrf.mxu0
    %v2064 = vadd.f32 0.0, %v2063
    %2065 = vdwg.mxu0
    %2066 = vmatpush.msra.mxu0 %v1567
    %2067 = vmatpush.msra.mxu0 %v1564
    %2068 = vmatpush.msra.mxu0 %v1561
    %2069 = vmatpush.msra.mxu0 %v1558
    %2070 = vmatpush.msra.mxu0 %v1555
    %2071 = vmatpush.msra.mxu0 %v1552
    %2072 = vmatpush.msra.mxu0 %v1549
    %2073 = vmatpush.msra.mxu0 %v1546
    %2074 = vmatpush.msra.mxu0 %v1543
    %2075 = vmatpush.msra.mxu0 %v1540
    %2076 = vmatpush.msra.mxu0 %v1537
    %2077 = vmatpush.msra.mxu0 %v1534
    %2078 = vmatpush.msra.mxu0 %v1531
    %2079 = vmatpush.msra.mxu0 %v1528
    %2080 = vmatpush.msra.mxu0 %v1525
    %2081 = vmatpush.msra.mxu0 %v1522
    %2082 = vmatmul.f32.gmra.mxu0 %v2020
    %v2083 = vpop.f32.mrf.mxu0
    %v2084 = vadd.f32 0.0, %v2083
    %2085 = vdwg.mxu0
    %v2086 = vadd.f32 %v2023, %v2044
    %v2087 = vxor.u32 %v2086, 2147483648
    %v2088 = vmul.f32 %v2087, 1.442695
    %v2089 = vpow.pop %v2088
    %v2090 = vadd.f32 %v2089, 1.0
    %v2091 = vrcp.pop %v2090
    %v2092 = vmul.f32 %v2090, %v2091
    %v2093 = vsub.f32 1.0, %v2092
    %v2094 = vmul.f32 %v2091, %v2093
    %v2095 = vadd.f32 %v2091, %v2094
    %vm2096 = vweird.f32 %v2090
    %vm2097 = vweird.f32 %v2091
    %vm2098 = vmor %vm2096, %vm2097
    %v2099 = vsel %vm2098, %v2091, %v2095
    %v2100 = vand.u32 2147483647, %v2090
    %vm2101 = vcmp.eq.f32.partialorder %v2100, 8.507059e+37
    %v2102 = vand.u32 %v2090, 2147483648
    %v2103 = vor.u32 1.1754944e-38, %v2102
    %v2104 = vsel %vm2101, %v2103, %v2099
    %v2105 = vmul.f32 1.0, %v2104
    %v2106 = vadd.f32 %v2024, %v2064
    %v2107 = vxor.u32 %v2106, 2147483648
    %v2108 = vmul.f32 %v2107, 1.442695
    %v2109 = vpow.pop %v2108
    %v2110 = vadd.f32 %v2109, 1.0
    %v2111 = vrcp.pop %v2110
    %v2112 = vmul.f32 %v2110, %v2111
    %v2113 = vsub.f32 1.0, %v2112
    %v2114 = vmul.f32 %v2111, %v2113
    %v2115 = vadd.f32 %v2111, %v2114
    %vm2116 = vweird.f32 %v2110
    %vm2117 = vweird.f32 %v2111
    %vm2118 = vmor %vm2116, %vm2117
    %v2119 = vsel %vm2118, %v2111, %v2115
    %v2120 = vand.u32 2147483647, %v2110
    %vm2121 = vcmp.eq.f32.partialorder %v2120, 8.507059e+37
    %v2122 = vand.u32 %v2110, 2147483648
    %v2123 = vor.u32 1.1754944e-38, %v2122
    %v2124 = vsel %vm2121, %v2123, %v2119
    %v2125 = vmul.f32 1.0, %v2124
    %v2126 = vadd.f32 %v2084, %v1570
    %v2127 = vmul.f32 %v2105, %v2126
    %v2128 = vadd.f32 %v2025, %v2127
    %v2129 = vtanh.pop %v2128
    %v2130 = vsub.f32 1.0, %v2125
    %v2131 = vmul.f32 %v2130, %v2129
    %v2132 = vmul.f32 %v2125, %v2020
    %v2133 = vadd.f32 %v2131, %v2132
    %s2134 = scalar_lea.vmem [#allocation4], 32
    %2135 = vst [vmem:[%s2134] sm:$0xff] %v2133
    %v2136 = vld [vmem:[%s962] sm:$0xff]
    %v2137 = vld [vmem:[%s962 + $0x8] sm:$0xff]
    %v2138 = vld [vmem:[%s962 + $0x10] sm:$0xff]
    %2139 = vmatpush.msra.mxu0 %v1565
    %2140 = vmatpush.msra.mxu0 %v1562
    %2141 = vmatpush.msra.mxu0 %v1559
    %2142 = vmatpush.msra.mxu0 %v1556
    %2143 = vmatpush.msra.mxu0 %v1553
    %2144 = vmatpush.msra.mxu0 %v1550
    %2145 = vmatpush.msra.mxu0 %v1547
    %2146 = vmatpush.msra.mxu0 %v1544
    %2147 = vmatpush.msra.mxu0 %v1541
    %2148 = vmatpush.msra.mxu0 %v1538
    %2149 = vmatpush.msra.mxu0 %v1535
    %2150 = vmatpush.msra.mxu0 %v1532
    %2151 = vmatpush.msra.mxu0 %v1529
    %2152 = vmatpush.msra.mxu0 %v1526
    %2153 = vmatpush.msra.mxu0 %v1523
    %2154 = vmatpush.msra.mxu0 %v1520
    %2155 = vmatmul.f32.gmra.mxu0 %v2133
    %v2156 = vpop.f32.mrf.mxu0
    %v2157 = vadd.f32 0.0, %v2156
    %2158 = vdwg.mxu0
    %2159 = vmatpush.msra.mxu0 %v1566
    %2160 = vmatpush.msra.mxu0 %v1563
    %2161 = vmatpush.msra.mxu0 %v1560
    %2162 = vmatpush.msra.mxu0 %v1557
    %2163 = vmatpush.msra.mxu0 %v1554
    %2164 = vmatpush.msra.mxu0 %v1551
    %2165 = vmatpush.msra.mxu0 %v1548
    %2166 = vmatpush.msra.mxu0 %v1545
    %2167 = vmatpush.msra.mxu0 %v1542
    %2168 = vmatpush.msra.mxu0 %v1539
    %2169 = vmatpush.msra.mxu0 %v1536
    %2170 = vmatpush.msra.mxu0 %v1533
    %2171 = vmatpush.msra.mxu0 %v1530
    %2172 = vmatpush.msra.mxu0 %v1527
    %2173 = vmatpush.msra.mxu0 %v1524
    %2174 = vmatpush.msra.mxu0 %v1521
    %2175 = vmatmul.f32.gmra.mxu0 %v2133
    %v2176 = vpop.f32.mrf.mxu0
    %v2177 = vadd.f32 0.0, %v2176
    %2178 = vdwg.mxu0
    %2179 = vmatpush.msra.mxu0 %v1567
    %2180 = vmatpush.msra.mxu0 %v1564
    %2181 = vmatpush.msra.mxu0 %v1561
    %2182 = vmatpush.msra.mxu0 %v1558
    %2183 = vmatpush.msra.mxu0 %v1555
    %2184 = vmatpush.msra.mxu0 %v1552
    %2185 = vmatpush.msra.mxu0 %v1549
    %2186 = vmatpush.msra.mxu0 %v1546
    %2187 = vmatpush.msra.mxu0 %v1543
    %2188 = vmatpush.msra.mxu0 %v1540
    %2189 = vmatpush.msra.mxu0 %v1537
    %2190 = vmatpush.msra.mxu0 %v1534
    %2191 = vmatpush.msra.mxu0 %v1531
    %2192 = vmatpush.msra.mxu0 %v1528
    %2193 = vmatpush.msra.mxu0 %v1525
    %2194 = vmatpush.msra.mxu0 %v1522
    %2195 = vmatmul.f32.gmra.mxu0 %v2133
    %v2196 = vpop.f32.mrf.mxu0
    %v2197 = vadd.f32 0.0, %v2196
    %2198 = vdwg.mxu0
    %v2199 = vadd.f32 %v2136, %v2157
    %v2200 = vxor.u32 %v2199, 2147483648
    %v2201 = vmul.f32 %v2200, 1.442695
    %v2202 = vpow.pop %v2201
    %v2203 = vadd.f32 %v2202, 1.0
    %v2204 = vrcp.pop %v2203
    %v2205 = vmul.f32 %v2203, %v2204
    %v2206 = vsub.f32 1.0, %v2205
    %v2207 = vmul.f32 %v2204, %v2206
    %v2208 = vadd.f32 %v2204, %v2207
    %vm2209 = vweird.f32 %v2203
    %vm2210 = vweird.f32 %v2204
    %vm2211 = vmor %vm2209, %vm2210
    %v2212 = vsel %vm2211, %v2204, %v2208
    %v2213 = vand.u32 2147483647, %v2203
    %vm2214 = vcmp.eq.f32.partialorder %v2213, 8.507059e+37
    %v2215 = vand.u32 %v2203, 2147483648
    %v2216 = vor.u32 1.1754944e-38, %v2215
    %v2217 = vsel %vm2214, %v2216, %v2212
    %v2218 = vmul.f32 1.0, %v2217
    %v2219 = vadd.f32 %v2137, %v2177
    %v2220 = vxor.u32 %v2219, 2147483648
    %v2221 = vmul.f32 %v2220, 1.442695
    %v2222 = vpow.pop %v2221
    %v2223 = vadd.f32 %v2222, 1.0
    %v2224 = vrcp.pop %v2223
    %v2225 = vmul.f32 %v2223, %v2224
    %v2226 = vsub.f32 1.0, %v2225
    %v2227 = vmul.f32 %v2224, %v2226
    %v2228 = vadd.f32 %v2224, %v2227
    %vm2229 = vweird.f32 %v2223
    %vm2230 = vweird.f32 %v2224
    %vm2231 = vmor %vm2229, %vm2230
    %v2232 = vsel %vm2231, %v2224, %v2228
    %v2233 = vand.u32 2147483647, %v2223
    %vm2234 = vcmp.eq.f32.partialorder %v2233, 8.507059e+37
    %v2235 = vand.u32 %v2223, 2147483648
    %v2236 = vor.u32 1.1754944e-38, %v2235
    %v2237 = vsel %vm2234, %v2236, %v2232
    %v2238 = vmul.f32 1.0, %v2237
    %v2239 = vadd.f32 %v2197, %v1570
    %v2240 = vmul.f32 %v2218, %v2239
    %v2241 = vadd.f32 %v2138, %v2240
    %v2242 = vtanh.pop %v2241
    %v2243 = vsub.f32 1.0, %v2238
    %v2244 = vmul.f32 %v2243, %v2242
    %v2245 = vmul.f32 %v2238, %v2133
    %v2246 = vadd.f32 %v2244, %v2245
    %s2247 = scalar_lea.vmem [#allocation4], 40
    %2248 = vst [vmem:[%s2247] sm:$0xff] %v2246
    %v2249 = vld [vmem:[%s1078] sm:$0xff]
    %v2250 = vld [vmem:[%s1078 + $0x8] sm:$0xff]
    %v2251 = vld [vmem:[%s1078 + $0x10] sm:$0xff]
    %2252 = vmatpush.msra.mxu0 %v1565
    %2253 = vmatpush.msra.mxu0 %v1562
    %2254 = vmatpush.msra.mxu0 %v1559
    %2255 = vmatpush.msra.mxu0 %v1556
    %2256 = vmatpush.msra.mxu0 %v1553
    %2257 = vmatpush.msra.mxu0 %v1550
    %2258 = vmatpush.msra.mxu0 %v1547
    %2259 = vmatpush.msra.mxu0 %v1544
    %2260 = vmatpush.msra.mxu0 %v1541
    %2261 = vmatpush.msra.mxu0 %v1538
    %2262 = vmatpush.msra.mxu0 %v1535
    %2263 = vmatpush.msra.mxu0 %v1532
    %2264 = vmatpush.msra.mxu0 %v1529
    %2265 = vmatpush.msra.mxu0 %v1526
    %2266 = vmatpush.msra.mxu0 %v1523
    %2267 = vmatpush.msra.mxu0 %v1520
    %2268 = vmatmul.f32.gmra.mxu0 %v2246
    %v2269 = vpop.f32.mrf.mxu0
    %v2270 = vadd.f32 0.0, %v2269
    %2271 = vdwg.mxu0
    %2272 = vmatpush.msra.mxu0 %v1566
    %2273 = vmatpush.msra.mxu0 %v1563
    %2274 = vmatpush.msra.mxu0 %v1560
    %2275 = vmatpush.msra.mxu0 %v1557
    %2276 = vmatpush.msra.mxu0 %v1554
    %2277 = vmatpush.msra.mxu0 %v1551
    %2278 = vmatpush.msra.mxu0 %v1548
    %2279 = vmatpush.msra.mxu0 %v1545
    %2280 = vmatpush.msra.mxu0 %v1542
    %2281 = vmatpush.msra.mxu0 %v1539
    %2282 = vmatpush.msra.mxu0 %v1536
    %2283 = vmatpush.msra.mxu0 %v1533
    %2284 = vmatpush.msra.mxu0 %v1530
    %2285 = vmatpush.msra.mxu0 %v1527
    %2286 = vmatpush.msra.mxu0 %v1524
    %2287 = vmatpush.msra.mxu0 %v1521
    %2288 = vmatmul.f32.gmra.mxu0 %v2246
    %v2289 = vpop.f32.mrf.mxu0
    %v2290 = vadd.f32 0.0, %v2289
    %2291 = vdwg.mxu0
    %2292 = vmatpush.msra.mxu0 %v1567
    %2293 = vmatpush.msra.mxu0 %v1564
    %2294 = vmatpush.msra.mxu0 %v1561
    %2295 = vmatpush.msra.mxu0 %v1558
    %2296 = vmatpush.msra.mxu0 %v1555
    %2297 = vmatpush.msra.mxu0 %v1552
    %2298 = vmatpush.msra.mxu0 %v1549
    %2299 = vmatpush.msra.mxu0 %v1546
    %2300 = vmatpush.msra.mxu0 %v1543
    %2301 = vmatpush.msra.mxu0 %v1540
    %2302 = vmatpush.msra.mxu0 %v1537
    %2303 = vmatpush.msra.mxu0 %v1534
    %2304 = vmatpush.msra.mxu0 %v1531
    %2305 = vmatpush.msra.mxu0 %v1528
    %2306 = vmatpush.msra.mxu0 %v1525
    %2307 = vmatpush.msra.mxu0 %v1522
    %2308 = vmatmul.f32.gmra.mxu0 %v2246
    %v2309 = vpop.f32.mrf.mxu0
    %v2310 = vadd.f32 0.0, %v2309
    %2311 = vdwg.mxu0
    %v2312 = vadd.f32 %v2249, %v2270
    %v2313 = vxor.u32 %v2312, 2147483648
    %v2314 = vmul.f32 %v2313, 1.442695
    %v2315 = vpow.pop %v2314
    %v2316 = vadd.f32 %v2315, 1.0
    %v2317 = vrcp.pop %v2316
    %v2318 = vmul.f32 %v2316, %v2317
    %v2319 = vsub.f32 1.0, %v2318
    %v2320 = vmul.f32 %v2317, %v2319
    %v2321 = vadd.f32 %v2317, %v2320
    %vm2322 = vweird.f32 %v2316
    %vm2323 = vweird.f32 %v2317
    %vm2324 = vmor %vm2322, %vm2323
    %v2325 = vsel %vm2324, %v2317, %v2321
    %v2326 = vand.u32 2147483647, %v2316
    %vm2327 = vcmp.eq.f32.partialorder %v2326, 8.507059e+37
    %v2328 = vand.u32 %v2316, 2147483648
    %v2329 = vor.u32 1.1754944e-38, %v2328
    %v2330 = vsel %vm2327, %v2329, %v2325
    %v2331 = vmul.f32 1.0, %v2330
    %v2332 = vadd.f32 %v2250, %v2290
    %v2333 = vxor.u32 %v2332, 2147483648
    %v2334 = vmul.f32 %v2333, 1.442695
    %v2335 = vpow.pop %v2334
    %v2336 = vadd.f32 %v2335, 1.0
    %v2337 = vrcp.pop %v2336
    %v2338 = vmul.f32 %v2336, %v2337
    %v2339 = vsub.f32 1.0, %v2338
    %v2340 = vmul.f32 %v2337, %v2339
    %v2341 = vadd.f32 %v2337, %v2340
    %vm2342 = vweird.f32 %v2336
    %vm2343 = vweird.f32 %v2337
    %vm2344 = vmor %vm2342, %vm2343
    %v2345 = vsel %vm2344, %v2337, %v2341
    %v2346 = vand.u32 2147483647, %v2336
    %vm2347 = vcmp.eq.f32.partialorder %v2346, 8.507059e+37
    %v2348 = vand.u32 %v2336, 2147483648
    %v2349 = vor.u32 1.1754944e-38, %v2348
    %v2350 = vsel %vm2347, %v2349, %v2345
    %v2351 = vmul.f32 1.0, %v2350
    %v2352 = vadd.f32 %v2310, %v1570
    %v2353 = vmul.f32 %v2331, %v2352
    %v2354 = vadd.f32 %v2251, %v2353
    %v2355 = vtanh.pop %v2354
    %v2356 = vsub.f32 1.0, %v2351
    %v2357 = vmul.f32 %v2356, %v2355
    %v2358 = vmul.f32 %v2351, %v2246
    %v2359 = vadd.f32 %v2357, %v2358
    %s2360 = scalar_lea.vmem [#allocation4], 48
    %2361 = vst [vmem:[%s2360] sm:$0xff] %v2359
    %v2362 = vld [vmem:[%s1194] sm:$0xff]
    %v2363 = vld [vmem:[%s1194 + $0x8] sm:$0xff]
    %v2364 = vld [vmem:[%s1194 + $0x10] sm:$0xff]
    %2365 = vmatpush.msra.mxu0 %v1565
    %2366 = vmatpush.msra.mxu0 %v1562
    %2367 = vmatpush.msra.mxu0 %v1559
    %2368 = vmatpush.msra.mxu0 %v1556
    %2369 = vmatpush.msra.mxu0 %v1553
    %2370 = vmatpush.msra.mxu0 %v1550
    %2371 = vmatpush.msra.mxu0 %v1547
    %2372 = vmatpush.msra.mxu0 %v1544
    %2373 = vmatpush.msra.mxu0 %v1541
    %2374 = vmatpush.msra.mxu0 %v1538
    %2375 = vmatpush.msra.mxu0 %v1535
    %2376 = vmatpush.msra.mxu0 %v1532
    %2377 = vmatpush.msra.mxu0 %v1529
    %2378 = vmatpush.msra.mxu0 %v1526
    %2379 = vmatpush.msra.mxu0 %v1523
    %2380 = vmatpush.msra.mxu0 %v1520
    %2381 = vmatmul.f32.gmra.mxu0 %v2359
    %v2382 = vpop.f32.mrf.mxu0
    %v2383 = vadd.f32 0.0, %v2382
    %2384 = vdwg.mxu0
    %2385 = vmatpush.msra.mxu0 %v1566
    %2386 = vmatpush.msra.mxu0 %v1563
    %2387 = vmatpush.msra.mxu0 %v1560
    %2388 = vmatpush.msra.mxu0 %v1557
    %2389 = vmatpush.msra.mxu0 %v1554
    %2390 = vmatpush.msra.mxu0 %v1551
    %2391 = vmatpush.msra.mxu0 %v1548
    %2392 = vmatpush.msra.mxu0 %v1545
    %2393 = vmatpush.msra.mxu0 %v1542
    %2394 = vmatpush.msra.mxu0 %v1539
    %2395 = vmatpush.msra.mxu0 %v1536
    %2396 = vmatpush.msra.mxu0 %v1533
    %2397 = vmatpush.msra.mxu0 %v1530
    %2398 = vmatpush.msra.mxu0 %v1527
    %2399 = vmatpush.msra.mxu0 %v1524
    %2400 = vmatpush.msra.mxu0 %v1521
    %2401 = vmatmul.f32.gmra.mxu0 %v2359
    %v2402 = vpop.f32.mrf.mxu0
    %v2403 = vadd.f32 0.0, %v2402
    %2404 = vdwg.mxu0
    %2405 = vmatpush.msra.mxu0 %v1567
    %2406 = vmatpush.msra.mxu0 %v1564
    %2407 = vmatpush.msra.mxu0 %v1561
    %2408 = vmatpush.msra.mxu0 %v1558
    %2409 = vmatpush.msra.mxu0 %v1555
    %2410 = vmatpush.msra.mxu0 %v1552
    %2411 = vmatpush.msra.mxu0 %v1549
    %2412 = vmatpush.msra.mxu0 %v1546
    %2413 = vmatpush.msra.mxu0 %v1543
    %2414 = vmatpush.msra.mxu0 %v1540
    %2415 = vmatpush.msra.mxu0 %v1537
    %2416 = vmatpush.msra.mxu0 %v1534
    %2417 = vmatpush.msra.mxu0 %v1531
    %2418 = vmatpush.msra.mxu0 %v1528
    %2419 = vmatpush.msra.mxu0 %v1525
    %2420 = vmatpush.msra.mxu0 %v1522
    %2421 = vmatmul.f32.gmra.mxu0 %v2359
    %v2422 = vpop.f32.mrf.mxu0
    %v2423 = vadd.f32 0.0, %v2422
    %2424 = vdwg.mxu0
    %v2425 = vadd.f32 %v2362, %v2383
    %v2426 = vxor.u32 %v2425, 2147483648
    %v2427 = vmul.f32 %v2426, 1.442695
    %v2428 = vpow.pop %v2427
    %v2429 = vadd.f32 %v2428, 1.0
    %v2430 = vrcp.pop %v2429
    %v2431 = vmul.f32 %v2429, %v2430
    %v2432 = vsub.f32 1.0, %v2431
    %v2433 = vmul.f32 %v2430, %v2432
    %v2434 = vadd.f32 %v2430, %v2433
    %vm2435 = vweird.f32 %v2429
    %vm2436 = vweird.f32 %v2430
    %vm2437 = vmor %vm2435, %vm2436
    %v2438 = vsel %vm2437, %v2430, %v2434
    %v2439 = vand.u32 2147483647, %v2429
    %vm2440 = vcmp.eq.f32.partialorder %v2439, 8.507059e+37
    %v2441 = vand.u32 %v2429, 2147483648
    %v2442 = vor.u32 1.1754944e-38, %v2441
    %v2443 = vsel %vm2440, %v2442, %v2438
    %v2444 = vmul.f32 1.0, %v2443
    %v2445 = vadd.f32 %v2363, %v2403
    %v2446 = vxor.u32 %v2445, 2147483648
    %v2447 = vmul.f32 %v2446, 1.442695
    %v2448 = vpow.pop %v2447
    %v2449 = vadd.f32 %v2448, 1.0
    %v2450 = vrcp.pop %v2449
    %v2451 = vmul.f32 %v2449, %v2450
    %v2452 = vsub.f32 1.0, %v2451
    %v2453 = vmul.f32 %v2450, %v2452
    %v2454 = vadd.f32 %v2450, %v2453
    %vm2455 = vweird.f32 %v2449
    %vm2456 = vweird.f32 %v2450
    %vm2457 = vmor %vm2455, %vm2456
    %v2458 = vsel %vm2457, %v2450, %v2454
    %v2459 = vand.u32 2147483647, %v2449
    %vm2460 = vcmp.eq.f32.partialorder %v2459, 8.507059e+37
    %v2461 = vand.u32 %v2449, 2147483648
    %v2462 = vor.u32 1.1754944e-38, %v2461
    %v2463 = vsel %vm2460, %v2462, %v2458
    %v2464 = vmul.f32 1.0, %v2463
    %v2465 = vadd.f32 %v2423, %v1570
    %v2466 = vmul.f32 %v2444, %v2465
    %v2467 = vadd.f32 %v2364, %v2466
    %v2468 = vtanh.pop %v2467
    %v2469 = vsub.f32 1.0, %v2464
    %v2470 = vmul.f32 %v2469, %v2468
    %v2471 = vmul.f32 %v2464, %v2359
    %v2472 = vadd.f32 %v2470, %v2471
    %s2473 = scalar_lea.vmem [#allocation4], 56
    %2474 = vst [vmem:[%s2473] sm:$0xff] %v2472
    %s2475 = scalar_lea.vmem %s12, 8
    %2476 = vst [vmem:[%s2475] sm:$0xff] %v2472
    %v2477 = vld [vmem:[#allocation4] sm:$0xff]
    %v2478 = vld [vmem:[#allocation4 + $0x8] sm:$0xff]
    %v2479 = vld [vmem:[#allocation4 + $0x10] sm:$0xff]
    %v2480 = vld [vmem:[#allocation4 + $0x18] sm:$0xff]
    %v2481 = vld [vmem:[#allocation4 + $0x20] sm:$0xff]
    %v2482 = vld [vmem:[#allocation4 + $0x28] sm:$0xff]
    %v2483 = vld [vmem:[#allocation4 + $0x30] sm:$0xff]
    %v2484 = vld [vmem:[#allocation4 + $0x38] sm:$0xff]
    %v2485 = vld [vmem:[#allocation12] sm:$0xff]
    %v2486 = vld [vmem:[#allocation12 + $0x8] sm:$0xff]
    %v2487 = vld [vmem:[#allocation12 + $0x10] sm:$0xff]
    %v2488 = vld [vmem:[#allocation12 + $0x18] sm:$0xff]
    %v2489 = vld [vmem:[#allocation12 + $0x20] sm:$0xff]
    %v2490 = vld [vmem:[#allocation12 + $0x28] sm:$0xff]
    %v2491 = vld [vmem:[#allocation12 + $0x30] sm:$0xff]
    %v2492 = vld [vmem:[#allocation12 + $0x38] sm:$0xff]
    %v2493 = vld [vmem:[#allocation12 + $0x40] sm:$0xff]
    %v2494 = vld [vmem:[#allocation12 + $0x48] sm:$0xff]
    %v2495 = vld [vmem:[#allocation12 + $0x50] sm:$0xff]
    %v2496 = vld [vmem:[#allocation12 + $0x58] sm:$0xff]
    %v2497 = vld [vmem:[#allocation12 + $0x60] sm:$0xff]
    %v2498 = vld [vmem:[#allocation12 + $0x68] sm:$0xff]
    %v2499 = vld [vmem:[#allocation12 + $0x70] sm:$0xff]
    %v2500 = vld [vmem:[#allocation12 + $0x78] sm:$0xff]
    %v2501 = vld [vmem:[%s10] sm:$0x1]
    %v2503 = vperm.slane %v2501, 0
    %2505 = vmatpush.msra.mxu0 %v2500
    %2506 = vmatpush.msra.mxu0 %v2499
    %2507 = vmatpush.msra.mxu0 %v2498
    %2508 = vmatpush.msra.mxu0 %v2497
    %2509 = vmatpush.msra.mxu0 %v2496
    %2510 = vmatpush.msra.mxu0 %v2495
    %2511 = vmatpush.msra.mxu0 %v2494
    %2512 = vmatpush.msra.mxu0 %v2493
    %2513 = vmatpush.msra.mxu0 %v2492
    %2514 = vmatpush.msra.mxu0 %v2491
    %2515 = vmatpush.msra.mxu0 %v2490
    %2516 = vmatpush.msra.mxu0 %v2489
    %2517 = vmatpush.msra.mxu0 %v2488
    %2518 = vmatpush.msra.mxu0 %v2487
    %2519 = vmatpush.msra.mxu0 %v2486
    %2520 = vmatpush.msra.mxu0 %v2485
    %2521 = vmatmul.f32.gmra.mxu0 %v2477
    %v2522 = vpop.f32.mrf.mxu0
    %v2523 = vadd.f32 %v2503, %v2522
    %2524 = vmatmul.f32.gmra.mxu0 %v2478
    %v2525 = vpop.f32.mrf.mxu0
    %v2526 = vadd.f32 %v2503, %v2525
    %2527 = vmatmul.f32.gmra.mxu0 %v2479
    %v2528 = vpop.f32.mrf.mxu0
    %v2529 = vadd.f32 %v2503, %v2528
    %2530 = vmatmul.f32.gmra.mxu0 %v2480
    %v2531 = vpop.f32.mrf.mxu0
    %v2532 = vadd.f32 %v2503, %v2531
    %2533 = vmatmul.f32.gmra.mxu0 %v2481
    %v2534 = vpop.f32.mrf.mxu0
    %v2535 = vadd.f32 %v2503, %v2534
    %2536 = vmatmul.f32.gmra.mxu0 %v2482
    %v2537 = vpop.f32.mrf.mxu0
    %v2538 = vadd.f32 %v2503, %v2537
    %2539 = vmatmul.f32.gmra.mxu0 %v2483
    %v2540 = vpop.f32.mrf.mxu0
    %v2541 = vadd.f32 %v2503, %v2540
    %2542 = vmatmul.f32.gmra.mxu0 %v2484
    %v2543 = vpop.f32.mrf.mxu0
    %v2544 = vadd.f32 %v2503, %v2543
    %2545 = vdwg.mxu0
    %2546 = vst [vmem:[%s11] sm:$0xff] %v2523
    %2547 = vst [vmem:[%s11 + $0x8] sm:$0xff] %v2526
    %2548 = vst [vmem:[%s11 + $0x10] sm:$0xff] %v2529
    %2549 = vst [vmem:[%s11 + $0x18] sm:$0xff] %v2532
    %2550 = vst [vmem:[%s11 + $0x20] sm:$0xff] %v2535
    %2551 = vst [vmem:[%s11 + $0x28] sm:$0xff] %v2538
    %2552 = vst [vmem:[%s11 + $0x30] sm:$0xff] %v2541
    %2553 = vst [vmem:[%s11 + $0x38] sm:$0xff] %v2544
    // Predicated region
    $region66: #{basic_gru_forward.1} parent=1 // pred_check
      _
    $region67: #{basic_gru_forward.1} parent=1 // pred_check_branch
      %2555 = sbr.rel (0) target = $region69
    $region68: #{basic_gru_forward.1} parent=1 // pred_region
      _
    $region69: #{basic_gru_forward.1} parent=1 // pred_fallthru
      _
    // Predicated region
    $region70: #{basic_gru_forward.1} parent=1 // pred_check
      _
    $region71: #{basic_gru_forward.1} parent=1 // pred_check_branch
      %2557 = sbr.rel (0) target = $region73
    $region72: #{basic_gru_forward.1} parent=1 // pred_region
      _
    $region73: #{basic_gru_forward.1} parent=1 // pred_fallthru
      _
    // Predicated region
    $region74: #{basic_gru_forward.1} parent=1 // pred_check
      _
    $region75: #{basic_gru_forward.1} parent=1 // pred_check_branch
      %2559 = sbr.rel (0) target = $region77
    $region76: #{basic_gru_forward.1} parent=1 // pred_region
      _
    $region77: #{basic_gru_forward.1} parent=1 // pred_fallthru
      _
    // Predicated region
    $region78: #{basic_gru_forward.1} parent=1 // pred_check
      _
    $region79: #{basic_gru_forward.1} parent=1 // pred_check_branch
      %2561 = sbr.rel (0) target = $region81
    $region80: #{basic_gru_forward.1} parent=1 // pred_region
      _
    $region81: #{basic_gru_forward.1} parent=1 // pred_fallthru
      _
    %2562 = vsyncpa [#allocation6], 1
    %2563 = vsyncpa [#allocation8], 1
    %2564 = vsyncpa [#allocation11], 1

</llo_original>
